<compile_context>
chip_gen: v5e
topology: v5e:2x2
jax: 0.10.0
libtpu: 0.0.40
codegen_flags: <defaults>
</compile_context>

<pallas_src>
import functools
import math

import jax
import jax.numpy as jnp
from jax.experimental import pallas as pl
from jax.experimental.pallas import tpu as pltpu

LANE = 128  # lane width; channels are padded to this between layers


def _round_up(x, m):
    return ((x + m - 1) // m) * m


# ---------------------------------------------------------------------------
# Pallas kernels
# ---------------------------------------------------------------------------
def _conv_bn_kernel(a_ref, b_ref, g_ref, bt_ref, o_ref, *, m_real, eps, relu):
    """bf16 GEMM -> f32 acc; fused batch-stats + BN affine (+ReLU); bf16 out."""
    acc = jnp.dot(a_ref[...], b_ref[...], preferred_element_type=jnp.float32)
    inv_m = 1.0 / m_real
    mean = jnp.sum(acc, axis=0, keepdims=True) * inv_m           # (1, Np)
    msq = jnp.sum(acc * acc, axis=0, keepdims=True) * inv_m
    var = jnp.maximum(msq - mean * mean, 0.0)                    # biased var
    scale = g_ref[...] * jax.lax.rsqrt(var + eps)
    shift = bt_ref[...] - mean * scale
    y = acc * scale + shift
    if relu:
        y = jnp.maximum(y, 0.0)
    o_ref[...] = y.astype(o_ref.dtype)


def _conv_bn_res_kernel(a_ref, b_ref, g_ref, bt_ref, r_ref, o_ref, *,
                        m_real, eps, relu):
    """Same as above, plus fused residual add before ReLU."""
    acc = jnp.dot(a_ref[...], b_ref[...], preferred_element_type=jnp.float32)
    inv_m = 1.0 / m_real
    mean = jnp.sum(acc, axis=0, keepdims=True) * inv_m
    msq = jnp.sum(acc * acc, axis=0, keepdims=True) * inv_m
    var = jnp.maximum(msq - mean * mean, 0.0)
    scale = g_ref[...] * jax.lax.rsqrt(var + eps)
    shift = bt_ref[...] - mean * scale
    y = acc * scale + shift + r_ref[...].astype(jnp.float32)
    if relu:
        y = jnp.maximum(y, 0.0)
    o_ref[...] = y.astype(o_ref.dtype)


def _maxpool_kernel(x_ref, o_ref):
    o_ref[...] = jnp.max(x_ref[...], axis=0)


# ---------------------------------------------------------------------------
# Pallas-call wrappers
# ---------------------------------------------------------------------------
def fused_conv_bn(a, b, gamma_row, beta_row, residual=None, *,
                  m_real, relu, eps):
    """One pallas_call: C = A@B, in-kernel BN batch stats + affine (+res)(+ReLU).

    a:         (Mp, Kp) bf16 im2col patches (zero padded rows/cols)
    b:         (Kp, Np) bf16 weights (zero padded)
    gamma/beta:(1, Np)  f32 (zero padded channels)
    residual:  (Mp, Np) bf16 or None
    returns    (Mp, Np) bf16
    """
    Mp, Kp = a.shape
    Kp2, Np = b.shape
    assert Kp == Kp2

    in_specs = [pl.BlockSpec((Mp, Kp), lambda i: (0, 0)),
                pl.BlockSpec((Kp, Np), lambda i: (0, 0)),
                pl.BlockSpec((1, Np), lambda i: (0, 0)),
                pl.BlockSpec((1, Np), lambda i: (0, 0))]
    ops = [a, b, gamma_row, beta_row]
    if residual is None:
        kern = functools.partial(_conv_bn_kernel,
                                 m_real=float(m_real), eps=eps, relu=relu)
    else:
        kern = functools.partial(_conv_bn_res_kernel,
                                 m_real=float(m_real), eps=eps, relu=relu)
        in_specs.append(pl.BlockSpec((Mp, Np), lambda i: (0, 0)))
        ops.append(residual)

    return pl.pallas_call(
        kern,
        out_shape=jax.ShapeDtypeStruct((Mp, Np), jnp.bfloat16),
        grid_spec=pltpu.PrefetchScalarGridSpec(
            num_scalar_prefetch=0,
            grid=(1,),
            in_specs=in_specs,
            out_specs=pl.BlockSpec((Mp, Np), lambda i: (0, 0))),
        compiler_params=pltpu.CompilerParams(
            dimension_semantics=("arbitrary",)),
    )(*ops)


# ---------------------------------------------------------------------------
# Layer wrappers (NHWC, bf16, channels lane-padded to 128 between layers)
# ---------------------------------------------------------------------------
def conv_bn(x, w, gamma, beta, *, stride, padding, residual=None, relu=True,
            eps=1e-5):
    """NHWC conv (bias=False) + training-mode BN (+residual) (+ReLU), fused.

    x may carry lane-padded channels (Cp >= Cin); output keeps channels padded
    to LANE (padded channels are exactly zero).
    """
    N, H, W, Cp = x.shape
    Cout, Cin, KH, KW = w.shape
    assert Cp >= Cin
    OH = (H + 2 * padding - KH) // stride + 1
    OW = (W + 2 * padding - KW) // stride + 1
    M = N * OH * OW
    Np = _round_up(Cout, LANE)

    # im2col patch matrix (bf16).
    # TODO(synk): fold the KH*KW taps into the kernel via shifted-window reads
    # of the padded NHWC block instead of materializing the patch matrix.
    if KH == 1 and KW == 1 and padding == 0:
        a = x[:, ::stride, ::stride, :].reshape(M, Cp)
    else:
        xp = jnp.pad(x, ((0, 0), (padding, padding), (padding, padding), (0, 0)))
        cols = [xp[:, kh:kh + stride * OH:stride, kw:kw + stride * OW:stride, :]
                for kh in range(KH) for kw in range(KW)]
        a = jnp.concatenate(cols, axis=-1).reshape(M, KH * KW * Cp)

    K = KH * KW * Cp
    Kp = _round_up(K, 16)        # bf16 sublane multiple
    Mp = _round_up(M, 16)
    a = jnp.pad(a.astype(jnp.bfloat16), ((0, Mp - M), (0, Kp - K)))

    # Weights: pad Cin -> Cp (zero rows), reorder to (kh, kw, cin) x Cout,
    # pad K -> Kp and Cout -> Np (zero columns -> padded channels stay zero).
    wp = jnp.pad(w.astype(jnp.float32), ((0, 0), (0, Cp - Cin), (0, 0), (0, 0)))
    b = wp.transpose(2, 3, 1, 0).reshape(K, Cout)
    b = jnp.pad(b, ((0, Kp - K), (0, Np - Cout))).astype(jnp.bfloat16)

    g = jnp.pad(gamma.astype(jnp.float32), (0, Np - Cout)).reshape(1, Np)
    bt = jnp.pad(beta.astype(jnp.float32), (0, Np - Cout)).reshape(1, Np)

    if residual is not None:
        r = residual.reshape(M, Np).astype(jnp.bfloat16)
        r = jnp.pad(r, ((0, Mp - M), (0, 0)))
    else:
        r = None

    y = fused_conv_bn(a, b, g, bt, r, m_real=M, relu=relu, eps=eps)
    return y[:M].reshape(N, OH, OW, Np)


def maxpool_3x3_s2_p1(x):
    """MaxPool2d(kernel=3, stride=2, padding=1), NHWC bf16 (post-ReLU, so zero
    padding is exact). Lane-dense C, 2-step parallel grid (v7x megacore)."""
    N, H, W, C = x.shape
    OH = (H + 2 - 3) // 2 + 1
    OW = (W + 2 - 3) // 2 + 1
    M = N * OH * OW
    xp = jnp.pad(x, ((0, 0), (1, 1), (1, 1), (0, 0)))   # zeros: exact post-ReLU
    wins = [xp[:, kh:kh + 2 * OH:2, kw:kw + 2 * OW:2, :]
            for kh in range(3) for kw in range(3)]
    stacked = jnp.stack(wins, axis=0).reshape(9, M, C)
    Mp = _round_up(M, 8)
    stacked = jnp.pad(stacked, ((0, 0), (0, Mp - M), (0, 0)))
    bm = Mp // 2 if (Mp >= 16 and Mp % 16 == 0) else Mp   # >=2 grid steps

    out = pl.pallas_call(
        _maxpool_kernel,
        out_shape=jax.ShapeDtypeStruct((Mp, C), x.dtype),
        grid_spec=pltpu.PrefetchScalarGridSpec(
            num_scalar_prefetch=0,
            grid=(Mp // bm,),
            in_specs=[pl.BlockSpec((9, bm, C), lambda i: (0, i, 0))],
            out_specs=pl.BlockSpec((bm, C), lambda i: (i, 0))),
        compiler_params=pltpu.CompilerParams(
            dimension_semantics=("parallel",)),
    )(stacked)
    return out[:M].reshape(N, OH, OW, C)


# ---------------------------------------------------------------------------
# ResNet forward (block=BasicBlock, layers=[1, 1])
# ---------------------------------------------------------------------------
def basic_block(x, p, stride, has_downsample):
    out = conv_bn(x, p["conv1_w"], p["bn1_g"], p["bn1_b"],
                  stride=stride, padding=1, relu=True)
    if has_downsample:
        idn = conv_bn(x, p["ds_w"], p["ds_g"], p["ds_b"],
                      stride=stride, padding=0, relu=False)
    else:
        idn = x
    # conv2 + bn2 + residual-add + ReLU all fused in one pallas_call
    return conv_bn(out, p["conv2_w"], p["bn2_g"], p["bn2_b"],
                   stride=1, padding=1, residual=idn, relu=True)


def resnet_forward(params, x_nchw):
    # NCHW -> NHWC once; activations stay channel-last bf16 (lane-padded).
    x = jnp.transpose(x_nchw, (0, 2, 3, 1)).astype(jnp.bfloat16)
    x = conv_bn(x, params["conv1_w"], params["bn1_g"], params["bn1_b"],
                stride=2, padding=3, relu=True)                  # 7x7 / s2 / p3
    x = maxpool_3x3_s2_p1(x)
    # _make_layer(block, 64, layers[0]=1): one BasicBlock(64 -> 64, stride 1)
    x = basic_block(x, params["l1"], stride=1, has_downsample=False)
    # layers[1:]: one BasicBlock(64 -> 128, stride 2, with downsample)
    x = basic_block(x, params["l2"], stride=2, has_downsample=True)
    cout = params["l2"]["conv2_w"].shape[0]
    x = x[..., :cout]                                            # drop lane pad
    return jnp.transpose(x, (0, 3, 1, 2)).astype(jnp.float32)    # back to NCHW


# ---------------------------------------------------------------------------
# Deterministic parameter init (kaiming_normal fan_out, BN gamma=1 beta=0)
# ---------------------------------------------------------------------------
def kaiming(key, shape):
    fan_out = shape[0] * shape[2] * shape[3]
    std = math.sqrt(2.0 / fan_out)
    return std * jax.random.normal(key, shape, dtype=jnp.float32)


def init_params(key):
    ks = jax.random.split(key, 6)
    ones = lambda c: jnp.ones((c,), jnp.float32)
    zeros = lambda c: jnp.zeros((c,), jnp.float32)
    return {
        "conv1_w": kaiming(ks[0], (64, 1, 7, 7)),
        "bn1_g": ones(64), "bn1_b": zeros(64),
        "l1": {
            "conv1_w": kaiming(ks[1], (64, 64, 3, 3)),
            "bn1_g": ones(64), "bn1_b": zeros(64),
            "conv2_w": kaiming(ks[2], (64, 64, 3, 3)),
            "bn2_g": ones(64), "bn2_b": zeros(64),
        },
        "l2": {
            "conv1_w": kaiming(ks[3], (128, 64, 3, 3)),
            "bn1_g": ones(128), "bn1_b": zeros(128),
            "conv2_w": kaiming(ks[4], (128, 128, 3, 3)),
            "bn2_g": ones(128), "bn2_b": zeros(128),
            "ds_w": kaiming(ks[5], (128, 64, 1, 1)),
            "ds_g": ones(128), "ds_b": zeros(128),
        },
    }


if __name__ == "__main__":
    root = jax.random.PRNGKey(0)
    k_param, k_x = jax.random.split(root)
    params = init_params(k_param)
    # conv1 expects 1 input channel (NCHW input, as in the PyTorch module)
    x = jax.random.normal(k_x, (2, 1, 16, 16), dtype=jnp.float32)

    fwd = jax.jit(resnet_forward)
    y = fwd(params, x)
    jax.block_until_ready(y)
    assert y.shape == (2, 128, 2, 2), y.shape
    assert jnp.all(jnp.isfinite(y))
    print("KERNEL_OK")
</pallas_src>

<mosaic_0001>
module attributes {stable_mosaic.version = 11 : i64} {
  func.func @_conv_bn_kernel(%arg0: i32, %arg1: memref<128x64xbf16, #tpu.memory_space<vmem>>, %arg2: memref<64x128xbf16, #tpu.memory_space<vmem>>, %arg3: memref<1x128xf32, #tpu.memory_space<vmem>>, %arg4: memref<1x128xf32, #tpu.memory_space<vmem>>, %arg5: memref<128x128xbf16, #tpu.memory_space<vmem>>) attributes {dimension_semantics = [#tpu.dimension_semantics<arbitrary>], iteration_bounds = array<i64: 1>, scalar_prefetch = 0 : i64, scratch_operands = 0 : i64, tpu.core_type = #tpu.core_type<tc>, window_params = [{pipeline_mode = #tpu.pipeline_mode<synchronous>, transform_indices = @transform_0, window_bounds = array<i64: 128, 64>}, {pipeline_mode = #tpu.pipeline_mode<synchronous>, transform_indices = @transform_1, window_bounds = array<i64: 64, 128>}, {pipeline_mode = #tpu.pipeline_mode<synchronous>, transform_indices = @transform_2, window_bounds = array<i64: 1, 128>}, {pipeline_mode = #tpu.pipeline_mode<synchronous>, transform_indices = @transform_3, window_bounds = array<i64: 1, 128>}, {pipeline_mode = #tpu.pipeline_mode<synchronous>, transform_indices = @transform_4, window_bounds = array<i64: 128, 128>}]} {
    %c0 = arith.constant 0 : index
    %c0_0 = arith.constant 0 : index
    %0 = vector.load %arg1[%c0, %c0_0] : memref<128x64xbf16, #tpu.memory_space<vmem>>, vector<128x64xbf16>
    %c0_1 = arith.constant 0 : index
    %c0_2 = arith.constant 0 : index
    %1 = vector.load %arg2[%c0_1, %c0_2] : memref<64x128xbf16, #tpu.memory_space<vmem>>, vector<64x128xbf16>
    %cst = arith.constant dense<0.000000e+00> : vector<128x128xf32>
    %2 = tpu.matmul %0, %1, %cst {dimension_numbers = #tpu.dot_dimension_numbers<[1], [0], [0], [1], [0, 0, 1, 1], [], []>} : vector<128x64xbf16>, vector<64x128xbf16>, vector<128x128xf32> -> vector<128x128xf32>
    %cst_3 = arith.constant dense<0.000000e+00> : vector<128xf32>
    %3 = vector.multi_reduction <add>, %2, %cst_3 [0] : vector<128x128xf32> to vector<128xf32>
    %4 = vector.shape_cast %3 : vector<128xf32> to vector<1x128xf32>
    %cst_4 = arith.constant 7.812500e-03 : f32
    %5 = vector.broadcast %cst_4 : f32 to vector<1x128xf32>
    %6 = arith.mulf %4, %5 : vector<1x128xf32>
    %7 = arith.mulf %2, %2 : vector<128x128xf32>
    %cst_5 = arith.constant dense<0.000000e+00> : vector<128xf32>
    %8 = vector.multi_reduction <add>, %7, %cst_5 [0] : vector<128x128xf32> to vector<128xf32>
    %9 = vector.shape_cast %8 : vector<128xf32> to vector<1x128xf32>
    %cst_6 = arith.constant 7.812500e-03 : f32
    %10 = vector.broadcast %cst_6 : f32 to vector<1x128xf32>
    %11 = arith.mulf %9, %10 : vector<1x128xf32>
    %12 = arith.mulf %6, %6 : vector<1x128xf32>
    %13 = arith.subf %11, %12 : vector<1x128xf32>
    %cst_7 = arith.constant 0.000000e+00 : f32
    %14 = vector.broadcast %cst_7 : f32 to vector<1x128xf32>
    %15 = arith.maximumf %13, %14 : vector<1x128xf32>
    %c0_8 = arith.constant 0 : index
    %c0_9 = arith.constant 0 : index
    %16 = vector.load %arg3[%c0_8, %c0_9] : memref<1x128xf32, #tpu.memory_space<vmem>>, vector<1x128xf32>
    %cst_10 = arith.constant 9.99999974E-6 : f32
    %17 = vector.broadcast %cst_10 : f32 to vector<1x128xf32>
    %18 = arith.addf %15, %17 : vector<1x128xf32>
    %19 = math.rsqrt %18 : vector<1x128xf32>
    %20 = arith.mulf %16, %19 : vector<1x128xf32>
    %c0_11 = arith.constant 0 : index
    %c0_12 = arith.constant 0 : index
    %21 = vector.load %arg4[%c0_11, %c0_12] : memref<1x128xf32, #tpu.memory_space<vmem>>, vector<1x128xf32>
    %22 = arith.mulf %6, %20 : vector<1x128xf32>
    %23 = arith.subf %21, %22 : vector<1x128xf32>
    %24 = vector.broadcast %20 : vector<1x128xf32> to vector<128x128xf32>
    %25 = arith.mulf %2, %24 : vector<128x128xf32>
    %26 = vector.broadcast %23 : vector<1x128xf32> to vector<128x128xf32>
    %27 = arith.addf %25, %26 : vector<128x128xf32>
    %cst_13 = arith.constant 0.000000e+00 : f32
    %28 = vector.broadcast %cst_13 : f32 to vector<128x128xf32>
    %29 = arith.maximumf %27, %28 : vector<128x128xf32>
    %30 = arith.truncf %29 : vector<128x128xf32> to vector<128x128xbf16>
    %c0_14 = arith.constant 0 : index
    %c0_15 = arith.constant 0 : index
    %31 = vector.load %arg5[%c0_14, %c0_15] : memref<128x128xbf16, #tpu.memory_space<vmem>>, vector<128x128xbf16>
    tpu.vector_store %arg5[%c0_14, %c0_15], %30 {strides = array<i32>} : memref<128x128xbf16, #tpu.memory_space<vmem>>, vector<128x128xbf16>,
    return
  }
  func.func @transform_0(%arg0: i32) -> (i32, i32) {
    %c0_i32 = arith.constant 0 : i32
    %c0_i32_0 = arith.constant 0 : i32
    %c0_i32_1 = arith.constant 0 : i32
    return %c0_i32, %c0_i32_0 : i32, i32
  }
  func.func @transform_1(%arg0: i32) -> (i32, i32) {
    %c0_i32 = arith.constant 0 : i32
    %c0_i32_0 = arith.constant 0 : i32
    %c0_i32_1 = arith.constant 0 : i32
    return %c0_i32, %c0_i32_0 : i32, i32
  }
  func.func @transform_2(%arg0: i32) -> (i32, i32) {
    %c0_i32 = arith.constant 0 : i32
    %c0_i32_0 = arith.constant 0 : i32
    %c0_i32_1 = arith.constant 0 : i32
    return %c0_i32, %c0_i32_0 : i32, i32
  }
  func.func @transform_3(%arg0: i32) -> (i32, i32) {
    %c0_i32 = arith.constant 0 : i32
    %c0_i32_0 = arith.constant 0 : i32
    %c0_i32_1 = arith.constant 0 : i32
    return %c0_i32, %c0_i32_0 : i32, i32
  }
  func.func @transform_4(%arg0: i32) -> (i32, i32) {
    %c0_i32 = arith.constant 0 : i32
    %c0_i32_0 = arith.constant 0 : i32
    %c0_i32_1 = arith.constant 0 : i32
    return %c0_i32, %c0_i32_0 : i32, i32
  }
}

module attributes {stable_mosaic.version = 11 : i64} {
  func.func @_maxpool_kernel(%arg0: i32, %arg1: memref<9x16x128xbf16, #tpu.memory_space<vmem>>, %arg2: memref<16x128xbf16, #tpu.memory_space<vmem>>) attributes {dimension_semantics = [#tpu.dimension_semantics<parallel>], iteration_bounds = array<i64: 2>, scalar_prefetch = 0 : i64, scratch_operands = 0 : i64, tpu.core_type = #tpu.core_type<tc>, window_params = [{transform_indices = @transform_0, window_bounds = array<i64: 9, 16, 128>}, {transform_indices = @transform_1, window_bounds = array<i64: 16, 128>}]} {
    %c0 = arith.constant 0 : index
    %c0_0 = arith.constant 0 : index
    %c0_1 = arith.constant 0 : index
    %0 = vector.load %arg1[%c0, %c0_0, %c0_1] : memref<9x16x128xbf16, #tpu.memory_space<vmem>>, vector<9x16x128xbf16>
    %cst = arith.constant dense<0xFF80> : vector<16x128xbf16>
    %1 = vector.multi_reduction <maximumf>, %0, %cst [0] : vector<9x16x128xbf16> to vector<16x128xbf16>
    %c0_2 = arith.constant 0 : index
    %c0_3 = arith.constant 0 : index
    %2 = vector.load %arg2[%c0_2, %c0_3] : memref<16x128xbf16, #tpu.memory_space<vmem>>, vector<16x128xbf16>
    tpu.vector_store %arg2[%c0_2, %c0_3], %1 {strides = array<i32>} : memref<16x128xbf16, #tpu.memory_space<vmem>>, vector<16x128xbf16>,
    return
  }
  func.func @transform_0(%arg0: i32) -> (i32, i32, i32) {
    %c0_i32 = arith.constant 0 : i32
    %c0_i32_0 = arith.constant 0 : i32
    %c0_i32_1 = arith.constant 0 : i32
    return %c0_i32, %arg0, %c0_i32_0 : i32, i32, i32
  }
  func.func @transform_1(%arg0: i32) -> (i32, i32) {
    %c0_i32 = arith.constant 0 : i32
    %c0_i32_0 = arith.constant 0 : i32
    return %arg0, %c0_i32 : i32, i32
  }
}

module attributes {stable_mosaic.version = 11 : i64} {
  func.func @_conv_bn_kernel(%arg0: i32, %arg1: memref<32x1152xbf16, #tpu.memory_space<vmem>>, %arg2: memref<1152x128xbf16, #tpu.memory_space<vmem>>, %arg3: memref<1x128xf32, #tpu.memory_space<vmem>>, %arg4: memref<1x128xf32, #tpu.memory_space<vmem>>, %arg5: memref<32x128xbf16, #tpu.memory_space<vmem>>) attributes {dimension_semantics = [#tpu.dimension_semantics<arbitrary>], iteration_bounds = array<i64: 1>, scalar_prefetch = 0 : i64, scratch_operands = 0 : i64, tpu.core_type = #tpu.core_type<tc>, window_params = [{pipeline_mode = #tpu.pipeline_mode<synchronous>, transform_indices = @transform_0, window_bounds = array<i64: 32, 1152>}, {pipeline_mode = #tpu.pipeline_mode<synchronous>, transform_indices = @transform_1, window_bounds = array<i64: 1152, 128>}, {pipeline_mode = #tpu.pipeline_mode<synchronous>, transform_indices = @transform_2, window_bounds = array<i64: 1, 128>}, {pipeline_mode = #tpu.pipeline_mode<synchronous>, transform_indices = @transform_3, window_bounds = array<i64: 1, 128>}, {pipeline_mode = #tpu.pipeline_mode<synchronous>, transform_indices = @transform_4, window_bounds = array<i64: 32, 128>}]} {
    %c0 = arith.constant 0 : index
    %c0_0 = arith.constant 0 : index
    %0 = vector.load %arg1[%c0, %c0_0] : memref<32x1152xbf16, #tpu.memory_space<vmem>>, vector<32x1152xbf16>
    %c0_1 = arith.constant 0 : index
    %c0_2 = arith.constant 0 : index
    %1 = vector.load %arg2[%c0_1, %c0_2] : memref<1152x128xbf16, #tpu.memory_space<vmem>>, vector<1152x128xbf16>
    %cst = arith.constant dense<0.000000e+00> : vector<32x128xf32>
    %2 = tpu.matmul %0, %1, %cst {dimension_numbers = #tpu.dot_dimension_numbers<[1], [0], [0], [1], [0, 0, 1, 1], [], []>} : vector<32x1152xbf16>, vector<1152x128xbf16>, vector<32x128xf32> -> vector<32x128xf32>
    %cst_3 = arith.constant dense<0.000000e+00> : vector<128xf32>
    %3 = vector.multi_reduction <add>, %2, %cst_3 [0] : vector<32x128xf32> to vector<128xf32>
    %4 = vector.shape_cast %3 : vector<128xf32> to vector<1x128xf32>
    %cst_4 = arith.constant 3.125000e-02 : f32
    %5 = vector.broadcast %cst_4 : f32 to vector<1x128xf32>
    %6 = arith.mulf %4, %5 : vector<1x128xf32>
    %7 = arith.mulf %2, %2 : vector<32x128xf32>
    %cst_5 = arith.constant dense<0.000000e+00> : vector<128xf32>
    %8 = vector.multi_reduction <add>, %7, %cst_5 [0] : vector<32x128xf32> to vector<128xf32>
    %9 = vector.shape_cast %8 : vector<128xf32> to vector<1x128xf32>
    %cst_6 = arith.constant 3.125000e-02 : f32
    %10 = vector.broadcast %cst_6 : f32 to vector<1x128xf32>
    %11 = arith.mulf %9, %10 : vector<1x128xf32>
    %12 = arith.mulf %6, %6 : vector<1x128xf32>
    %13 = arith.subf %11, %12 : vector<1x128xf32>
    %cst_7 = arith.constant 0.000000e+00 : f32
    %14 = vector.broadcast %cst_7 : f32 to vector<1x128xf32>
    %15 = arith.maximumf %13, %14 : vector<1x128xf32>
    %c0_8 = arith.constant 0 : index
    %c0_9 = arith.constant 0 : index
    %16 = vector.load %arg3[%c0_8, %c0_9] : memref<1x128xf32, #tpu.memory_space<vmem>>, vector<1x128xf32>
    %cst_10 = arith.constant 9.99999974E-6 : f32
    %17 = vector.broadcast %cst_10 : f32 to vector<1x128xf32>
    %18 = arith.addf %15, %17 : vector<1x128xf32>
    %19 = math.rsqrt %18 : vector<1x128xf32>
    %20 = arith.mulf %16, %19 : vector<1x128xf32>
    %c0_11 = arith.constant 0 : index
    %c0_12 = arith.constant 0 : index
    %21 = vector.load %arg4[%c0_11, %c0_12] : memref<1x128xf32, #tpu.memory_space<vmem>>, vector<1x128xf32>
    %22 = arith.mulf %6, %20 : vector<1x128xf32>
    %23 = arith.subf %21, %22 : vector<1x128xf32>
    %24 = vector.broadcast %20 : vector<1x128xf32> to vector<32x128xf32>
    %25 = arith.mulf %2, %24 : vector<32x128xf32>
    %26 = vector.broadcast %23 : vector<1x128xf32> to vector<32x128xf32>
    %27 = arith.addf %25, %26 : vector<32x128xf32>
    %cst_13 = arith.constant 0.000000e+00 : f32
    %28 = vector.broadcast %cst_13 : f32 to vector<32x128xf32>
    %29 = arith.maximumf %27, %28 : vector<32x128xf32>
    %30 = arith.truncf %29 : vector<32x128xf32> to vector<32x128xbf16>
    %c0_14 = arith.constant 0 : index
    %c0_15 = arith.constant 0 : index
    %31 = vector.load %arg5[%c0_14, %c0_15] : memref<32x128xbf16, #tpu.memory_space<vmem>>, vector<32x128xbf16>
    tpu.vector_store %arg5[%c0_14, %c0_15], %30 {strides = array<i32>} : memref<32x128xbf16, #tpu.memory_space<vmem>>, vector<32x128xbf16>,
    return
  }
  func.func @transform_0(%arg0: i32) -> (i32, i32) {
    %c0_i32 = arith.constant 0 : i32
    %c0_i32_0 = arith.constant 0 : i32
    %c0_i32_1 = arith.constant 0 : i32
    return %c0_i32, %c0_i32_0 : i32, i32
  }
  func.func @transform_1(%arg0: i32) -> (i32, i32) {
    %c0_i32 = arith.constant 0 : i32
    %c0_i32_0 = arith.constant 0 : i32
    %c0_i32_1 = arith.constant 0 : i32
    return %c0_i32, %c0_i32_0 : i32, i32
  }
  func.func @transform_2(%arg0: i32) -> (i32, i32) {
    %c0_i32 = arith.constant 0 : i32
    %c0_i32_0 = arith.constant 0 : i32
    %c0_i32_1 = arith.constant 0 : i32
    return %c0_i32, %c0_i32_0 : i32, i32
  }
  func.func @transform_3(%arg0: i32) -> (i32, i32) {
    %c0_i32 = arith.constant 0 : i32
    %c0_i32_0 = arith.constant 0 : i32
    %c0_i32_1 = arith.constant 0 : i32
    return %c0_i32, %c0_i32_0 : i32, i32
  }
  func.func @transform_4(%arg0: i32) -> (i32, i32) {
    %c0_i32 = arith.constant 0 : i32
    %c0_i32_0 = arith.constant 0 : i32
    %c0_i32_1 = arith.constant 0 : i32
    return %c0_i32, %c0_i32_0 : i32, i32
  }
}

module attributes {stable_mosaic.version = 11 : i64} {
  func.func @_conv_bn_res_kernel(%arg0: i32, %arg1: memref<32x1152xbf16, #tpu.memory_space<vmem>>, %arg2: memref<1152x128xbf16, #tpu.memory_space<vmem>>, %arg3: memref<1x128xf32, #tpu.memory_space<vmem>>, %arg4: memref<1x128xf32, #tpu.memory_space<vmem>>, %arg5: memref<32x128xbf16, #tpu.memory_space<vmem>>, %arg6: memref<32x128xbf16, #tpu.memory_space<vmem>>) attributes {dimension_semantics = [#tpu.dimension_semantics<arbitrary>], iteration_bounds = array<i64: 1>, scalar_prefetch = 0 : i64, scratch_operands = 0 : i64, tpu.core_type = #tpu.core_type<tc>, window_params = [{pipeline_mode = #tpu.pipeline_mode<synchronous>, transform_indices = @transform_0, window_bounds = array<i64: 32, 1152>}, {pipeline_mode = #tpu.pipeline_mode<synchronous>, transform_indices = @transform_1, window_bounds = array<i64: 1152, 128>}, {pipeline_mode = #tpu.pipeline_mode<synchronous>, transform_indices = @transform_2, window_bounds = array<i64: 1, 128>}, {pipeline_mode = #tpu.pipeline_mode<synchronous>, transform_indices = @transform_3, window_bounds = array<i64: 1, 128>}, {pipeline_mode = #tpu.pipeline_mode<synchronous>, transform_indices = @transform_4, window_bounds = array<i64: 32, 128>}, {pipeline_mode = #tpu.pipeline_mode<synchronous>, transform_indices = @transform_5, window_bounds = array<i64: 32, 128>}]} {
    %c0 = arith.constant 0 : index
    %c0_0 = arith.constant 0 : index
    %0 = vector.load %arg1[%c0, %c0_0] : memref<32x1152xbf16, #tpu.memory_space<vmem>>, vector<32x1152xbf16>
    %c0_1 = arith.constant 0 : index
    %c0_2 = arith.constant 0 : index
    %1 = vector.load %arg2[%c0_1, %c0_2] : memref<1152x128xbf16, #tpu.memory_space<vmem>>, vector<1152x128xbf16>
    %cst = arith.constant dense<0.000000e+00> : vector<32x128xf32>
    %2 = tpu.matmul %0, %1, %cst {dimension_numbers = #tpu.dot_dimension_numbers<[1], [0], [0], [1], [0, 0, 1, 1], [], []>} : vector<32x1152xbf16>, vector<1152x128xbf16>, vector<32x128xf32> -> vector<32x128xf32>
    %cst_3 = arith.constant dense<0.000000e+00> : vector<128xf32>
    %3 = vector.multi_reduction <add>, %2, %cst_3 [0] : vector<32x128xf32> to vector<128xf32>
    %4 = vector.shape_cast %3 : vector<128xf32> to vector<1x128xf32>
    %cst_4 = arith.constant 3.125000e-02 : f32
    %5 = vector.broadcast %cst_4 : f32 to vector<1x128xf32>
    %6 = arith.mulf %4, %5 : vector<1x128xf32>
    %7 = arith.mulf %2, %2 : vector<32x128xf32>
    %cst_5 = arith.constant dense<0.000000e+00> : vector<128xf32>
    %8 = vector.multi_reduction <add>, %7, %cst_5 [0] : vector<32x128xf32> to vector<128xf32>
    %9 = vector.shape_cast %8 : vector<128xf32> to vector<1x128xf32>
    %cst_6 = arith.constant 3.125000e-02 : f32
    %10 = vector.broadcast %cst_6 : f32 to vector<1x128xf32>
    %11 = arith.mulf %9, %10 : vector<1x128xf32>
    %12 = arith.mulf %6, %6 : vector<1x128xf32>
    %13 = arith.subf %11, %12 : vector<1x128xf32>
    %cst_7 = arith.constant 0.000000e+00 : f32
    %14 = vector.broadcast %cst_7 : f32 to vector<1x128xf32>
    %15 = arith.maximumf %13, %14 : vector<1x128xf32>
    %c0_8 = arith.constant 0 : index
    %c0_9 = arith.constant 0 : index
    %16 = vector.load %arg3[%c0_8, %c0_9] : memref<1x128xf32, #tpu.memory_space<vmem>>, vector<1x128xf32>
    %cst_10 = arith.constant 9.99999974E-6 : f32
    %17 = vector.broadcast %cst_10 : f32 to vector<1x128xf32>
    %18 = arith.addf %15, %17 : vector<1x128xf32>
    %19 = math.rsqrt %18 : vector<1x128xf32>
    %20 = arith.mulf %16, %19 : vector<1x128xf32>
    %c0_11 = arith.constant 0 : index
    %c0_12 = arith.constant 0 : index
    %21 = vector.load %arg4[%c0_11, %c0_12] : memref<1x128xf32, #tpu.memory_space<vmem>>, vector<1x128xf32>
    %22 = arith.mulf %6, %20 : vector<1x128xf32>
    %23 = arith.subf %21, %22 : vector<1x128xf32>
    %24 = vector.broadcast %20 : vector<1x128xf32> to vector<32x128xf32>
    %25 = arith.mulf %2, %24 : vector<32x128xf32>
    %26 = vector.broadcast %23 : vector<1x128xf32> to vector<32x128xf32>
    %27 = arith.addf %25, %26 : vector<32x128xf32>
    %c0_13 = arith.constant 0 : index
    %c0_14 = arith.constant 0 : index
    %28 = vector.load %arg5[%c0_13, %c0_14] : memref<32x128xbf16, #tpu.memory_space<vmem>>, vector<32x128xbf16>
    %29 = arith.extf %28 : vector<32x128xbf16> to vector<32x128xf32>
    %30 = arith.addf %27, %29 : vector<32x128xf32>
    %cst_15 = arith.constant 0.000000e+00 : f32
    %31 = vector.broadcast %cst_15 : f32 to vector<32x128xf32>
    %32 = arith.maximumf %30, %31 : vector<32x128xf32>
    %33 = arith.truncf %32 : vector<32x128xf32> to vector<32x128xbf16>
    %c0_16 = arith.constant 0 : index
    %c0_17 = arith.constant 0 : index
    %34 = vector.load %arg6[%c0_16, %c0_17] : memref<32x128xbf16, #tpu.memory_space<vmem>>, vector<32x128xbf16>
    tpu.vector_store %arg6[%c0_16, %c0_17], %33 {strides = array<i32>} : memref<32x128xbf16, #tpu.memory_space<vmem>>, vector<32x128xbf16>,
    return
  }
  func.func @transform_0(%arg0: i32) -> (i32, i32) {
    %c0_i32 = arith.constant 0 : i32
    %c0_i32_0 = arith.constant 0 : i32
    %c0_i32_1 = arith.constant 0 : i32
    return %c0_i32, %c0_i32_0 : i32, i32
  }
  func.func @transform_1(%arg0: i32) -> (i32, i32) {
    %c0_i32 = arith.constant 0 : i32
    %c0_i32_0 = arith.constant 0 : i32
    %c0_i32_1 = arith.constant 0 : i32
    return %c0_i32, %c0_i32_0 : i32, i32
  }
  func.func @transform_2(%arg0: i32) -> (i32, i32) {
    %c0_i32 = arith.constant 0 : i32
    %c0_i32_0 = arith.constant 0 : i32
    %c0_i32_1 = arith.constant 0 : i32
    return %c0_i32, %c0_i32_0 : i32, i32
  }
  func.func @transform_3(%arg0: i32) -> (i32, i32) {
    %c0_i32 = arith.constant 0 : i32
    %c0_i32_0 = arith.constant 0 : i32
    %c0_i32_1 = arith.constant 0 : i32
    return %c0_i32, %c0_i32_0 : i32, i32
  }
  func.func @transform_4(%arg0: i32) -> (i32, i32) {
    %c0_i32 = arith.constant 0 : i32
    %c0_i32_0 = arith.constant 0 : i32
    %c0_i32_1 = arith.constant 0 : i32
    return %c0_i32, %c0_i32_0 : i32, i32
  }
  func.func @transform_5(%arg0: i32) -> (i32, i32) {
    %c0_i32 = arith.constant 0 : i32
    %c0_i32_0 = arith.constant 0 : i32
    %c0_i32_1 = arith.constant 0 : i32
    return %c0_i32, %c0_i32_0 : i32, i32
  }
}

module attributes {stable_mosaic.version = 11 : i64} {
  func.func @_conv_bn_kernel(%arg0: i32, %arg1: memref<16x1152xbf16, #tpu.memory_space<vmem>>, %arg2: memref<1152x128xbf16, #tpu.memory_space<vmem>>, %arg3: memref<1x128xf32, #tpu.memory_space<vmem>>, %arg4: memref<1x128xf32, #tpu.memory_space<vmem>>, %arg5: memref<16x128xbf16, #tpu.memory_space<vmem>>) attributes {dimension_semantics = [#tpu.dimension_semantics<arbitrary>], iteration_bounds = array<i64: 1>, scalar_prefetch = 0 : i64, scratch_operands = 0 : i64, tpu.core_type = #tpu.core_type<tc>, window_params = [{pipeline_mode = #tpu.pipeline_mode<synchronous>, transform_indices = @transform_0, window_bounds = array<i64: 16, 1152>}, {pipeline_mode = #tpu.pipeline_mode<synchronous>, transform_indices = @transform_1, window_bounds = array<i64: 1152, 128>}, {pipeline_mode = #tpu.pipeline_mode<synchronous>, transform_indices = @transform_2, window_bounds = array<i64: 1, 128>}, {pipeline_mode = #tpu.pipeline_mode<synchronous>, transform_indices = @transform_3, window_bounds = array<i64: 1, 128>}, {pipeline_mode = #tpu.pipeline_mode<synchronous>, transform_indices = @transform_4, window_bounds = array<i64: 16, 128>}]} {
    %c0 = arith.constant 0 : index
    %c0_0 = arith.constant 0 : index
    %0 = vector.load %arg1[%c0, %c0_0] : memref<16x1152xbf16, #tpu.memory_space<vmem>>, vector<16x1152xbf16>
    %c0_1 = arith.constant 0 : index
    %c0_2 = arith.constant 0 : index
    %1 = vector.load %arg2[%c0_1, %c0_2] : memref<1152x128xbf16, #tpu.memory_space<vmem>>, vector<1152x128xbf16>
    %cst = arith.constant dense<0.000000e+00> : vector<16x128xf32>
    %2 = tpu.matmul %0, %1, %cst {dimension_numbers = #tpu.dot_dimension_numbers<[1], [0], [0], [1], [0, 0, 1, 1], [], []>} : vector<16x1152xbf16>, vector<1152x128xbf16>, vector<16x128xf32> -> vector<16x128xf32>
    %cst_3 = arith.constant dense<0.000000e+00> : vector<128xf32>
    %3 = vector.multi_reduction <add>, %2, %cst_3 [0] : vector<16x128xf32> to vector<128xf32>
    %4 = vector.shape_cast %3 : vector<128xf32> to vector<1x128xf32>
    %cst_4 = arith.constant 1.250000e-01 : f32
    %5 = vector.broadcast %cst_4 : f32 to vector<1x128xf32>
    %6 = arith.mulf %4, %5 : vector<1x128xf32>
    %7 = arith.mulf %2, %2 : vector<16x128xf32>
    %cst_5 = arith.constant dense<0.000000e+00> : vector<128xf32>
    %8 = vector.multi_reduction <add>, %7, %cst_5 [0] : vector<16x128xf32> to vector<128xf32>
    %9 = vector.shape_cast %8 : vector<128xf32> to vector<1x128xf32>
    %cst_6 = arith.constant 1.250000e-01 : f32
    %10 = vector.broadcast %cst_6 : f32 to vector<1x128xf32>
    %11 = arith.mulf %9, %10 : vector<1x128xf32>
    %12 = arith.mulf %6, %6 : vector<1x128xf32>
    %13 = arith.subf %11, %12 : vector<1x128xf32>
    %cst_7 = arith.constant 0.000000e+00 : f32
    %14 = vector.broadcast %cst_7 : f32 to vector<1x128xf32>
    %15 = arith.maximumf %13, %14 : vector<1x128xf32>
    %c0_8 = arith.constant 0 : index
    %c0_9 = arith.constant 0 : index
    %16 = vector.load %arg3[%c0_8, %c0_9] : memref<1x128xf32, #tpu.memory_space<vmem>>, vector<1x128xf32>
    %cst_10 = arith.constant 9.99999974E-6 : f32
    %17 = vector.broadcast %cst_10 : f32 to vector<1x128xf32>
    %18 = arith.addf %15, %17 : vector<1x128xf32>
    %19 = math.rsqrt %18 : vector<1x128xf32>
    %20 = arith.mulf %16, %19 : vector<1x128xf32>
    %c0_11 = arith.constant 0 : index
    %c0_12 = arith.constant 0 : index
    %21 = vector.load %arg4[%c0_11, %c0_12] : memref<1x128xf32, #tpu.memory_space<vmem>>, vector<1x128xf32>
    %22 = arith.mulf %6, %20 : vector<1x128xf32>
    %23 = arith.subf %21, %22 : vector<1x128xf32>
    %24 = vector.broadcast %20 : vector<1x128xf32> to vector<16x128xf32>
    %25 = arith.mulf %2, %24 : vector<16x128xf32>
    %26 = vector.broadcast %23 : vector<1x128xf32> to vector<16x128xf32>
    %27 = arith.addf %25, %26 : vector<16x128xf32>
    %cst_13 = arith.constant 0.000000e+00 : f32
    %28 = vector.broadcast %cst_13 : f32 to vector<16x128xf32>
    %29 = arith.maximumf %27, %28 : vector<16x128xf32>
    %30 = arith.truncf %29 : vector<16x128xf32> to vector<16x128xbf16>
    %c0_14 = arith.constant 0 : index
    %c0_15 = arith.constant 0 : index
    %31 = vector.load %arg5[%c0_14, %c0_15] : memref<16x128xbf16, #tpu.memory_space<vmem>>, vector<16x128xbf16>
    tpu.vector_store %arg5[%c0_14, %c0_15], %30 {strides = array<i32>} : memref<16x128xbf16, #tpu.memory_space<vmem>>, vector<16x128xbf16>,
    return
  }
  func.func @transform_0(%arg0: i32) -> (i32, i32) {
    %c0_i32 = arith.constant 0 : i32
    %c0_i32_0 = arith.constant 0 : i32
    %c0_i32_1 = arith.constant 0 : i32
    return %c0_i32, %c0_i32_0 : i32, i32
  }
  func.func @transform_1(%arg0: i32) -> (i32, i32) {
    %c0_i32 = arith.constant 0 : i32
    %c0_i32_0 = arith.constant 0 : i32
    %c0_i32_1 = arith.constant 0 : i32
    return %c0_i32, %c0_i32_0 : i32, i32
  }
  func.func @transform_2(%arg0: i32) -> (i32, i32) {
    %c0_i32 = arith.constant 0 : i32
    %c0_i32_0 = arith.constant 0 : i32
    %c0_i32_1 = arith.constant 0 : i32
    return %c0_i32, %c0_i32_0 : i32, i32
  }
  func.func @transform_3(%arg0: i32) -> (i32, i32) {
    %c0_i32 = arith.constant 0 : i32
    %c0_i32_0 = arith.constant 0 : i32
    %c0_i32_1 = arith.constant 0 : i32
    return %c0_i32, %c0_i32_0 : i32, i32
  }
  func.func @transform_4(%arg0: i32) -> (i32, i32) {
    %c0_i32 = arith.constant 0 : i32
    %c0_i32_0 = arith.constant 0 : i32
    %c0_i32_1 = arith.constant 0 : i32
    return %c0_i32, %c0_i32_0 : i32, i32
  }
}

module attributes {stable_mosaic.version = 11 : i64} {
  func.func @_conv_bn_kernel(%arg0: i32, %arg1: memref<16x128xbf16, #tpu.memory_space<vmem>>, %arg2: memref<128x128xbf16, #tpu.memory_space<vmem>>, %arg3: memref<1x128xf32, #tpu.memory_space<vmem>>, %arg4: memref<1x128xf32, #tpu.memory_space<vmem>>, %arg5: memref<16x128xbf16, #tpu.memory_space<vmem>>) attributes {dimension_semantics = [#tpu.dimension_semantics<arbitrary>], iteration_bounds = array<i64: 1>, scalar_prefetch = 0 : i64, scratch_operands = 0 : i64, tpu.core_type = #tpu.core_type<tc>, window_params = [{pipeline_mode = #tpu.pipeline_mode<synchronous>, transform_indices = @transform_0, window_bounds = array<i64: 16, 128>}, {pipeline_mode = #tpu.pipeline_mode<synchronous>, transform_indices = @transform_1, window_bounds = array<i64: 128, 128>}, {pipeline_mode = #tpu.pipeline_mode<synchronous>, transform_indices = @transform_2, window_bounds = array<i64: 1, 128>}, {pipeline_mode = #tpu.pipeline_mode<synchronous>, transform_indices = @transform_3, window_bounds = array<i64: 1, 128>}, {pipeline_mode = #tpu.pipeline_mode<synchronous>, transform_indices = @transform_4, window_bounds = array<i64: 16, 128>}]} {
    %c0 = arith.constant 0 : index
    %c0_0 = arith.constant 0 : index
    %0 = vector.load %arg1[%c0, %c0_0] : memref<16x128xbf16, #tpu.memory_space<vmem>>, vector<16x128xbf16>
    %c0_1 = arith.constant 0 : index
    %c0_2 = arith.constant 0 : index
    %1 = vector.load %arg2[%c0_1, %c0_2] : memref<128x128xbf16, #tpu.memory_space<vmem>>, vector<128x128xbf16>
    %cst = arith.constant dense<0.000000e+00> : vector<16x128xf32>
    %2 = tpu.matmul %0, %1, %cst {dimension_numbers = #tpu.dot_dimension_numbers<[1], [0], [0], [1], [0, 0, 1, 1], [], []>} : vector<16x128xbf16>, vector<128x128xbf16>, vector<16x128xf32> -> vector<16x128xf32>
    %cst_3 = arith.constant dense<0.000000e+00> : vector<128xf32>
    %3 = vector.multi_reduction <add>, %2, %cst_3 [0] : vector<16x128xf32> to vector<128xf32>
    %4 = vector.shape_cast %3 : vector<128xf32> to vector<1x128xf32>
    %cst_4 = arith.constant 1.250000e-01 : f32
    %5 = vector.broadcast %cst_4 : f32 to vector<1x128xf32>
    %6 = arith.mulf %4, %5 : vector<1x128xf32>
    %7 = arith.mulf %2, %2 : vector<16x128xf32>
    %cst_5 = arith.constant dense<0.000000e+00> : vector<128xf32>
    %8 = vector.multi_reduction <add>, %7, %cst_5 [0] : vector<16x128xf32> to vector<128xf32>
    %9 = vector.shape_cast %8 : vector<128xf32> to vector<1x128xf32>
    %cst_6 = arith.constant 1.250000e-01 : f32
    %10 = vector.broadcast %cst_6 : f32 to vector<1x128xf32>
    %11 = arith.mulf %9, %10 : vector<1x128xf32>
    %12 = arith.mulf %6, %6 : vector<1x128xf32>
    %13 = arith.subf %11, %12 : vector<1x128xf32>
    %cst_7 = arith.constant 0.000000e+00 : f32
    %14 = vector.broadcast %cst_7 : f32 to vector<1x128xf32>
    %15 = arith.maximumf %13, %14 : vector<1x128xf32>
    %c0_8 = arith.constant 0 : index
    %c0_9 = arith.constant 0 : index
    %16 = vector.load %arg3[%c0_8, %c0_9] : memref<1x128xf32, #tpu.memory_space<vmem>>, vector<1x128xf32>
    %cst_10 = arith.constant 9.99999974E-6 : f32
    %17 = vector.broadcast %cst_10 : f32 to vector<1x128xf32>
    %18 = arith.addf %15, %17 : vector<1x128xf32>
    %19 = math.rsqrt %18 : vector<1x128xf32>
    %20 = arith.mulf %16, %19 : vector<1x128xf32>
    %c0_11 = arith.constant 0 : index
    %c0_12 = arith.constant 0 : index
    %21 = vector.load %arg4[%c0_11, %c0_12] : memref<1x128xf32, #tpu.memory_space<vmem>>, vector<1x128xf32>
    %22 = arith.mulf %6, %20 : vector<1x128xf32>
    %23 = arith.subf %21, %22 : vector<1x128xf32>
    %24 = vector.broadcast %20 : vector<1x128xf32> to vector<16x128xf32>
    %25 = arith.mulf %2, %24 : vector<16x128xf32>
    %26 = vector.broadcast %23 : vector<1x128xf32> to vector<16x128xf32>
    %27 = arith.addf %25, %26 : vector<16x128xf32>
    %28 = arith.truncf %27 : vector<16x128xf32> to vector<16x128xbf16>
    %c0_13 = arith.constant 0 : index
    %c0_14 = arith.constant 0 : index
    %29 = vector.load %arg5[%c0_13, %c0_14] : memref<16x128xbf16, #tpu.memory_space<vmem>>, vector<16x128xbf16>
    tpu.vector_store %arg5[%c0_13, %c0_14], %28 {strides = array<i32>} : memref<16x128xbf16, #tpu.memory_space<vmem>>, vector<16x128xbf16>,
    return
  }
  func.func @transform_0(%arg0: i32) -> (i32, i32) {
    %c0_i32 = arith.constant 0 : i32
    %c0_i32_0 = arith.constant 0 : i32
    %c0_i32_1 = arith.constant 0 : i32
    return %c0_i32, %c0_i32_0 : i32, i32
  }
  func.func @transform_1(%arg0: i32) -> (i32, i32) {
    %c0_i32 = arith.constant 0 : i32
    %c0_i32_0 = arith.constant 0 : i32
    %c0_i32_1 = arith.constant 0 : i32
    return %c0_i32, %c0_i32_0 : i32, i32
  }
  func.func @transform_2(%arg0: i32) -> (i32, i32) {
    %c0_i32 = arith.constant 0 : i32
    %c0_i32_0 = arith.constant 0 : i32
    %c0_i32_1 = arith.constant 0 : i32
    return %c0_i32, %c0_i32_0 : i32, i32
  }
  func.func @transform_3(%arg0: i32) -> (i32, i32) {
    %c0_i32 = arith.constant 0 : i32
    %c0_i32_0 = arith.constant 0 : i32
    %c0_i32_1 = arith.constant 0 : i32
    return %c0_i32, %c0_i32_0 : i32, i32
  }
  func.func @transform_4(%arg0: i32) -> (i32, i32) {
    %c0_i32 = arith.constant 0 : i32
    %c0_i32_0 = arith.constant 0 : i32
    %c0_i32_1 = arith.constant 0 : i32
    return %c0_i32, %c0_i32_0 : i32, i32
  }
}

module attributes {stable_mosaic.version = 11 : i64} {
  func.func @_conv_bn_res_kernel(%arg0: i32, %arg1: memref<16x1152xbf16, #tpu.memory_space<vmem>>, %arg2: memref<1152x128xbf16, #tpu.memory_space<vmem>>, %arg3: memref<1x128xf32, #tpu.memory_space<vmem>>, %arg4: memref<1x128xf32, #tpu.memory_space<vmem>>, %arg5: memref<16x128xbf16, #tpu.memory_space<vmem>>, %arg6: memref<16x128xbf16, #tpu.memory_space<vmem>>) attributes {dimension_semantics = [#tpu.dimension_semantics<arbitrary>], iteration_bounds = array<i64: 1>, scalar_prefetch = 0 : i64, scratch_operands = 0 : i64, tpu.core_type = #tpu.core_type<tc>, window_params = [{pipeline_mode = #tpu.pipeline_mode<synchronous>, transform_indices = @transform_0, window_bounds = array<i64: 16, 1152>}, {pipeline_mode = #tpu.pipeline_mode<synchronous>, transform_indices = @transform_1, window_bounds = array<i64: 1152, 128>}, {pipeline_mode = #tpu.pipeline_mode<synchronous>, transform_indices = @transform_2, window_bounds = array<i64: 1, 128>}, {pipeline_mode = #tpu.pipeline_mode<synchronous>, transform_indices = @transform_3, window_bounds = array<i64: 1, 128>}, {pipeline_mode = #tpu.pipeline_mode<synchronous>, transform_indices = @transform_4, window_bounds = array<i64: 16, 128>}, {pipeline_mode = #tpu.pipeline_mode<synchronous>, transform_indices = @transform_5, window_bounds = array<i64: 16, 128>}]} {
    %c0 = arith.constant 0 : index
    %c0_0 = arith.constant 0 : index
    %0 = vector.load %arg1[%c0, %c0_0] : memref<16x1152xbf16, #tpu.memory_space<vmem>>, vector<16x1152xbf16>
    %c0_1 = arith.constant 0 : index
    %c0_2 = arith.constant 0 : index
    %1 = vector.load %arg2[%c0_1, %c0_2] : memref<1152x128xbf16, #tpu.memory_space<vmem>>, vector<1152x128xbf16>
    %cst = arith.constant dense<0.000000e+00> : vector<16x128xf32>
    %2 = tpu.matmul %0, %1, %cst {dimension_numbers = #tpu.dot_dimension_numbers<[1], [0], [0], [1], [0, 0, 1, 1], [], []>} : vector<16x1152xbf16>, vector<1152x128xbf16>, vector<16x128xf32> -> vector<16x128xf32>
    %cst_3 = arith.constant dense<0.000000e+00> : vector<128xf32>
    %3 = vector.multi_reduction <add>, %2, %cst_3 [0] : vector<16x128xf32> to vector<128xf32>
    %4 = vector.shape_cast %3 : vector<128xf32> to vector<1x128xf32>
    %cst_4 = arith.constant 1.250000e-01 : f32
    %5 = vector.broadcast %cst_4 : f32 to vector<1x128xf32>
    %6 = arith.mulf %4, %5 : vector<1x128xf32>
    %7 = arith.mulf %2, %2 : vector<16x128xf32>
    %cst_5 = arith.constant dense<0.000000e+00> : vector<128xf32>
    %8 = vector.multi_reduction <add>, %7, %cst_5 [0] : vector<16x128xf32> to vector<128xf32>
    %9 = vector.shape_cast %8 : vector<128xf32> to vector<1x128xf32>
    %cst_6 = arith.constant 1.250000e-01 : f32
    %10 = vector.broadcast %cst_6 : f32 to vector<1x128xf32>
    %11 = arith.mulf %9, %10 : vector<1x128xf32>
    %12 = arith.mulf %6, %6 : vector<1x128xf32>
    %13 = arith.subf %11, %12 : vector<1x128xf32>
    %cst_7 = arith.constant 0.000000e+00 : f32
    %14 = vector.broadcast %cst_7 : f32 to vector<1x128xf32>
    %15 = arith.maximumf %13, %14 : vector<1x128xf32>
    %c0_8 = arith.constant 0 : index
    %c0_9 = arith.constant 0 : index
    %16 = vector.load %arg3[%c0_8, %c0_9] : memref<1x128xf32, #tpu.memory_space<vmem>>, vector<1x128xf32>
    %cst_10 = arith.constant 9.99999974E-6 : f32
    %17 = vector.broadcast %cst_10 : f32 to vector<1x128xf32>
    %18 = arith.addf %15, %17 : vector<1x128xf32>
    %19 = math.rsqrt %18 : vector<1x128xf32>
    %20 = arith.mulf %16, %19 : vector<1x128xf32>
    %c0_11 = arith.constant 0 : index
    %c0_12 = arith.constant 0 : index
    %21 = vector.load %arg4[%c0_11, %c0_12] : memref<1x128xf32, #tpu.memory_space<vmem>>, vector<1x128xf32>
    %22 = arith.mulf %6, %20 : vector<1x128xf32>
    %23 = arith.subf %21, %22 : vector<1x128xf32>
    %24 = vector.broadcast %20 : vector<1x128xf32> to vector<16x128xf32>
    %25 = arith.mulf %2, %24 : vector<16x128xf32>
    %26 = vector.broadcast %23 : vector<1x128xf32> to vector<16x128xf32>
    %27 = arith.addf %25, %26 : vector<16x128xf32>
    %c0_13 = arith.constant 0 : index
    %c0_14 = arith.constant 0 : index
    %28 = vector.load %arg5[%c0_13, %c0_14] : memref<16x128xbf16, #tpu.memory_space<vmem>>, vector<16x128xbf16>
    %29 = arith.extf %28 : vector<16x128xbf16> to vector<16x128xf32>
    %30 = arith.addf %27, %29 : vector<16x128xf32>
    %cst_15 = arith.constant 0.000000e+00 : f32
    %31 = vector.broadcast %cst_15 : f32 to vector<16x128xf32>
    %32 = arith.maximumf %30, %31 : vector<16x128xf32>
    %33 = arith.truncf %32 : vector<16x128xf32> to vector<16x128xbf16>
    %c0_16 = arith.constant 0 : index
    %c0_17 = arith.constant 0 : index
    %34 = vector.load %arg6[%c0_16, %c0_17] : memref<16x128xbf16, #tpu.memory_space<vmem>>, vector<16x128xbf16>
    tpu.vector_store %arg6[%c0_16, %c0_17], %33 {strides = array<i32>} : memref<16x128xbf16, #tpu.memory_space<vmem>>, vector<16x128xbf16>,
    return
  }
  func.func @transform_0(%arg0: i32) -> (i32, i32) {
    %c0_i32 = arith.constant 0 : i32
    %c0_i32_0 = arith.constant 0 : i32
    %c0_i32_1 = arith.constant 0 : i32
    return %c0_i32, %c0_i32_0 : i32, i32
  }
  func.func @transform_1(%arg0: i32) -> (i32, i32) {
    %c0_i32 = arith.constant 0 : i32
    %c0_i32_0 = arith.constant 0 : i32
    %c0_i32_1 = arith.constant 0 : i32
    return %c0_i32, %c0_i32_0 : i32, i32
  }
  func.func @transform_2(%arg0: i32) -> (i32, i32) {
    %c0_i32 = arith.constant 0 : i32
    %c0_i32_0 = arith.constant 0 : i32
    %c0_i32_1 = arith.constant 0 : i32
    return %c0_i32, %c0_i32_0 : i32, i32
  }
  func.func @transform_3(%arg0: i32) -> (i32, i32) {
    %c0_i32 = arith.constant 0 : i32
    %c0_i32_0 = arith.constant 0 : i32
    %c0_i32_1 = arith.constant 0 : i32
    return %c0_i32, %c0_i32_0 : i32, i32
  }
  func.func @transform_4(%arg0: i32) -> (i32, i32) {
    %c0_i32 = arith.constant 0 : i32
    %c0_i32_0 = arith.constant 0 : i32
    %c0_i32_1 = arith.constant 0 : i32
    return %c0_i32, %c0_i32_0 : i32, i32
  }
  func.func @transform_5(%arg0: i32) -> (i32, i32) {
    %c0_i32 = arith.constant 0 : i32
    %c0_i32_0 = arith.constant 0 : i32
    %c0_i32_1 = arith.constant 0 : i32
    return %c0_i32, %c0_i32_0 : i32, i32
  }
}

</mosaic_0001>

<llo_original>
// kernel: resnet_forward.7
$region0: #{resnet_forward.7}
  #allocation0 [shape = 'u32[]', space=smem, size = 0x4, offset = 0x4, fixed_abs, tag = 'smem constant byte address 0x4 - core index']
  #allocation1 [shape = 'u32[72,128]{1,0:T(1,128)}', space=vmem, size = 0x9000, scoped, tag = 'internal scratch']
  %s0 = inlined_call_operand.vmem [shape: bf16[128,64], index: 0, kind: input, shape index: {}]
  %s1 = inlined_call_operand.vmem [shape: bf16[64,128], index: 1, kind: input, shape index: {}]
  %s2 = inlined_call_operand.vmem [shape: f32[1,128], index: 2, kind: input, shape index: {}]
  %s3 = inlined_call_operand.vmem [shape: f32[1,128], index: 3, kind: input, shape index: {}]
  %s4 = inlined_call_operand.vmem [shape: bf16[128,128], index: 4, kind: output, shape index: {}]
  %s5 = sld [smem:[#allocation0]]
  $region26: #{resnet_forward.7} parent=0
    _
  %s7 = ssub.s32 1, %s5
  %s8 = scalar_select 0, %s7, %s5
  // Predicated region
  $region2: #{resnet_forward.7} parent=0 // pred_check
    _
  $region3: #{resnet_forward.7} parent=0 // pred_check_branch
    %10 = sbr.rel (0) target = $region5
  $region4: #{resnet_forward.7} parent=0 // pred_region
    _
  $region5: #{resnet_forward.7} parent=0 // pred_fallthru
    _
  // Predicated region
  $region6: #{resnet_forward.7} parent=0 // pred_check
    _
  $region7: #{resnet_forward.7} parent=0 // pred_check_branch
    %12 = sbr.rel (0) target = $region9
  $region8: #{resnet_forward.7} parent=0 // pred_region
    _
  $region9: #{resnet_forward.7} parent=0 // pred_fallthru
    _
  // Predicated region
  $region10: #{resnet_forward.7} parent=0 // pred_check
    _
  $region11: #{resnet_forward.7} parent=0 // pred_check_branch
    %14 = sbr.rel (0) target = $region13
  $region12: #{resnet_forward.7} parent=0 // pred_region
    _
  $region13: #{resnet_forward.7} parent=0 // pred_fallthru
    _
  // Predicated region
  $region14: #{resnet_forward.7} parent=0 // pred_check
    _
  $region15: #{resnet_forward.7} parent=0 // pred_check_branch
    %16 = sbr.rel (0) target = $region17
  $region16: #{resnet_forward.7} parent=0 // pred_region
    _
  $region17: #{resnet_forward.7} parent=0 // pred_fallthru
    _
  %v18 = vld [vmem:[%s0] sm:$0xf]
  %v19 = vld [vmem:[%s0 + $0x4] sm:$0xf]
  %v20 = vld [vmem:[%s0 + $0x8] sm:$0xf]
  %v21 = vld [vmem:[%s0 + $0xc] sm:$0xf]
  %v22 = vld [vmem:[%s0 + $0x10] sm:$0xf]
  %v23 = vld [vmem:[%s0 + $0x14] sm:$0xf]
  %v24 = vld [vmem:[%s0 + $0x18] sm:$0xf]
  %v25 = vld [vmem:[%s0 + $0x1c] sm:$0xf]
  %v26 = vld [vmem:[%s0 + $0x20] sm:$0xf]
  %v27 = vld [vmem:[%s0 + $0x24] sm:$0xf]
  %v28 = vld [vmem:[%s0 + $0x28] sm:$0xf]
  %v29 = vld [vmem:[%s0 + $0x2c] sm:$0xf]
  %v30 = vld [vmem:[%s0 + $0x30] sm:$0xf]
  %v31 = vld [vmem:[%s0 + $0x34] sm:$0xf]
  %v32 = vld [vmem:[%s0 + $0x38] sm:$0xf]
  %v33 = vld [vmem:[%s0 + $0x3c] sm:$0xf]
  %v34 = vld [vmem:[%s1] sm:$0xf]
  %v35 = vld [vmem:[%s1 + $0x4] sm:$0xf]
  %v36 = vld [vmem:[%s1 + $0x8] sm:$0xf]
  %v37 = vld [vmem:[%s1 + $0xc] sm:$0xf]
  %v38 = vld [vmem:[%s1 + $0x10] sm:$0xf]
  %v39 = vld [vmem:[%s1 + $0x14] sm:$0xf]
  %v40 = vld [vmem:[%s1 + $0x18] sm:$0xf]
  %v41 = vld [vmem:[%s1 + $0x1c] sm:$0xf]
  %v58 = vunpack.c.l.b16 %v18
  %v59 = vunpack.c.l.b16 %v19
  %v60 = vunpack.c.l.b16 %v20
  %v61 = vunpack.c.l.b16 %v21
  %v62 = vunpack.c.l.b16 %v22
  %v63 = vunpack.c.l.b16 %v23
  %v64 = vunpack.c.l.b16 %v24
  %v65 = vunpack.c.l.b16 %v25
  %v66 = vunpack.c.l.b16 %v26
  %v67 = vunpack.c.l.b16 %v27
  %v68 = vunpack.c.l.b16 %v28
  %v69 = vunpack.c.l.b16 %v29
  %v70 = vunpack.c.l.b16 %v30
  %v71 = vunpack.c.l.b16 %v31
  %v72 = vunpack.c.l.b16 %v32
  %v73 = vunpack.c.l.b16 %v33
  %v74 = vpack.c.b16 %v59, %v58
  %v75 = vpack.c.b16 %v61, %v60
  %v76 = vpack.c.b16 %v63, %v62
  %v77 = vpack.c.b16 %v65, %v64
  %v78 = vpack.c.b16 %v67, %v66
  %v79 = vpack.c.b16 %v69, %v68
  %v80 = vpack.c.b16 %v71, %v70
  %v81 = vpack.c.b16 %v73, %v72
  %v90 = vunpack.c.l.b16 %v34
  %v91 = vunpack.c.l.b16 %v35
  %v92 = vunpack.c.l.b16 %v36
  %v93 = vunpack.c.l.b16 %v37
  %v94 = vunpack.c.l.b16 %v38
  %v95 = vunpack.c.l.b16 %v39
  %v96 = vunpack.c.l.b16 %v40
  %v97 = vunpack.c.l.b16 %v41
  %v98 = vpack.c.b16 %v91, %v90
  %v99 = vpack.c.b16 %v93, %v92
  %v100 = vpack.c.b16 %v95, %v94
  %v101 = vpack.c.b16 %v97, %v96
  %vm106 = vcmask 523264
  %v108 = vsel %vm106, %v74, 0
  %v111 = vsel %vm106, %v75, 0
  %v114 = vsel %vm106, %v76, 0
  %v117 = vsel %vm106, %v77, 0
  %v120 = vsel %vm106, %v78, 0
  %v123 = vsel %vm106, %v79, 0
  %v126 = vsel %vm106, %v80, 0
  %v129 = vsel %vm106, %v81, 0
  %131 = vmatpush.bf16.msra.mxu0 0
  %132 = vmatpush.bf16.msra.mxu0 0
  %133 = vmatpush.bf16.msra.mxu0 0
  %134 = vmatpush.bf16.msra.mxu0 0
  %135 = vmatpush.bf16.msra.mxu0 %v101
  %136 = vmatpush.bf16.msra.mxu0 %v100
  %137 = vmatpush.bf16.msra.mxu0 %v99
  %138 = vmatpush.bf16.msra.mxu0 %v98
  %139 = vmatmul.bf16.gmra.mxu0 %v108
  %v140 = vpop.f32.mrf.mxu0
  %v141 = vadd.f32 0.0, %v140
  %v142 = vpop.f32.mrf.mxu0
  %v143 = vadd.f32 0.0, %v142
  %144 = vmatmul.bf16.gmra.mxu0 %v111
  %v145 = vpop.f32.mrf.mxu0
  %v146 = vadd.f32 0.0, %v145
  %v147 = vpop.f32.mrf.mxu0
  %v148 = vadd.f32 0.0, %v147
  %149 = vmatmul.bf16.gmra.mxu0 %v114
  %v150 = vpop.f32.mrf.mxu0
  %v151 = vadd.f32 0.0, %v150
  %v152 = vpop.f32.mrf.mxu0
  %v153 = vadd.f32 0.0, %v152
  %154 = vmatmul.bf16.gmra.mxu0 %v117
  %v155 = vpop.f32.mrf.mxu0
  %v156 = vadd.f32 0.0, %v155
  %v157 = vpop.f32.mrf.mxu0
  %v158 = vadd.f32 0.0, %v157
  %159 = vmatmul.bf16.gmra.mxu0 %v120
  %v160 = vpop.f32.mrf.mxu0
  %v161 = vadd.f32 0.0, %v160
  %v162 = vpop.f32.mrf.mxu0
  %v163 = vadd.f32 0.0, %v162
  %164 = vmatmul.bf16.gmra.mxu0 %v123
  %v165 = vpop.f32.mrf.mxu0
  %v166 = vadd.f32 0.0, %v165
  %v167 = vpop.f32.mrf.mxu0
  %v168 = vadd.f32 0.0, %v167
  %169 = vmatmul.bf16.gmra.mxu0 %v126
  %v170 = vpop.f32.mrf.mxu0
  %v171 = vadd.f32 0.0, %v170
  %v172 = vpop.f32.mrf.mxu0
  %v173 = vadd.f32 0.0, %v172
  %174 = vmatmul.bf16.gmra.mxu0 %v129
  %v175 = vpop.f32.mrf.mxu0
  %v176 = vadd.f32 0.0, %v175
  %v177 = vpop.f32.mrf.mxu0
  %v178 = vadd.f32 0.0, %v177
  %179 = vdwg.mxu0
  %v180 = vadd.f32 %v141, %v143
  %v181 = vadd.f32 %v180, %v146
  %v182 = vadd.f32 %v181, %v148
  %v183 = vadd.f32 %v182, %v151
  %v184 = vadd.f32 %v183, %v153
  %v185 = vadd.f32 %v184, %v156
  %v186 = vadd.f32 %v185, %v158
  %v187 = vadd.f32 %v186, %v161
  %v188 = vadd.f32 %v187, %v163
  %v189 = vadd.f32 %v188, %v166
  %v190 = vadd.f32 %v189, %v168
  %v191 = vadd.f32 %v190, %v171
  %v192 = vadd.f32 %v191, %v173
  %v193 = vadd.f32 %v192, %v176
  %v194 = vadd.f32 %v193, %v178
  %v195 = vrot.slane %v194, 4
  %v196 = vadd.f32 %v194, %v195
  %v197 = vrot.slane %v196, 2
  %v198 = vadd.f32 %v196, %v197
  %v199 = vrot.slane %v198, 1
  %v200 = vadd.f32 %v198, %v199
  %v201 = vmul.f32 %v200, 0.0078125
  %v202 = vmul.f32 %v141, %v141
  %v203 = vmul.f32 %v143, %v143
  %v204 = vmul.f32 %v146, %v146
  %v205 = vmul.f32 %v148, %v148
  %v206 = vmul.f32 %v151, %v151
  %v207 = vmul.f32 %v153, %v153
  %v208 = vmul.f32 %v156, %v156
  %v209 = vmul.f32 %v158, %v158
  %v210 = vmul.f32 %v161, %v161
  %v211 = vmul.f32 %v163, %v163
  %v212 = vmul.f32 %v166, %v166
  %v213 = vmul.f32 %v168, %v168
  %v214 = vmul.f32 %v171, %v171
  %v215 = vmul.f32 %v173, %v173
  %v216 = vmul.f32 %v176, %v176
  %v217 = vmul.f32 %v178, %v178
  %v218 = vadd.f32 %v202, %v203
  %v219 = vadd.f32 %v218, %v204
  %v220 = vadd.f32 %v219, %v205
  %v221 = vadd.f32 %v220, %v206
  %v222 = vadd.f32 %v221, %v207
  %v223 = vadd.f32 %v222, %v208
  %v224 = vadd.f32 %v223, %v209
  %v225 = vadd.f32 %v224, %v210
  %v226 = vadd.f32 %v225, %v211
  %v227 = vadd.f32 %v226, %v212
  %v228 = vadd.f32 %v227, %v213
  %v229 = vadd.f32 %v228, %v214
  %v230 = vadd.f32 %v229, %v215
  %v231 = vadd.f32 %v230, %v216
  %v232 = vadd.f32 %v231, %v217
  %v233 = vrot.slane %v232, 4
  %v234 = vadd.f32 %v232, %v233
  %v235 = vrot.slane %v234, 2
  %v236 = vadd.f32 %v234, %v235
  %v237 = vrot.slane %v236, 1
  %v238 = vadd.f32 %v236, %v237
  %v239 = vmul.f32 %v238, 0.0078125
  %v240 = vmul.f32 %v201, %v201
  %v241 = vsub.f32 %v239, %v240
  %v242 = vmax.f32 %v241, 0.0
  %v243 = vld [vmem:[%s2] sm:$0x1]
  %v244 = vadd.f32 %v242, 1e-05
  %v245 = vrsqrt.pop %v244
  %v246 = vmul.f32 %v245, %v244
  %v247 = vmul.f32 %v246, %v245
  %v248 = vmul.f32 0.5, %v247
  %v249 = vsub.f32 1.5, %v248
  %v250 = vmul.f32 %v245, %v249
  %vm251 = vweird.f32 %v244
  %vm252 = vweird.f32 %v245
  %vm253 = vmor %vm251, %vm252
  %v254 = vsel %vm253, %v245, %v250
  %v255 = vmul.f32 %v243, %v254
  %v256 = vld [vmem:[%s3] sm:$0x1]
  %v257 = vmul.f32 %v201, %v255
  %v258 = vsub.f32 %v256, %v257
  %v260 = vperm.slane %v255, 0
  %v262 = vmul.f32 %v141, %v260
  %v263 = vmul.f32 %v143, %v260
  %v264 = vmul.f32 %v146, %v260
  %v265 = vmul.f32 %v148, %v260
  %v266 = vmul.f32 %v151, %v260
  %v267 = vmul.f32 %v153, %v260
  %v268 = vmul.f32 %v156, %v260
  %v269 = vmul.f32 %v158, %v260
  %v270 = vmul.f32 %v161, %v260
  %v271 = vmul.f32 %v163, %v260
  %v272 = vmul.f32 %v166, %v260
  %v273 = vmul.f32 %v168, %v260
  %v274 = vmul.f32 %v171, %v260
  %v275 = vmul.f32 %v173, %v260
  %v276 = vmul.f32 %v176, %v260
  %v277 = vmul.f32 %v178, %v260
  %v279 = vperm.slane %v258, 0
  %v281 = vadd.f32 %v262, %v279
  %v282 = vadd.f32 %v263, %v279
  %v283 = vadd.f32 %v264, %v279
  %v284 = vadd.f32 %v265, %v279
  %v285 = vadd.f32 %v266, %v279
  %v286 = vadd.f32 %v267, %v279
  %v287 = vadd.f32 %v268, %v279
  %v288 = vadd.f32 %v269, %v279
  %v289 = vadd.f32 %v270, %v279
  %v290 = vadd.f32 %v271, %v279
  %v291 = vadd.f32 %v272, %v279
  %v292 = vadd.f32 %v273, %v279
  %v293 = vadd.f32 %v274, %v279
  %v294 = vadd.f32 %v275, %v279
  %v295 = vadd.f32 %v276, %v279
  %v296 = vadd.f32 %v277, %v279
  %v297 = vmax.f32 %v281, 0.0
  %v298 = vmax.f32 %v282, 0.0
  %v299 = vmax.f32 %v283, 0.0
  %v300 = vmax.f32 %v284, 0.0
  %v301 = vmax.f32 %v285, 0.0
  %v302 = vmax.f32 %v286, 0.0
  %v303 = vmax.f32 %v287, 0.0
  %v304 = vmax.f32 %v288, 0.0
  %v305 = vmax.f32 %v289, 0.0
  %v306 = vmax.f32 %v290, 0.0
  %v307 = vmax.f32 %v291, 0.0
  %v308 = vmax.f32 %v292, 0.0
  %v309 = vmax.f32 %v293, 0.0
  %v310 = vmax.f32 %v294, 0.0
  %v311 = vmax.f32 %v295, 0.0
  %v312 = vmax.f32 %v296, 0.0
  %v313 = vpack.c.bf16 %v297, %v297
  %v314 = vpack.c.bf16 %v298, %v298
  %v315 = vpack.c.bf16 %v299, %v299
  %v316 = vpack.c.bf16 %v300, %v300
  %v317 = vpack.c.bf16 %v301, %v301
  %v318 = vpack.c.bf16 %v302, %v302
  %v319 = vpack.c.bf16 %v303, %v303
  %v320 = vpack.c.bf16 %v304, %v304
  %v321 = vpack.c.bf16 %v305, %v305
  %v322 = vpack.c.bf16 %v306, %v306
  %v323 = vpack.c.bf16 %v307, %v307
  %v324 = vpack.c.bf16 %v308, %v308
  %v325 = vpack.c.bf16 %v309, %v309
  %v326 = vpack.c.bf16 %v310, %v310
  %v327 = vpack.c.bf16 %v311, %v311
  %v328 = vpack.c.bf16 %v312, %v312
  %329 = vst [vmem:[%s4] sm:$0xf] %v313
  %330 = vst [vmem:[%s4 + $0x4] sm:$0xf] %v314
  %331 = vst [vmem:[%s4 + $0x8] sm:$0xf] %v315
  %332 = vst [vmem:[%s4 + $0xc] sm:$0xf] %v316
  %333 = vst [vmem:[%s4 + $0x10] sm:$0xf] %v317
  %334 = vst [vmem:[%s4 + $0x14] sm:$0xf] %v318
  %335 = vst [vmem:[%s4 + $0x18] sm:$0xf] %v319
  %336 = vst [vmem:[%s4 + $0x1c] sm:$0xf] %v320
  %337 = vst [vmem:[%s4 + $0x20] sm:$0xf] %v321
  %338 = vst [vmem:[%s4 + $0x24] sm:$0xf] %v322
  %339 = vst [vmem:[%s4 + $0x28] sm:$0xf] %v323
  %340 = vst [vmem:[%s4 + $0x2c] sm:$0xf] %v324
  %341 = vst [vmem:[%s4 + $0x30] sm:$0xf] %v325
  %342 = vst [vmem:[%s4 + $0x34] sm:$0xf] %v326
  %343 = vst [vmem:[%s4 + $0x38] sm:$0xf] %v327
  %344 = vst [vmem:[%s4 + $0x3c] sm:$0xf] %v328
  // Predicated region
  $region18: #{resnet_forward.7} parent=0 // pred_check
    _
  $region19: #{resnet_forward.7} parent=0 // pred_check_branch
    %346 = sbr.rel (0) target = $region21
  $region20: #{resnet_forward.7} parent=0 // pred_region
    _
  $region21: #{resnet_forward.7} parent=0 // pred_fallthru
    _
  // Predicated region
  $region22: #{resnet_forward.7} parent=0 // pred_check
    _
  $region23: #{resnet_forward.7} parent=0 // pred_check_branch
    %348 = sbr.rel (0) target = $region25
  $region24: #{resnet_forward.7} parent=0 // pred_region
    _
  $region25: #{resnet_forward.7} parent=0 // pred_fallthru
    _

// kernel: resnet_forward.8
$region0: #{resnet_forward.8}
  #allocation0 [shape = 'u32[]', space=smem, size = 0x4, offset = 0x4, fixed_abs, tag = 'smem constant byte address 0x4 - core index']
  #allocation1 [shape = 'u32[72,128]{1,0:T(1,128)}', space=vmem, size = 0x9000, scoped, tag = 'internal scratch']
  %s0 = inlined_call_operand.vmem [shape: bf16[9,32,128], index: 0, kind: input, shape index: {}]
  %s1 = inlined_call_operand.vmem [shape: bf16[32,128], index: 1, kind: output, shape index: {}]
  %s2 = sld [smem:[#allocation0]]
  $region78: #{resnet_forward.8} parent=0
    _
  %s4 = ssub.s32 1, %s2
  %s5 = scalar_select 0, %s4, %s2
  $region1: #{resnet_forward.8} parent=0
    #allocation2 [shape = 'u8[73728]{0}', space=vmem, size = 0x12000, scoped, tag = 'input window, operand 0']
    loop: start=0, step=1, limit=4
    $region2: #{resnet_forward.8} parent=1 // loop_pre_header
      _
    $region3: #{resnet_forward.8} parent=1 // loop_header
      %s7 = sphi 0, %s11
      %p8 = scmp.ge.s32.totalorder %s7, 4
      %s17 = sphi 0, %s19
      %s20 = sphi 0, %s17
      %s21 = sphi 0, %s20
      %s37 = sphi 0, %s21
      %s43 = sphi 0, %s45
      %s46 = sphi 0, %s43
      %s47 = sphi 0, %s46
      %s63 = sphi 0, %s47
    $region4: #{resnet_forward.8} parent=1 // loop_header_branch
      %10 = sbr.rel (%p8) target = $region8
    $region5: #{resnet_forward.8} parent=1 // loop_body
      %s12 = ssub.s32 %s7, 1
      %s13 = ssub.s32 %s7, 2
      %s14 = sadd.s32 %s7, 1
      %s15 = ssub.s32 %s7, %s14
      %p16 = scmp.eq.s32.totalorder %s15, 0
      %s18 = sadd.s32 %s17, 1
      %s19 = scalar_select %p16, %s17, %s18
      %p22 = pneg %p16
      %p23 = scmp.eq.s32.totalorder %s7, 1
      %p24 = por %p22, %p23
      %p25 = scmp.ne.s32.totalorder %s17, %s20
      %p26 = scmp.eq.s32.totalorder %s7, 0
      %p27 = por %p25, %p26
      %p28 = scmp.ne.s32.totalorder %s17, %s20
      %p29 = scmp.eq.s32.totalorder %s12, 1
      %p30 = por %p28, %p29
      %p31 = scmp.ne.s32.totalorder %s20, %s21
      %p32 = scmp.eq.s32.totalorder %s12, 0
      %p33 = por %p31, %p32
      %p34 = scmp.ne.s32.totalorder %s20, %s21
      %p35 = scmp.eq.s32.totalorder %s13, 1
      %p36 = por %p34, %p35
      %p38 = scmp.ne.s32.totalorder %s21, %s37
      %p39 = scmp.eq.s32.totalorder %s13, 0
      %p40 = por %p38, %p39
      %s41 = ssub.s32 %s7, %s14
      %p42 = scmp.eq.s32.totalorder %s41, 0
      %s44 = sadd.s32 %s43, 1
      %s45 = scalar_select %p42, %s43, %s44
      %p48 = pneg %p42
      %p49 = scmp.eq.s32.totalorder %s7, 1
      %p50 = por %p48, %p49
      %p51 = scmp.ne.s32.totalorder %s43, %s46
      %p52 = scmp.eq.s32.totalorder %s7, 0
      %p53 = por %p51, %p52
      %p54 = scmp.ne.s32.totalorder %s43, %s46
      %p55 = scmp.eq.s32.totalorder %s12, 1
      %p56 = por %p54, %p55
      %p57 = scmp.ne.s32.totalorder %s46, %s47
      %p58 = scmp.eq.s32.totalorder %s12, 0
      %p59 = por %p57, %p58
      %p60 = scmp.ne.s32.totalorder %s46, %s47
      %p61 = scmp.eq.s32.totalorder %s13, 1
      %p62 = por %p60, %p61
      %p64 = scmp.ne.s32.totalorder %s47, %s63
      %p65 = scmp.eq.s32.totalorder %s13, 0
      %p66 = por %p64, %p65
      %p67 = scmp.le.s32.totalorder 1, %s7
      %p68 = scmp.lt.s32.totalorder %s7, 3
      %p69 = pnand %p67, %p68
      %p70 = pneg %p69
      // Predicated region
      $region9: #{resnet_forward.8} parent=5 // pred_check
        _
      $region10: #{resnet_forward.8} parent=5 // pred_check_branch
        %72 = sbr.rel (%p69) target = $region12
      $region11: #{resnet_forward.8} parent=5 // pred_region
        %s73 = ssub.s32 %s7, 1
      $region12: #{resnet_forward.8} parent=5 // pred_fallthru
        _
      %p74 = scmp.lt.s32.totalorder %s7, 2
      // Predicated region
      $region13: #{resnet_forward.8} parent=5 // pred_check
        %p75 = pneg %p74
      $region14: #{resnet_forward.8} parent=5 // pred_check_branch
        %77 = sbr.rel (%p75) target = $region16
      $region15: #{resnet_forward.8} parent=5 // pred_region
        // Predicated region
        $region17: #{resnet_forward.8} parent=15 // pred_check
          %p78 = pneg %p27
        $region18: #{resnet_forward.8} parent=15 // pred_check_branch
          %80 = sbr.rel (%p78) target = $region20
        $region19: #{resnet_forward.8} parent=15 // pred_region
          %s81 = sand.u32 %s17, 1
          %s82 = sand.u32 %s17, 1
          %s83 = smul.addr %s82, 72
          %s84 = scalar_lea.vmem [#allocation2], %s83
          %s85 = smul.u32 2, %s7
          %s86 = smul.addr %s85, 4
          %s87 = scalar_lea.vmem %s0, %s86
          // Predicated region
          $region21: #{resnet_forward.8} parent=19 // pred_check
            _
          $region22: #{resnet_forward.8} parent=19 // pred_check_branch
            %89 = sbr.rel (0) target = $region24
          $region23: #{resnet_forward.8} parent=19 // pred_region
            // Predicated region
            $region25: #{resnet_forward.8} parent=23 // pred_check
              _
            $region26: #{resnet_forward.8} parent=23 // pred_check_branch
              %91 = sbr.rel target = $region28
            $region27: #{resnet_forward.8} parent=23 // pred_region
              // Predicated region
              $region40: #{resnet_forward.8} parent=27 // pred_check
                _
              $region41: #{resnet_forward.8} parent=27 // pred_check_branch
                %141 = sbr.rel (0) target = $region43
              $region42: #{resnet_forward.8} parent=27 // pred_region
                loop: start=0, step=1, limit=1
                $region44: #{resnet_forward.8} parent=42 // loop_pre_header
                  _
                $region45: #{resnet_forward.8} parent=42 // loop_header
                  %s143 = sphi 0, %s147
                  %p144 = scmp.ge.s32.totalorder %s143, 1
                  %s148 = sphi %s87, %s87
                  %s149 = sphi %s84, %s84
                $region46: #{resnet_forward.8} parent=42 // loop_header_branch
                  %146 = sbr.rel (%p144) target = $region50
                $region47: #{resnet_forward.8} parent=42 // loop_body
                  _
                $region48: #{resnet_forward.8} parent=42 // loop_footer
                  %s147 = sadd.s32 1, %s143
                $region49: #{resnet_forward.8} parent=42 // loop_footer_branch
                  %142 = sbr.rel target = $region45
                $region50: #{resnet_forward.8} parent=42 // loop_exit
                  _
                %s151 = ssub.s32 16, 1
                loop: start=0, step=1, limit=1
                $region51: #{resnet_forward.8} parent=42 // loop_pre_header
                  _
                $region52: #{resnet_forward.8} parent=42 // loop_header
                  %s153 = sphi 0, %s157
                  %p154 = scmp.ge.s32.totalorder %s153, 1
                  %s158 = sphi %s87, %s87
                  %s159 = sphi %s84, %s84
                $region53: #{resnet_forward.8} parent=42 // loop_header_branch
                  %156 = sbr.rel (%p154) target = $region57
                $region54: #{resnet_forward.8} parent=42 // loop_body
                  %v160 = vld [vmem:[%s158] sm:%s151]
                  %161 = vst [vmem:[%s159] sm:%s151] %v160
                  %v162 = vld [vmem:[%s158 + $0x4] sm:%s151]
                  %163 = vst [vmem:[%s159 + $0x4] sm:%s151] %v162
                  %v164 = vld [vmem:[%s158 + $0x10] sm:%s151]
                  %165 = vst [vmem:[%s159 + $0x8] sm:%s151] %v164
                  %v166 = vld [vmem:[%s158 + $0x14] sm:%s151]
                  %167 = vst [vmem:[%s159 + $0xc] sm:%s151] %v166
                  %v168 = vld [vmem:[%s158 + $0x20] sm:%s151]
                  %169 = vst [vmem:[%s159 + $0x10] sm:%s151] %v168
                  %v170 = vld [vmem:[%s158 + $0x24] sm:%s151]
                  %171 = vst [vmem:[%s159 + $0x14] sm:%s151] %v170
                  %v172 = vld [vmem:[%s158 + $0x30] sm:%s151]
                  %173 = vst [vmem:[%s159 + $0x18] sm:%s151] %v172
                  %v174 = vld [vmem:[%s158 + $0x34] sm:%s151]
                  %175 = vst [vmem:[%s159 + $0x1c] sm:%s151] %v174
                  %v176 = vld [vmem:[%s158 + $0x40] sm:%s151]
                  %177 = vst [vmem:[%s159 + $0x20] sm:%s151] %v176
                  %v178 = vld [vmem:[%s158 + $0x44] sm:%s151]
                  %179 = vst [vmem:[%s159 + $0x24] sm:%s151] %v178
                  %v180 = vld [vmem:[%s158 + $0x50] sm:%s151]
                  %181 = vst [vmem:[%s159 + $0x28] sm:%s151] %v180
                  %v182 = vld [vmem:[%s158 + $0x54] sm:%s151]
                  %183 = vst [vmem:[%s159 + $0x2c] sm:%s151] %v182
                  %v184 = vld [vmem:[%s158 + $0x60] sm:%s151]
                  %185 = vst [vmem:[%s159 + $0x30] sm:%s151] %v184
                  %v186 = vld [vmem:[%s158 + $0x64] sm:%s151]
                  %187 = vst [vmem:[%s159 + $0x34] sm:%s151] %v186
                  %v188 = vld [vmem:[%s158 + $0x70] sm:%s151]
                  %189 = vst [vmem:[%s159 + $0x38] sm:%s151] %v188
                  %v190 = vld [vmem:[%s158 + $0x74] sm:%s151]
                  %191 = vst [vmem:[%s159 + $0x3c] sm:%s151] %v190
                  %v192 = vld [vmem:[%s158 + $0x80] sm:%s151]
                  %193 = vst [vmem:[%s159 + $0x40] sm:%s151] %v192
                  %v194 = vld [vmem:[%s158 + $0x84] sm:%s151]
                  %195 = vst [vmem:[%s159 + $0x44] sm:%s151] %v194
                $region55: #{resnet_forward.8} parent=42 // loop_footer
                  %s157 = sadd.s32 1, %s153
                $region56: #{resnet_forward.8} parent=42 // loop_footer_branch
                  %152 = sbr.rel target = $region52
                $region57: #{resnet_forward.8} parent=42 // loop_exit
                  _
              $region43: #{resnet_forward.8} parent=27 // pred_fallthru
                _
            $region28: #{resnet_forward.8} parent=23 // pred_fallthru
              _
            // Predicated region
            $region29: #{resnet_forward.8} parent=23 // pred_check
              _
            $region30: #{resnet_forward.8} parent=23 // pred_check_branch
              %93 = sbr.rel (0) target = $region32
            $region31: #{resnet_forward.8} parent=23 // pred_region
              %s95 = ssub.s32 16, 1
              loop: start=0, step=1, limit=1
              $region33: #{resnet_forward.8} parent=31 // loop_pre_header
                _
              $region34: #{resnet_forward.8} parent=31 // loop_header
                %s97 = sphi 0, %s101
                %p98 = scmp.ge.s32.totalorder %s97, 1
                %s102 = sphi %s87, %s87
                %s103 = sphi %s84, %s84
              $region35: #{resnet_forward.8} parent=31 // loop_header_branch
                %100 = sbr.rel (%p98) target = $region39
              $region36: #{resnet_forward.8} parent=31 // loop_body
                %v104 = vld [vmem:[%s102] sm:%s95]
                %105 = vst [vmem:[%s103] sm:%s95] %v104
                %v106 = vld [vmem:[%s102 + $0x4] sm:%s95]
                %107 = vst [vmem:[%s103 + $0x4] sm:%s95] %v106
                %v108 = vld [vmem:[%s102 + $0x10] sm:%s95]
                %109 = vst [vmem:[%s103 + $0x8] sm:%s95] %v108
                %v110 = vld [vmem:[%s102 + $0x14] sm:%s95]
                %111 = vst [vmem:[%s103 + $0xc] sm:%s95] %v110
                %v112 = vld [vmem:[%s102 + $0x20] sm:%s95]
                %113 = vst [vmem:[%s103 + $0x10] sm:%s95] %v112
                %v114 = vld [vmem:[%s102 + $0x24] sm:%s95]
                %115 = vst [vmem:[%s103 + $0x14] sm:%s95] %v114
                %v116 = vld [vmem:[%s102 + $0x30] sm:%s95]
                %117 = vst [vmem:[%s103 + $0x18] sm:%s95] %v116
                %v118 = vld [vmem:[%s102 + $0x34] sm:%s95]
                %119 = vst [vmem:[%s103 + $0x1c] sm:%s95] %v118
                %v120 = vld [vmem:[%s102 + $0x40] sm:%s95]
                %121 = vst [vmem:[%s103 + $0x20] sm:%s95] %v120
                %v122 = vld [vmem:[%s102 + $0x44] sm:%s95]
                %123 = vst [vmem:[%s103 + $0x24] sm:%s95] %v122
                %v124 = vld [vmem:[%s102 + $0x50] sm:%s95]
                %125 = vst [vmem:[%s103 + $0x28] sm:%s95] %v124
                %v126 = vld [vmem:[%s102 + $0x54] sm:%s95]
                %127 = vst [vmem:[%s103 + $0x2c] sm:%s95] %v126
                %v128 = vld [vmem:[%s102 + $0x60] sm:%s95]
                %129 = vst [vmem:[%s103 + $0x30] sm:%s95] %v128
                %v130 = vld [vmem:[%s102 + $0x64] sm:%s95]
                %131 = vst [vmem:[%s103 + $0x34] sm:%s95] %v130
                %v132 = vld [vmem:[%s102 + $0x70] sm:%s95]
                %133 = vst [vmem:[%s103 + $0x38] sm:%s95] %v132
                %v134 = vld [vmem:[%s102 + $0x74] sm:%s95]
                %135 = vst [vmem:[%s103 + $0x3c] sm:%s95] %v134
                %v136 = vld [vmem:[%s102 + $0x80] sm:%s95]
                %137 = vst [vmem:[%s103 + $0x40] sm:%s95] %v136
                %v138 = vld [vmem:[%s102 + $0x84] sm:%s95]
                %139 = vst [vmem:[%s103 + $0x44] sm:%s95] %v138
              $region37: #{resnet_forward.8} parent=31 // loop_footer
                %s101 = sadd.s32 1, %s97
              $region38: #{resnet_forward.8} parent=31 // loop_footer_branch
                %96 = sbr.rel target = $region34
              $region39: #{resnet_forward.8} parent=31 // loop_exit
                _
            $region32: #{resnet_forward.8} parent=23 // pred_fallthru
              _
          $region24: #{resnet_forward.8} parent=19 // pred_fallthru
            _
          %196 = vnop
        $region20: #{resnet_forward.8} parent=15 // pred_fallthru
          _
      $region16: #{resnet_forward.8} parent=5 // pred_fallthru
        _
      %p197 = scmp.le.s32.totalorder 1, %s7
      %p198 = scmp.lt.s32.totalorder %s7, 3
      %p199 = pnand %p197, %p198
      %p200 = pneg %p199
      // Predicated region
      $region58: #{resnet_forward.8} parent=5 // pred_check
        _
      $region59: #{resnet_forward.8} parent=5 // pred_check_branch
        %202 = sbr.rel (%p199) target = $region61
      $region60: #{resnet_forward.8} parent=5 // pred_region
        %s203 = ssub.s32 %s7, 1
        %s204 = sand.u32 %s20, 1
        %s205 = sand.u32 %s20, 1
        %s206 = smul.addr %s205, 72
        %s207 = scalar_lea.vmem [#allocation2], %s206
        // Predicated region
        $region62: #{resnet_forward.8} parent=60 // pred_check
          %p208 = pneg %p33
        $region63: #{resnet_forward.8} parent=60 // pred_check_branch
          %210 = sbr.rel (%p208) target = $region65
        $region64: #{resnet_forward.8} parent=60 // pred_region
          _
        $region65: #{resnet_forward.8} parent=60 // pred_fallthru
          _
        %s211 = sand.u32 %s20, 1
        %s212 = sand.u32 %s20, 1
        %s213 = smul.addr %s212, 72
        %s214 = scalar_lea.vmem [#allocation2], %s213
        %p215 = pneg %p33
        %p216 = pneg %p30
        %p217 = pneg %p59
        %p218 = pneg %p56
        %s219 = smul.u32 2, %s12
        %p220 = scmp.lt.s32.totalorder %s219, 3
        %s221 = scalar_select %p220, %s219, 3
        %s222 = smul.addr %s221, 4
        %s223 = scalar_lea.vmem %s1, %s222
        %s224 = smul.u32 2, %s12
        %s225 = smul.u32 2, %s12
        %p226 = scmp.lt.s32.totalorder %s225, 3
        %s227 = scalar_select %p226, %s225, 3
        %s228 = smul.addr %s227, 4
        %s229 = scalar_lea.vmem %s1, %s228
        %s230 = smul.u32 2, %s12
        %v231 = vld [vmem:[%s207] sm:$0xf]
        %v232 = vld [vmem:[%s207 + $0x4] sm:$0xf]
        %v233 = vld [vmem:[%s207 + $0x8] sm:$0xf]
        %v234 = vld [vmem:[%s207 + $0xc] sm:$0xf]
        %v235 = vld [vmem:[%s207 + $0x10] sm:$0xf]
        %v236 = vld [vmem:[%s207 + $0x14] sm:$0xf]
        %v237 = vld [vmem:[%s207 + $0x18] sm:$0xf]
        %v238 = vld [vmem:[%s207 + $0x1c] sm:$0xf]
        %v239 = vld [vmem:[%s207 + $0x20] sm:$0xf]
        %v240 = vld [vmem:[%s207 + $0x24] sm:$0xf]
        %v241 = vld [vmem:[%s207 + $0x28] sm:$0xf]
        %v242 = vld [vmem:[%s207 + $0x2c] sm:$0xf]
        %v243 = vld [vmem:[%s207 + $0x30] sm:$0xf]
        %v244 = vld [vmem:[%s207 + $0x34] sm:$0xf]
        %v245 = vld [vmem:[%s207 + $0x38] sm:$0xf]
        %v246 = vld [vmem:[%s207 + $0x3c] sm:$0xf]
        %v247 = vld [vmem:[%s207 + $0x40] sm:$0xf]
        %v248 = vld [vmem:[%s207 + $0x44] sm:$0xf]
        %v249 = vunpack.c.l.bf16 %v231
        %v250 = vunpack.c.l.bf16 %v232
        %v251 = vunpack.c.l.bf16 %v233
        %v252 = vunpack.c.l.bf16 %v234
        %v253 = vunpack.c.l.bf16 %v235
        %v254 = vunpack.c.l.bf16 %v236
        %v255 = vunpack.c.l.bf16 %v237
        %v256 = vunpack.c.l.bf16 %v238
        %v257 = vunpack.c.l.bf16 %v239
        %v258 = vunpack.c.l.bf16 %v240
        %v259 = vunpack.c.l.bf16 %v241
        %v260 = vunpack.c.l.bf16 %v242
        %v261 = vunpack.c.l.bf16 %v243
        %v262 = vunpack.c.l.bf16 %v244
        %v263 = vunpack.c.l.bf16 %v245
        %v264 = vunpack.c.l.bf16 %v246
        %v265 = vunpack.c.l.bf16 %v247
        %v266 = vunpack.c.l.bf16 %v248
        %v267 = vmax.f32 %v249, %v253
        %v268 = vmax.f32 %v251, %v255
        %v269 = vmax.f32 %v267, %v257
        %v270 = vmax.f32 %v268, %v259
        %v271 = vmax.f32 %v269, %v261
        %v272 = vmax.f32 %v270, %v263
        %v273 = vmax.f32 %v271, %v265
        %v274 = vmax.f32 %v273, %v272
        %v275 = vmax.f32 %v250, %v254
        %v276 = vmax.f32 %v252, %v256
        %v277 = vmax.f32 %v275, %v258
        %v278 = vmax.f32 %v276, %v260
        %v279 = vmax.f32 %v277, %v262
        %v280 = vmax.f32 %v278, %v264
        %v281 = vmax.f32 %v279, %v266
        %v282 = vmax.f32 %v281, %v280
        %v283 = vpack.c.bf16 %v274, %v274
        %v284 = vpack.c.bf16 %v282, %v282
        %285 = vst [vmem:[%s229] sm:$0xf] %v283
        %286 = vst [vmem:[%s229 + $0x4] sm:$0xf] %v284
        %s287 = smul.u32 2, %s12
        %p288 = scmp.lt.s32.totalorder %s287, 3
        %s289 = scalar_select %p288, %s287, 3
        %s290 = smul.addr %s289, 4
        %s291 = scalar_lea.vmem %s1, %s290
        // Predicated region
        $region66: #{resnet_forward.8} parent=60 // pred_check
          %p292 = pneg %p56
        $region67: #{resnet_forward.8} parent=60 // pred_check_branch
          %294 = sbr.rel (%p292) target = $region69
        $region68: #{resnet_forward.8} parent=60 // pred_region
          %s295 = smul.u32 2, %s12
        $region69: #{resnet_forward.8} parent=60 // pred_fallthru
          _
      $region61: #{resnet_forward.8} parent=5 // pred_fallthru
        _
      %p296 = scmp.le.s32.totalorder 2, %s7
      // Predicated region
      $region70: #{resnet_forward.8} parent=5 // pred_check
        %p297 = pneg %p296
      $region71: #{resnet_forward.8} parent=5 // pred_check_branch
        %299 = sbr.rel (%p297) target = $region73
      $region72: #{resnet_forward.8} parent=5 // pred_region
        %s300 = ssub.s32 %s7, 2
        // Predicated region
        $region74: #{resnet_forward.8} parent=72 // pred_check
          %p301 = pneg %p62
        $region75: #{resnet_forward.8} parent=72 // pred_check_branch
          %303 = sbr.rel (%p301) target = $region77
        $region76: #{resnet_forward.8} parent=72 // pred_region
          %s304 = smul.u32 2, %s13
          %p305 = scmp.lt.s32.totalorder %s304, 3
          %s306 = scalar_select %p305, %s304, 3
          %s307 = smul.addr %s306, 4
          %s308 = scalar_lea.vmem %s1, %s307
        $region77: #{resnet_forward.8} parent=72 // pred_fallthru
          _
      $region73: #{resnet_forward.8} parent=5 // pred_fallthru
        _
    $region6: #{resnet_forward.8} parent=1 // loop_footer
      %s11 = sadd.s32 1, %s7
    $region7: #{resnet_forward.8} parent=1 // loop_footer_branch
      %6 = sbr.rel target = $region3
    $region8: #{resnet_forward.8} parent=1 // loop_exit
      _

// kernel: resnet_forward.9
$region0: #{resnet_forward.9}
  #allocation0 [shape = 'u32[]', space=smem, size = 0x4, offset = 0x4, fixed_abs, tag = 'smem constant byte address 0x4 - core index']
  #allocation1 [shape = 'u32[72,128]{1,0:T(1,128)}', space=vmem, size = 0x9000, scoped, tag = 'internal scratch']
  %s0 = inlined_call_operand.vmem [shape: bf16[32,1152], index: 0, kind: input, shape index: {}]
  %s1 = inlined_call_operand.vmem [shape: bf16[1152,128], index: 1, kind: input, shape index: {}]
  %s2 = inlined_call_operand.vmem [shape: f32[1,128], index: 2, kind: input, shape index: {}]
  %s3 = inlined_call_operand.vmem [shape: f32[1,128], index: 3, kind: input, shape index: {}]
  %s4 = inlined_call_operand.vmem [shape: bf16[32,128], index: 4, kind: output, shape index: {}]
  %s5 = sld [smem:[#allocation0]]
  $region26: #{resnet_forward.9} parent=0
    _
  %s7 = ssub.s32 1, %s5
  %s8 = scalar_select 0, %s7, %s5
  // Predicated region
  $region2: #{resnet_forward.9} parent=0 // pred_check
    _
  $region3: #{resnet_forward.9} parent=0 // pred_check_branch
    %10 = sbr.rel (0) target = $region5
  $region4: #{resnet_forward.9} parent=0 // pred_region
    _
  $region5: #{resnet_forward.9} parent=0 // pred_fallthru
    _
  // Predicated region
  $region6: #{resnet_forward.9} parent=0 // pred_check
    _
  $region7: #{resnet_forward.9} parent=0 // pred_check_branch
    %12 = sbr.rel (0) target = $region9
  $region8: #{resnet_forward.9} parent=0 // pred_region
    _
  $region9: #{resnet_forward.9} parent=0 // pred_fallthru
    _
  // Predicated region
  $region10: #{resnet_forward.9} parent=0 // pred_check
    _
  $region11: #{resnet_forward.9} parent=0 // pred_check_branch
    %14 = sbr.rel (0) target = $region13
  $region12: #{resnet_forward.9} parent=0 // pred_region
    _
  $region13: #{resnet_forward.9} parent=0 // pred_fallthru
    _
  // Predicated region
  $region14: #{resnet_forward.9} parent=0 // pred_check
    _
  $region15: #{resnet_forward.9} parent=0 // pred_check_branch
    %16 = sbr.rel (0) target = $region17
  $region16: #{resnet_forward.9} parent=0 // pred_region
    _
  $region17: #{resnet_forward.9} parent=0 // pred_fallthru
    _
  %v17 = vld [vmem:[%s0] sm:$0xff]
  %v18 = vld [vmem:[%s0 + $0x8] sm:$0xff]
  %v19 = vld [vmem:[%s0 + $0x10] sm:$0xff]
  %v20 = vld [vmem:[%s0 + $0x18] sm:$0xff]
  %v21 = vld [vmem:[%s0 + $0x20] sm:$0xf]
  %v22 = vld [vmem:[%s0 + $0x24] sm:$0xff]
  %v23 = vld [vmem:[%s0 + $0x2c] sm:$0xff]
  %v24 = vld [vmem:[%s0 + $0x34] sm:$0xff]
  %v25 = vld [vmem:[%s0 + $0x3c] sm:$0xff]
  %v26 = vld [vmem:[%s0 + $0x44] sm:$0xf]
  %v27 = vld [vmem:[%s0 + $0x48] sm:$0xff]
  %v28 = vld [vmem:[%s0 + $0x50] sm:$0xff]
  %v29 = vld [vmem:[%s0 + $0x58] sm:$0xff]
  %v30 = vld [vmem:[%s0 + $0x60] sm:$0xff]
  %v31 = vld [vmem:[%s0 + $0x68] sm:$0xf]
  %v32 = vld [vmem:[%s0 + $0x6c] sm:$0xff]
  %v33 = vld [vmem:[%s0 + $0x74] sm:$0xff]
  %v34 = vld [vmem:[%s0 + $0x7c] sm:$0xff]
  %v35 = vld [vmem:[%s0 + $0x84] sm:$0xff]
  %v36 = vld [vmem:[%s0 + $0x8c] sm:$0xf]
  %v37 = vld [vmem:[%s1] sm:$0xf]
  %v38 = vld [vmem:[%s1 + $0x4] sm:$0xf]
  %v39 = vld [vmem:[%s1 + $0x8] sm:$0xf]
  %v40 = vld [vmem:[%s1 + $0xc] sm:$0xf]
  %v41 = vld [vmem:[%s1 + $0x10] sm:$0xf]
  %v42 = vld [vmem:[%s1 + $0x14] sm:$0xf]
  %v43 = vld [vmem:[%s1 + $0x18] sm:$0xf]
  %v44 = vld [vmem:[%s1 + $0x1c] sm:$0xf]
  %v45 = vld [vmem:[%s1 + $0x20] sm:$0xf]
  %v46 = vld [vmem:[%s1 + $0x24] sm:$0xf]
  %v47 = vld [vmem:[%s1 + $0x28] sm:$0xf]
  %v48 = vld [vmem:[%s1 + $0x2c] sm:$0xf]
  %v49 = vld [vmem:[%s1 + $0x30] sm:$0xf]
  %v50 = vld [vmem:[%s1 + $0x34] sm:$0xf]
  %v51 = vld [vmem:[%s1 + $0x38] sm:$0xf]
  %v52 = vld [vmem:[%s1 + $0x3c] sm:$0xf]
  %v53 = vld [vmem:[%s1 + $0x40] sm:$0xf]
  %v54 = vld [vmem:[%s1 + $0x44] sm:$0xf]
  %v55 = vld [vmem:[%s1 + $0x48] sm:$0xf]
  %v56 = vld [vmem:[%s1 + $0x4c] sm:$0xf]
  %v57 = vld [vmem:[%s1 + $0x50] sm:$0xf]
  %v58 = vld [vmem:[%s1 + $0x54] sm:$0xf]
  %v59 = vld [vmem:[%s1 + $0x58] sm:$0xf]
  %v60 = vld [vmem:[%s1 + $0x5c] sm:$0xf]
  %v61 = vld [vmem:[%s1 + $0x60] sm:$0xf]
  %v62 = vld [vmem:[%s1 + $0x64] sm:$0xf]
  %v63 = vld [vmem:[%s1 + $0x68] sm:$0xf]
  %v64 = vld [vmem:[%s1 + $0x6c] sm:$0xf]
  %v65 = vld [vmem:[%s1 + $0x70] sm:$0xf]
  %v66 = vld [vmem:[%s1 + $0x74] sm:$0xf]
  %v67 = vld [vmem:[%s1 + $0x78] sm:$0xf]
  %v68 = vld [vmem:[%s1 + $0x7c] sm:$0xf]
  %v69 = vld [vmem:[%s1 + $0x80] sm:$0xf]
  %v70 = vld [vmem:[%s1 + $0x84] sm:$0xf]
  %v71 = vld [vmem:[%s1 + $0x88] sm:$0xf]
  %v72 = vld [vmem:[%s1 + $0x8c] sm:$0xf]
  %v73 = vld [vmem:[%s1 + $0x90] sm:$0xf]
  %v74 = vld [vmem:[%s1 + $0x94] sm:$0xf]
  %v75 = vld [vmem:[%s1 + $0x98] sm:$0xf]
  %v76 = vld [vmem:[%s1 + $0x9c] sm:$0xf]
  %v77 = vld [vmem:[%s1 + $0xa0] sm:$0xf]
  %v78 = vld [vmem:[%s1 + $0xa4] sm:$0xf]
  %v79 = vld [vmem:[%s1 + $0xa8] sm:$0xf]
  %v80 = vld [vmem:[%s1 + $0xac] sm:$0xf]
  %v81 = vld [vmem:[%s1 + $0xb0] sm:$0xf]
  %v82 = vld [vmem:[%s1 + $0xb4] sm:$0xf]
  %v83 = vld [vmem:[%s1 + $0xb8] sm:$0xf]
  %v84 = vld [vmem:[%s1 + $0xbc] sm:$0xf]
  %v85 = vld [vmem:[%s1 + $0xc0] sm:$0xf]
  %v86 = vld [vmem:[%s1 + $0xc4] sm:$0xf]
  %v87 = vld [vmem:[%s1 + $0xc8] sm:$0xf]
  %v88 = vld [vmem:[%s1 + $0xcc] sm:$0xf]
  %v89 = vld [vmem:[%s1 + $0xd0] sm:$0xf]
  %v90 = vld [vmem:[%s1 + $0xd4] sm:$0xf]
  %v91 = vld [vmem:[%s1 + $0xd8] sm:$0xf]
  %v92 = vld [vmem:[%s1 + $0xdc] sm:$0xf]
  %v93 = vld [vmem:[%s1 + $0xe0] sm:$0xf]
  %v94 = vld [vmem:[%s1 + $0xe4] sm:$0xf]
  %v95 = vld [vmem:[%s1 + $0xe8] sm:$0xf]
  %v96 = vld [vmem:[%s1 + $0xec] sm:$0xf]
  %v97 = vld [vmem:[%s1 + $0xf0] sm:$0xf]
  %v98 = vld [vmem:[%s1 + $0xf4] sm:$0xf]
  %v99 = vld [vmem:[%s1 + $0xf8] sm:$0xf]
  %v100 = vld [vmem:[%s1 + $0xfc] sm:$0xf]
  %v101 = vld [vmem:[%s1 + $0x100] sm:$0xf]
  %v102 = vld [vmem:[%s1 + $0x104] sm:$0xf]
  %v103 = vld [vmem:[%s1 + $0x108] sm:$0xf]
  %v104 = vld [vmem:[%s1 + $0x10c] sm:$0xf]
  %v105 = vld [vmem:[%s1 + $0x110] sm:$0xf]
  %v106 = vld [vmem:[%s1 + $0x114] sm:$0xf]
  %v107 = vld [vmem:[%s1 + $0x118] sm:$0xf]
  %v108 = vld [vmem:[%s1 + $0x11c] sm:$0xf]
  %v109 = vld [vmem:[%s1 + $0x120] sm:$0xf]
  %v110 = vld [vmem:[%s1 + $0x124] sm:$0xf]
  %v111 = vld [vmem:[%s1 + $0x128] sm:$0xf]
  %v112 = vld [vmem:[%s1 + $0x12c] sm:$0xf]
  %v113 = vld [vmem:[%s1 + $0x130] sm:$0xf]
  %v114 = vld [vmem:[%s1 + $0x134] sm:$0xf]
  %v115 = vld [vmem:[%s1 + $0x138] sm:$0xf]
  %v116 = vld [vmem:[%s1 + $0x13c] sm:$0xf]
  %v117 = vld [vmem:[%s1 + $0x140] sm:$0xf]
  %v118 = vld [vmem:[%s1 + $0x144] sm:$0xf]
  %v119 = vld [vmem:[%s1 + $0x148] sm:$0xf]
  %v120 = vld [vmem:[%s1 + $0x14c] sm:$0xf]
  %v121 = vld [vmem:[%s1 + $0x150] sm:$0xf]
  %v122 = vld [vmem:[%s1 + $0x154] sm:$0xf]
  %v123 = vld [vmem:[%s1 + $0x158] sm:$0xf]
  %v124 = vld [vmem:[%s1 + $0x15c] sm:$0xf]
  %v125 = vld [vmem:[%s1 + $0x160] sm:$0xf]
  %v126 = vld [vmem:[%s1 + $0x164] sm:$0xf]
  %v127 = vld [vmem:[%s1 + $0x168] sm:$0xf]
  %v128 = vld [vmem:[%s1 + $0x16c] sm:$0xf]
  %v129 = vld [vmem:[%s1 + $0x170] sm:$0xf]
  %v130 = vld [vmem:[%s1 + $0x174] sm:$0xf]
  %v131 = vld [vmem:[%s1 + $0x178] sm:$0xf]
  %v132 = vld [vmem:[%s1 + $0x17c] sm:$0xf]
  %v133 = vld [vmem:[%s1 + $0x180] sm:$0xf]
  %v134 = vld [vmem:[%s1 + $0x184] sm:$0xf]
  %v135 = vld [vmem:[%s1 + $0x188] sm:$0xf]
  %v136 = vld [vmem:[%s1 + $0x18c] sm:$0xf]
  %v137 = vld [vmem:[%s1 + $0x190] sm:$0xf]
  %v138 = vld [vmem:[%s1 + $0x194] sm:$0xf]
  %v139 = vld [vmem:[%s1 + $0x198] sm:$0xf]
  %v140 = vld [vmem:[%s1 + $0x19c] sm:$0xf]
  %v141 = vld [vmem:[%s1 + $0x1a0] sm:$0xf]
  %v142 = vld [vmem:[%s1 + $0x1a4] sm:$0xf]
  %v143 = vld [vmem:[%s1 + $0x1a8] sm:$0xf]
  %v144 = vld [vmem:[%s1 + $0x1ac] sm:$0xf]
  %v145 = vld [vmem:[%s1 + $0x1b0] sm:$0xf]
  %v146 = vld [vmem:[%s1 + $0x1b4] sm:$0xf]
  %v147 = vld [vmem:[%s1 + $0x1b8] sm:$0xf]
  %v148 = vld [vmem:[%s1 + $0x1bc] sm:$0xf]
  %v149 = vld [vmem:[%s1 + $0x1c0] sm:$0xf]
  %v150 = vld [vmem:[%s1 + $0x1c4] sm:$0xf]
  %v151 = vld [vmem:[%s1 + $0x1c8] sm:$0xf]
  %v152 = vld [vmem:[%s1 + $0x1cc] sm:$0xf]
  %v153 = vld [vmem:[%s1 + $0x1d0] sm:$0xf]
  %v154 = vld [vmem:[%s1 + $0x1d4] sm:$0xf]
  %v155 = vld [vmem:[%s1 + $0x1d8] sm:$0xf]
  %v156 = vld [vmem:[%s1 + $0x1dc] sm:$0xf]
  %v157 = vld [vmem:[%s1 + $0x1e0] sm:$0xf]
  %v158 = vld [vmem:[%s1 + $0x1e4] sm:$0xf]
  %v159 = vld [vmem:[%s1 + $0x1e8] sm:$0xf]
  %v160 = vld [vmem:[%s1 + $0x1ec] sm:$0xf]
  %v161 = vld [vmem:[%s1 + $0x1f0] sm:$0xf]
  %v162 = vld [vmem:[%s1 + $0x1f4] sm:$0xf]
  %v163 = vld [vmem:[%s1 + $0x1f8] sm:$0xf]
  %v164 = vld [vmem:[%s1 + $0x1fc] sm:$0xf]
  %v165 = vld [vmem:[%s1 + $0x200] sm:$0xf]
  %v166 = vld [vmem:[%s1 + $0x204] sm:$0xf]
  %v167 = vld [vmem:[%s1 + $0x208] sm:$0xf]
  %v168 = vld [vmem:[%s1 + $0x20c] sm:$0xf]
  %v169 = vld [vmem:[%s1 + $0x210] sm:$0xf]
  %v170 = vld [vmem:[%s1 + $0x214] sm:$0xf]
  %v171 = vld [vmem:[%s1 + $0x218] sm:$0xf]
  %v172 = vld [vmem:[%s1 + $0x21c] sm:$0xf]
  %v173 = vld [vmem:[%s1 + $0x220] sm:$0xf]
  %v174 = vld [vmem:[%s1 + $0x224] sm:$0xf]
  %v175 = vld [vmem:[%s1 + $0x228] sm:$0xf]
  %v176 = vld [vmem:[%s1 + $0x22c] sm:$0xf]
  %v177 = vld [vmem:[%s1 + $0x230] sm:$0xf]
  %v178 = vld [vmem:[%s1 + $0x234] sm:$0xf]
  %v179 = vld [vmem:[%s1 + $0x238] sm:$0xf]
  %v180 = vld [vmem:[%s1 + $0x23c] sm:$0xf]
  %v201 = vunpack.c.l.b16 %v17
  %v202 = vunpack.c.h.b16 %v17
  %v203 = vunpack.c.l.b16 %v18
  %v204 = vunpack.c.h.b16 %v18
  %v205 = vunpack.c.l.b16 %v19
  %v206 = vunpack.c.h.b16 %v19
  %v207 = vunpack.c.l.b16 %v20
  %v208 = vunpack.c.h.b16 %v20
  %v209 = vunpack.c.l.b16 %v21
  %v210 = vunpack.c.l.b16 %v22
  %v211 = vunpack.c.h.b16 %v22
  %v212 = vunpack.c.l.b16 %v23
  %v213 = vunpack.c.h.b16 %v23
  %v214 = vunpack.c.l.b16 %v24
  %v215 = vunpack.c.h.b16 %v24
  %v216 = vunpack.c.l.b16 %v25
  %v217 = vunpack.c.h.b16 %v25
  %v218 = vunpack.c.l.b16 %v26
  %v219 = vunpack.c.l.b16 %v27
  %v220 = vunpack.c.h.b16 %v27
  %v221 = vunpack.c.l.b16 %v28
  %v222 = vunpack.c.h.b16 %v28
  %v223 = vunpack.c.l.b16 %v29
  %v224 = vunpack.c.h.b16 %v29
  %v225 = vunpack.c.l.b16 %v30
  %v226 = vunpack.c.h.b16 %v30
  %v227 = vunpack.c.l.b16 %v31
  %v228 = vunpack.c.l.b16 %v32
  %v229 = vunpack.c.h.b16 %v32
  %v230 = vunpack.c.l.b16 %v33
  %v231 = vunpack.c.h.b16 %v33
  %v232 = vunpack.c.l.b16 %v34
  %v233 = vunpack.c.h.b16 %v34
  %v234 = vunpack.c.l.b16 %v35
  %v235 = vunpack.c.h.b16 %v35
  %v236 = vunpack.c.l.b16 %v36
  %v237 = vpack.c.b16 %v210, %v201
  %v238 = vpack.c.b16 %v211, %v202
  %v239 = vpack.c.b16 %v212, %v203
  %v240 = vpack.c.b16 %v213, %v204
  %v241 = vpack.c.b16 %v214, %v205
  %v242 = vpack.c.b16 %v215, %v206
  %v243 = vpack.c.b16 %v216, %v207
  %v244 = vpack.c.b16 %v217, %v208
  %v245 = vpack.c.b16 %v218, %v209
  %v246 = vpack.c.b16 %v228, %v219
  %v247 = vpack.c.b16 %v229, %v220
  %v248 = vpack.c.b16 %v230, %v221
  %v249 = vpack.c.b16 %v231, %v222
  %v250 = vpack.c.b16 %v232, %v223
  %v251 = vpack.c.b16 %v233, %v224
  %v252 = vpack.c.b16 %v234, %v225
  %v253 = vpack.c.b16 %v235, %v226
  %v254 = vpack.c.b16 %v236, %v227
  %v417 = vunpack.c.l.b16 %v37
  %v418 = vunpack.c.l.b16 %v38
  %v419 = vunpack.c.l.b16 %v39
  %v420 = vunpack.c.l.b16 %v40
  %v421 = vunpack.c.l.b16 %v41
  %v422 = vunpack.c.l.b16 %v42
  %v423 = vunpack.c.l.b16 %v43
  %v424 = vunpack.c.l.b16 %v44
  %v425 = vunpack.c.l.b16 %v45
  %v426 = vunpack.c.l.b16 %v46
  %v427 = vunpack.c.l.b16 %v47
  %v428 = vunpack.c.l.b16 %v48
  %v429 = vunpack.c.l.b16 %v49
  %v430 = vunpack.c.l.b16 %v50
  %v431 = vunpack.c.l.b16 %v51
  %v432 = vunpack.c.l.b16 %v52
  %v433 = vunpack.c.l.b16 %v53
  %v434 = vunpack.c.l.b16 %v54
  %v435 = vunpack.c.l.b16 %v55
  %v436 = vunpack.c.l.b16 %v56
  %v437 = vunpack.c.l.b16 %v57
  %v438 = vunpack.c.l.b16 %v58
  %v439 = vunpack.c.l.b16 %v59
  %v440 = vunpack.c.l.b16 %v60
  %v441 = vunpack.c.l.b16 %v61
  %v442 = vunpack.c.l.b16 %v62
  %v443 = vunpack.c.l.b16 %v63
  %v444 = vunpack.c.l.b16 %v64
  %v445 = vunpack.c.l.b16 %v65
  %v446 = vunpack.c.l.b16 %v66
  %v447 = vunpack.c.l.b16 %v67
  %v448 = vunpack.c.l.b16 %v68
  %v449 = vunpack.c.l.b16 %v69
  %v450 = vunpack.c.l.b16 %v70
  %v451 = vunpack.c.l.b16 %v71
  %v452 = vunpack.c.l.b16 %v72
  %v453 = vunpack.c.l.b16 %v73
  %v454 = vunpack.c.l.b16 %v74
  %v455 = vunpack.c.l.b16 %v75
  %v456 = vunpack.c.l.b16 %v76
  %v457 = vunpack.c.l.b16 %v77
  %v458 = vunpack.c.l.b16 %v78
  %v459 = vunpack.c.l.b16 %v79
  %v460 = vunpack.c.l.b16 %v80
  %v461 = vunpack.c.l.b16 %v81
  %v462 = vunpack.c.l.b16 %v82
  %v463 = vunpack.c.l.b16 %v83
  %v464 = vunpack.c.l.b16 %v84
  %v465 = vunpack.c.l.b16 %v85
  %v466 = vunpack.c.l.b16 %v86
  %v467 = vunpack.c.l.b16 %v87
  %v468 = vunpack.c.l.b16 %v88
  %v469 = vunpack.c.l.b16 %v89
  %v470 = vunpack.c.l.b16 %v90
  %v471 = vunpack.c.l.b16 %v91
  %v472 = vunpack.c.l.b16 %v92
  %v473 = vunpack.c.l.b16 %v93
  %v474 = vunpack.c.l.b16 %v94
  %v475 = vunpack.c.l.b16 %v95
  %v476 = vunpack.c.l.b16 %v96
  %v477 = vunpack.c.l.b16 %v97
  %v478 = vunpack.c.l.b16 %v98
  %v479 = vunpack.c.l.b16 %v99
  %v480 = vunpack.c.l.b16 %v100
  %v481 = vunpack.c.l.b16 %v101
  %v482 = vunpack.c.l.b16 %v102
  %v483 = vunpack.c.l.b16 %v103
  %v484 = vunpack.c.l.b16 %v104
  %v485 = vunpack.c.l.b16 %v105
  %v486 = vunpack.c.l.b16 %v106
  %v487 = vunpack.c.l.b16 %v107
  %v488 = vunpack.c.l.b16 %v108
  %v489 = vunpack.c.l.b16 %v109
  %v490 = vunpack.c.l.b16 %v110
  %v491 = vunpack.c.l.b16 %v111
  %v492 = vunpack.c.l.b16 %v112
  %v493 = vunpack.c.l.b16 %v113
  %v494 = vunpack.c.l.b16 %v114
  %v495 = vunpack.c.l.b16 %v115
  %v496 = vunpack.c.l.b16 %v116
  %v497 = vunpack.c.l.b16 %v117
  %v498 = vunpack.c.l.b16 %v118
  %v499 = vunpack.c.l.b16 %v119
  %v500 = vunpack.c.l.b16 %v120
  %v501 = vunpack.c.l.b16 %v121
  %v502 = vunpack.c.l.b16 %v122
  %v503 = vunpack.c.l.b16 %v123
  %v504 = vunpack.c.l.b16 %v124
  %v505 = vunpack.c.l.b16 %v125
  %v506 = vunpack.c.l.b16 %v126
  %v507 = vunpack.c.l.b16 %v127
  %v508 = vunpack.c.l.b16 %v128
  %v509 = vunpack.c.l.b16 %v129
  %v510 = vunpack.c.l.b16 %v130
  %v511 = vunpack.c.l.b16 %v131
  %v512 = vunpack.c.l.b16 %v132
  %v513 = vunpack.c.l.b16 %v133
  %v514 = vunpack.c.l.b16 %v134
  %v515 = vunpack.c.l.b16 %v135
  %v516 = vunpack.c.l.b16 %v136
  %v517 = vunpack.c.l.b16 %v137
  %v518 = vunpack.c.l.b16 %v138
  %v519 = vunpack.c.l.b16 %v139
  %v520 = vunpack.c.l.b16 %v140
  %v521 = vunpack.c.l.b16 %v141
  %v522 = vunpack.c.l.b16 %v142
  %v523 = vunpack.c.l.b16 %v143
  %v524 = vunpack.c.l.b16 %v144
  %v525 = vunpack.c.l.b16 %v145
  %v526 = vunpack.c.l.b16 %v146
  %v527 = vunpack.c.l.b16 %v147
  %v528 = vunpack.c.l.b16 %v148
  %v529 = vunpack.c.l.b16 %v149
  %v530 = vunpack.c.l.b16 %v150
  %v531 = vunpack.c.l.b16 %v151
  %v532 = vunpack.c.l.b16 %v152
  %v533 = vunpack.c.l.b16 %v153
  %v534 = vunpack.c.l.b16 %v154
  %v535 = vunpack.c.l.b16 %v155
  %v536 = vunpack.c.l.b16 %v156
  %v537 = vunpack.c.l.b16 %v157
  %v538 = vunpack.c.l.b16 %v158
  %v539 = vunpack.c.l.b16 %v159
  %v540 = vunpack.c.l.b16 %v160
  %v541 = vunpack.c.l.b16 %v161
  %v542 = vunpack.c.l.b16 %v162
  %v543 = vunpack.c.l.b16 %v163
  %v544 = vunpack.c.l.b16 %v164
  %v545 = vunpack.c.l.b16 %v165
  %v546 = vunpack.c.l.b16 %v166
  %v547 = vunpack.c.l.b16 %v167
  %v548 = vunpack.c.l.b16 %v168
  %v549 = vunpack.c.l.b16 %v169
  %v550 = vunpack.c.l.b16 %v170
  %v551 = vunpack.c.l.b16 %v171
  %v552 = vunpack.c.l.b16 %v172
  %v553 = vunpack.c.l.b16 %v173
  %v554 = vunpack.c.l.b16 %v174
  %v555 = vunpack.c.l.b16 %v175
  %v556 = vunpack.c.l.b16 %v176
  %v557 = vunpack.c.l.b16 %v177
  %v558 = vunpack.c.l.b16 %v178
  %v559 = vunpack.c.l.b16 %v179
  %v560 = vunpack.c.l.b16 %v180
  %v561 = vpack.c.b16 %v418, %v417
  %v562 = vpack.c.b16 %v420, %v419
  %v563 = vpack.c.b16 %v422, %v421
  %v564 = vpack.c.b16 %v424, %v423
  %v565 = vpack.c.b16 %v426, %v425
  %v566 = vpack.c.b16 %v428, %v427
  %v567 = vpack.c.b16 %v430, %v429
  %v568 = vpack.c.b16 %v432, %v431
  %v569 = vpack.c.b16 %v434, %v433
  %v570 = vpack.c.b16 %v436, %v435
  %v571 = vpack.c.b16 %v438, %v437
  %v572 = vpack.c.b16 %v440, %v439
  %v573 = vpack.c.b16 %v442, %v441
  %v574 = vpack.c.b16 %v444, %v443
  %v575 = vpack.c.b16 %v446, %v445
  %v576 = vpack.c.b16 %v448, %v447
  %v577 = vpack.c.b16 %v450, %v449
  %v578 = vpack.c.b16 %v452, %v451
  %v579 = vpack.c.b16 %v454, %v453
  %v580 = vpack.c.b16 %v456, %v455
  %v581 = vpack.c.b16 %v458, %v457
  %v582 = vpack.c.b16 %v460, %v459
  %v583 = vpack.c.b16 %v462, %v461
  %v584 = vpack.c.b16 %v464, %v463
  %v585 = vpack.c.b16 %v466, %v465
  %v586 = vpack.c.b16 %v468, %v467
  %v587 = vpack.c.b16 %v470, %v469
  %v588 = vpack.c.b16 %v472, %v471
  %v589 = vpack.c.b16 %v474, %v473
  %v590 = vpack.c.b16 %v476, %v475
  %v591 = vpack.c.b16 %v478, %v477
  %v592 = vpack.c.b16 %v480, %v479
  %v593 = vpack.c.b16 %v482, %v481
  %v594 = vpack.c.b16 %v484, %v483
  %v595 = vpack.c.b16 %v486, %v485
  %v596 = vpack.c.b16 %v488, %v487
  %v597 = vpack.c.b16 %v490, %v489
  %v598 = vpack.c.b16 %v492, %v491
  %v599 = vpack.c.b16 %v494, %v493
  %v600 = vpack.c.b16 %v496, %v495
  %v601 = vpack.c.b16 %v498, %v497
  %v602 = vpack.c.b16 %v500, %v499
  %v603 = vpack.c.b16 %v502, %v501
  %v604 = vpack.c.b16 %v504, %v503
  %v605 = vpack.c.b16 %v506, %v505
  %v606 = vpack.c.b16 %v508, %v507
  %v607 = vpack.c.b16 %v510, %v509
  %v608 = vpack.c.b16 %v512, %v511
  %v609 = vpack.c.b16 %v514, %v513
  %v610 = vpack.c.b16 %v516, %v515
  %v611 = vpack.c.b16 %v518, %v517
  %v612 = vpack.c.b16 %v520, %v519
  %v613 = vpack.c.b16 %v522, %v521
  %v614 = vpack.c.b16 %v524, %v523
  %v615 = vpack.c.b16 %v526, %v525
  %v616 = vpack.c.b16 %v528, %v527
  %v617 = vpack.c.b16 %v530, %v529
  %v618 = vpack.c.b16 %v532, %v531
  %v619 = vpack.c.b16 %v534, %v533
  %v620 = vpack.c.b16 %v536, %v535
  %v621 = vpack.c.b16 %v538, %v537
  %v622 = vpack.c.b16 %v540, %v539
  %v623 = vpack.c.b16 %v542, %v541
  %v624 = vpack.c.b16 %v544, %v543
  %v625 = vpack.c.b16 %v546, %v545
  %v626 = vpack.c.b16 %v548, %v547
  %v627 = vpack.c.b16 %v550, %v549
  %v628 = vpack.c.b16 %v552, %v551
  %v629 = vpack.c.b16 %v554, %v553
  %v630 = vpack.c.b16 %v556, %v555
  %v631 = vpack.c.b16 %v558, %v557
  %v632 = vpack.c.b16 %v560, %v559
  %705 = vmatpush.bf16.msra.mxu0 %v568
  %706 = vmatpush.bf16.msra.mxu0 %v567
  %707 = vmatpush.bf16.msra.mxu0 %v566
  %708 = vmatpush.bf16.msra.mxu0 %v565
  %709 = vmatpush.bf16.msra.mxu0 %v564
  %710 = vmatpush.bf16.msra.mxu0 %v563
  %711 = vmatpush.bf16.msra.mxu0 %v562
  %712 = vmatpush.bf16.msra.mxu0 %v561
  %713 = vmatmul.bf16.gmra.mxu0 %v237
  %v714 = vpop.f32.mrf.mxu0
  %v715 = vadd.f32 0.0, %v714
  %v716 = vpop.f32.mrf.mxu0
  %v717 = vadd.f32 0.0, %v716
  %718 = vmatmul.bf16.gmra.mxu0 %v246
  %v719 = vpop.f32.mrf.mxu0
  %v720 = vadd.f32 0.0, %v719
  %v721 = vpop.f32.mrf.mxu0
  %v722 = vadd.f32 0.0, %v721
  %723 = vdwg.mxu0
  %724 = vmatpush.bf16.msra.mxu0 %v576
  %725 = vmatpush.bf16.msra.mxu0 %v575
  %726 = vmatpush.bf16.msra.mxu0 %v574
  %727 = vmatpush.bf16.msra.mxu0 %v573
  %728 = vmatpush.bf16.msra.mxu0 %v572
  %729 = vmatpush.bf16.msra.mxu0 %v571
  %730 = vmatpush.bf16.msra.mxu0 %v570
  %731 = vmatpush.bf16.msra.mxu0 %v569
  %732 = vmatmul.bf16.gmra.mxu0 %v238
  %v733 = vpop.f32.mrf.mxu0
  %v734 = vadd.f32 %v715, %v733
  %v735 = vpop.f32.mrf.mxu0
  %v736 = vadd.f32 %v717, %v735
  %737 = vmatmul.bf16.gmra.mxu0 %v247
  %v738 = vpop.f32.mrf.mxu0
  %v739 = vadd.f32 %v720, %v738
  %v740 = vpop.f32.mrf.mxu0
  %v741 = vadd.f32 %v722, %v740
  %742 = vdwg.mxu0
  %743 = vmatpush.bf16.msra.mxu0 %v584
  %744 = vmatpush.bf16.msra.mxu0 %v583
  %745 = vmatpush.bf16.msra.mxu0 %v582
  %746 = vmatpush.bf16.msra.mxu0 %v581
  %747 = vmatpush.bf16.msra.mxu0 %v580
  %748 = vmatpush.bf16.msra.mxu0 %v579
  %749 = vmatpush.bf16.msra.mxu0 %v578
  %750 = vmatpush.bf16.msra.mxu0 %v577
  %751 = vmatmul.bf16.gmra.mxu0 %v239
  %v752 = vpop.f32.mrf.mxu0
  %v753 = vadd.f32 %v734, %v752
  %v754 = vpop.f32.mrf.mxu0
  %v755 = vadd.f32 %v736, %v754
  %756 = vmatmul.bf16.gmra.mxu0 %v248
  %v757 = vpop.f32.mrf.mxu0
  %v758 = vadd.f32 %v739, %v757
  %v759 = vpop.f32.mrf.mxu0
  %v760 = vadd.f32 %v741, %v759
  %761 = vdwg.mxu0
  %762 = vmatpush.bf16.msra.mxu0 %v592
  %763 = vmatpush.bf16.msra.mxu0 %v591
  %764 = vmatpush.bf16.msra.mxu0 %v590
  %765 = vmatpush.bf16.msra.mxu0 %v589
  %766 = vmatpush.bf16.msra.mxu0 %v588
  %767 = vmatpush.bf16.msra.mxu0 %v587
  %768 = vmatpush.bf16.msra.mxu0 %v586
  %769 = vmatpush.bf16.msra.mxu0 %v585
  %770 = vmatmul.bf16.gmra.mxu0 %v240
  %v771 = vpop.f32.mrf.mxu0
  %v772 = vadd.f32 %v753, %v771
  %v773 = vpop.f32.mrf.mxu0
  %v774 = vadd.f32 %v755, %v773
  %775 = vmatmul.bf16.gmra.mxu0 %v249
  %v776 = vpop.f32.mrf.mxu0
  %v777 = vadd.f32 %v758, %v776
  %v778 = vpop.f32.mrf.mxu0
  %v779 = vadd.f32 %v760, %v778
  %780 = vdwg.mxu0
  %781 = vmatpush.bf16.msra.mxu0 %v600
  %782 = vmatpush.bf16.msra.mxu0 %v599
  %783 = vmatpush.bf16.msra.mxu0 %v598
  %784 = vmatpush.bf16.msra.mxu0 %v597
  %785 = vmatpush.bf16.msra.mxu0 %v596
  %786 = vmatpush.bf16.msra.mxu0 %v595
  %787 = vmatpush.bf16.msra.mxu0 %v594
  %788 = vmatpush.bf16.msra.mxu0 %v593
  %789 = vmatmul.bf16.gmra.mxu0 %v241
  %v790 = vpop.f32.mrf.mxu0
  %v791 = vadd.f32 %v772, %v790
  %v792 = vpop.f32.mrf.mxu0
  %v793 = vadd.f32 %v774, %v792
  %794 = vmatmul.bf16.gmra.mxu0 %v250
  %v795 = vpop.f32.mrf.mxu0
  %v796 = vadd.f32 %v777, %v795
  %v797 = vpop.f32.mrf.mxu0
  %v798 = vadd.f32 %v779, %v797
  %799 = vdwg.mxu0
  %800 = vmatpush.bf16.msra.mxu0 %v608
  %801 = vmatpush.bf16.msra.mxu0 %v607
  %802 = vmatpush.bf16.msra.mxu0 %v606
  %803 = vmatpush.bf16.msra.mxu0 %v605
  %804 = vmatpush.bf16.msra.mxu0 %v604
  %805 = vmatpush.bf16.msra.mxu0 %v603
  %806 = vmatpush.bf16.msra.mxu0 %v602
  %807 = vmatpush.bf16.msra.mxu0 %v601
  %808 = vmatmul.bf16.gmra.mxu0 %v242
  %v809 = vpop.f32.mrf.mxu0
  %v810 = vadd.f32 %v791, %v809
  %v811 = vpop.f32.mrf.mxu0
  %v812 = vadd.f32 %v793, %v811
  %813 = vmatmul.bf16.gmra.mxu0 %v251
  %v814 = vpop.f32.mrf.mxu0
  %v815 = vadd.f32 %v796, %v814
  %v816 = vpop.f32.mrf.mxu0
  %v817 = vadd.f32 %v798, %v816
  %818 = vdwg.mxu0
  %819 = vmatpush.bf16.msra.mxu0 %v616
  %820 = vmatpush.bf16.msra.mxu0 %v615
  %821 = vmatpush.bf16.msra.mxu0 %v614
  %822 = vmatpush.bf16.msra.mxu0 %v613
  %823 = vmatpush.bf16.msra.mxu0 %v612
  %824 = vmatpush.bf16.msra.mxu0 %v611
  %825 = vmatpush.bf16.msra.mxu0 %v610
  %826 = vmatpush.bf16.msra.mxu0 %v609
  %827 = vmatmul.bf16.gmra.mxu0 %v243
  %v828 = vpop.f32.mrf.mxu0
  %v829 = vadd.f32 %v810, %v828
  %v830 = vpop.f32.mrf.mxu0
  %v831 = vadd.f32 %v812, %v830
  %832 = vmatmul.bf16.gmra.mxu0 %v252
  %v833 = vpop.f32.mrf.mxu0
  %v834 = vadd.f32 %v815, %v833
  %v835 = vpop.f32.mrf.mxu0
  %v836 = vadd.f32 %v817, %v835
  %837 = vdwg.mxu0
  %838 = vmatpush.bf16.msra.mxu0 %v624
  %839 = vmatpush.bf16.msra.mxu0 %v623
  %840 = vmatpush.bf16.msra.mxu0 %v622
  %841 = vmatpush.bf16.msra.mxu0 %v621
  %842 = vmatpush.bf16.msra.mxu0 %v620
  %843 = vmatpush.bf16.msra.mxu0 %v619
  %844 = vmatpush.bf16.msra.mxu0 %v618
  %845 = vmatpush.bf16.msra.mxu0 %v617
  %846 = vmatmul.bf16.gmra.mxu0 %v244
  %v847 = vpop.f32.mrf.mxu0
  %v848 = vadd.f32 %v829, %v847
  %v849 = vpop.f32.mrf.mxu0
  %v850 = vadd.f32 %v831, %v849
  %851 = vmatmul.bf16.gmra.mxu0 %v253
  %v852 = vpop.f32.mrf.mxu0
  %v853 = vadd.f32 %v834, %v852
  %v854 = vpop.f32.mrf.mxu0
  %v855 = vadd.f32 %v836, %v854
  %856 = vdwg.mxu0
  %857 = vmatpush.bf16.msra.mxu0 %v632
  %858 = vmatpush.bf16.msra.mxu0 %v631
  %859 = vmatpush.bf16.msra.mxu0 %v630
  %860 = vmatpush.bf16.msra.mxu0 %v629
  %861 = vmatpush.bf16.msra.mxu0 %v628
  %862 = vmatpush.bf16.msra.mxu0 %v627
  %863 = vmatpush.bf16.msra.mxu0 %v626
  %864 = vmatpush.bf16.msra.mxu0 %v625
  %865 = vmatmul.bf16.gmra.mxu0 %v245
  %v866 = vpop.f32.mrf.mxu0
  %v867 = vadd.f32 %v848, %v866
  %v868 = vpop.f32.mrf.mxu0
  %v869 = vadd.f32 %v850, %v868
  %870 = vmatmul.bf16.gmra.mxu0 %v254
  %v871 = vpop.f32.mrf.mxu0
  %v872 = vadd.f32 %v853, %v871
  %v873 = vpop.f32.mrf.mxu0
  %v874 = vadd.f32 %v855, %v873
  %875 = vdwg.mxu0
  %v876 = vadd.f32 %v867, %v869
  %v877 = vadd.f32 %v876, %v872
  %v878 = vadd.f32 %v877, %v874
  %v879 = vrot.slane %v878, 4
  %v880 = vadd.f32 %v878, %v879
  %v881 = vrot.slane %v880, 2
  %v882 = vadd.f32 %v880, %v881
  %v883 = vrot.slane %v882, 1
  %v884 = vadd.f32 %v882, %v883
  %v885 = vmul.f32 %v884, 0.03125
  %v886 = vmul.f32 %v867, %v867
  %v887 = vmul.f32 %v869, %v869
  %v888 = vmul.f32 %v872, %v872
  %v889 = vmul.f32 %v874, %v874
  %v890 = vadd.f32 %v886, %v887
  %v891 = vadd.f32 %v890, %v888
  %v892 = vadd.f32 %v891, %v889
  %v893 = vrot.slane %v892, 4
  %v894 = vadd.f32 %v892, %v893
  %v895 = vrot.slane %v894, 2
  %v896 = vadd.f32 %v894, %v895
  %v897 = vrot.slane %v896, 1
  %v898 = vadd.f32 %v896, %v897
  %v899 = vmul.f32 %v898, 0.03125
  %v900 = vmul.f32 %v885, %v885
  %v901 = vsub.f32 %v899, %v900
  %v902 = vmax.f32 %v901, 0.0
  %v903 = vld [vmem:[%s2] sm:$0x1]
  %v904 = vadd.f32 %v902, 1e-05
  %v905 = vrsqrt.pop %v904
  %v906 = vmul.f32 %v905, %v904
  %v907 = vmul.f32 %v906, %v905
  %v908 = vmul.f32 0.5, %v907
  %v909 = vsub.f32 1.5, %v908
  %v910 = vmul.f32 %v905, %v909
  %vm911 = vweird.f32 %v904
  %vm912 = vweird.f32 %v905
  %vm913 = vmor %vm911, %vm912
  %v914 = vsel %vm913, %v905, %v910
  %v915 = vmul.f32 %v903, %v914
  %v916 = vld [vmem:[%s3] sm:$0x1]
  %v917 = vmul.f32 %v885, %v915
  %v918 = vsub.f32 %v916, %v917
  %v920 = vperm.slane %v915, 0
  %v922 = vmul.f32 %v867, %v920
  %v923 = vmul.f32 %v869, %v920
  %v924 = vmul.f32 %v872, %v920
  %v925 = vmul.f32 %v874, %v920
  %v927 = vperm.slane %v918, 0
  %v929 = vadd.f32 %v922, %v927
  %v930 = vadd.f32 %v923, %v927
  %v931 = vadd.f32 %v924, %v927
  %v932 = vadd.f32 %v925, %v927
  %v933 = vmax.f32 %v929, 0.0
  %v934 = vmax.f32 %v930, 0.0
  %v935 = vmax.f32 %v931, 0.0
  %v936 = vmax.f32 %v932, 0.0
  %v937 = vpack.c.bf16 %v933, %v933
  %v938 = vpack.c.bf16 %v934, %v934
  %v939 = vpack.c.bf16 %v935, %v935
  %v940 = vpack.c.bf16 %v936, %v936
  %941 = vst [vmem:[%s4] sm:$0xf] %v937
  %942 = vst [vmem:[%s4 + $0x4] sm:$0xf] %v938
  %943 = vst [vmem:[%s4 + $0x8] sm:$0xf] %v939
  %944 = vst [vmem:[%s4 + $0xc] sm:$0xf] %v940
  // Predicated region
  $region18: #{resnet_forward.9} parent=0 // pred_check
    _
  $region19: #{resnet_forward.9} parent=0 // pred_check_branch
    %946 = sbr.rel (0) target = $region21
  $region20: #{resnet_forward.9} parent=0 // pred_region
    _
  $region21: #{resnet_forward.9} parent=0 // pred_fallthru
    _
  // Predicated region
  $region22: #{resnet_forward.9} parent=0 // pred_check
    _
  $region23: #{resnet_forward.9} parent=0 // pred_check_branch
    %948 = sbr.rel (0) target = $region25
  $region24: #{resnet_forward.9} parent=0 // pred_region
    _
  $region25: #{resnet_forward.9} parent=0 // pred_fallthru
    _

// kernel: resnet_forward.10
$region0: #{resnet_forward.10}
  #allocation0 [shape = 'u32[]', space=smem, size = 0x4, offset = 0x4, fixed_abs, tag = 'smem constant byte address 0x4 - core index']
  #allocation1 [shape = 'u32[72,128]{1,0:T(1,128)}', space=vmem, size = 0x9000, scoped, tag = 'internal scratch']
  %s0 = inlined_call_operand.vmem [shape: bf16[32,1152], index: 0, kind: input, shape index: {}]
  %s1 = inlined_call_operand.vmem [shape: bf16[1152,128], index: 1, kind: input, shape index: {}]
  %s2 = inlined_call_operand.vmem [shape: f32[1,128], index: 2, kind: input, shape index: {}]
  %s3 = inlined_call_operand.vmem [shape: f32[1,128], index: 3, kind: input, shape index: {}]
  %s4 = inlined_call_operand.vmem [shape: bf16[32,128], index: 4, kind: input, shape index: {}]
  %s5 = inlined_call_operand.vmem [shape: bf16[32,128], index: 5, kind: output, shape index: {}]
  %s6 = sld [smem:[#allocation0]]
  $region30: #{resnet_forward.10} parent=0
    _
  %s8 = ssub.s32 1, %s6
  %s9 = scalar_select 0, %s8, %s6
  // Predicated region
  $region2: #{resnet_forward.10} parent=0 // pred_check
    _
  $region3: #{resnet_forward.10} parent=0 // pred_check_branch
    %11 = sbr.rel (0) target = $region5
  $region4: #{resnet_forward.10} parent=0 // pred_region
    _
  $region5: #{resnet_forward.10} parent=0 // pred_fallthru
    _
  // Predicated region
  $region6: #{resnet_forward.10} parent=0 // pred_check
    _
  $region7: #{resnet_forward.10} parent=0 // pred_check_branch
    %13 = sbr.rel (0) target = $region9
  $region8: #{resnet_forward.10} parent=0 // pred_region
    _
  $region9: #{resnet_forward.10} parent=0 // pred_fallthru
    _
  // Predicated region
  $region10: #{resnet_forward.10} parent=0 // pred_check
    _
  $region11: #{resnet_forward.10} parent=0 // pred_check_branch
    %15 = sbr.rel (0) target = $region13
  $region12: #{resnet_forward.10} parent=0 // pred_region
    _
  $region13: #{resnet_forward.10} parent=0 // pred_fallthru
    _
  // Predicated region
  $region14: #{resnet_forward.10} parent=0 // pred_check
    _
  $region15: #{resnet_forward.10} parent=0 // pred_check_branch
    %17 = sbr.rel (0) target = $region17
  $region16: #{resnet_forward.10} parent=0 // pred_region
    _
  $region17: #{resnet_forward.10} parent=0 // pred_fallthru
    _
  // Predicated region
  $region18: #{resnet_forward.10} parent=0 // pred_check
    _
  $region19: #{resnet_forward.10} parent=0 // pred_check_branch
    %19 = sbr.rel (0) target = $region21
  $region20: #{resnet_forward.10} parent=0 // pred_region
    _
  $region21: #{resnet_forward.10} parent=0 // pred_fallthru
    _
  %v20 = vld [vmem:[%s0] sm:$0xff]
  %v21 = vld [vmem:[%s0 + $0x8] sm:$0xff]
  %v22 = vld [vmem:[%s0 + $0x10] sm:$0xff]
  %v23 = vld [vmem:[%s0 + $0x18] sm:$0xff]
  %v24 = vld [vmem:[%s0 + $0x20] sm:$0xf]
  %v25 = vld [vmem:[%s0 + $0x24] sm:$0xff]
  %v26 = vld [vmem:[%s0 + $0x2c] sm:$0xff]
  %v27 = vld [vmem:[%s0 + $0x34] sm:$0xff]
  %v28 = vld [vmem:[%s0 + $0x3c] sm:$0xff]
  %v29 = vld [vmem:[%s0 + $0x44] sm:$0xf]
  %v30 = vld [vmem:[%s0 + $0x48] sm:$0xff]
  %v31 = vld [vmem:[%s0 + $0x50] sm:$0xff]
  %v32 = vld [vmem:[%s0 + $0x58] sm:$0xff]
  %v33 = vld [vmem:[%s0 + $0x60] sm:$0xff]
  %v34 = vld [vmem:[%s0 + $0x68] sm:$0xf]
  %v35 = vld [vmem:[%s0 + $0x6c] sm:$0xff]
  %v36 = vld [vmem:[%s0 + $0x74] sm:$0xff]
  %v37 = vld [vmem:[%s0 + $0x7c] sm:$0xff]
  %v38 = vld [vmem:[%s0 + $0x84] sm:$0xff]
  %v39 = vld [vmem:[%s0 + $0x8c] sm:$0xf]
  %v40 = vld [vmem:[%s1] sm:$0xf]
  %v41 = vld [vmem:[%s1 + $0x4] sm:$0xf]
  %v42 = vld [vmem:[%s1 + $0x8] sm:$0xf]
  %v43 = vld [vmem:[%s1 + $0xc] sm:$0xf]
  %v44 = vld [vmem:[%s1 + $0x10] sm:$0xf]
  %v45 = vld [vmem:[%s1 + $0x14] sm:$0xf]
  %v46 = vld [vmem:[%s1 + $0x18] sm:$0xf]
  %v47 = vld [vmem:[%s1 + $0x1c] sm:$0xf]
  %v48 = vld [vmem:[%s1 + $0x20] sm:$0xf]
  %v49 = vld [vmem:[%s1 + $0x24] sm:$0xf]
  %v50 = vld [vmem:[%s1 + $0x28] sm:$0xf]
  %v51 = vld [vmem:[%s1 + $0x2c] sm:$0xf]
  %v52 = vld [vmem:[%s1 + $0x30] sm:$0xf]
  %v53 = vld [vmem:[%s1 + $0x34] sm:$0xf]
  %v54 = vld [vmem:[%s1 + $0x38] sm:$0xf]
  %v55 = vld [vmem:[%s1 + $0x3c] sm:$0xf]
  %v56 = vld [vmem:[%s1 + $0x40] sm:$0xf]
  %v57 = vld [vmem:[%s1 + $0x44] sm:$0xf]
  %v58 = vld [vmem:[%s1 + $0x48] sm:$0xf]
  %v59 = vld [vmem:[%s1 + $0x4c] sm:$0xf]
  %v60 = vld [vmem:[%s1 + $0x50] sm:$0xf]
  %v61 = vld [vmem:[%s1 + $0x54] sm:$0xf]
  %v62 = vld [vmem:[%s1 + $0x58] sm:$0xf]
  %v63 = vld [vmem:[%s1 + $0x5c] sm:$0xf]
  %v64 = vld [vmem:[%s1 + $0x60] sm:$0xf]
  %v65 = vld [vmem:[%s1 + $0x64] sm:$0xf]
  %v66 = vld [vmem:[%s1 + $0x68] sm:$0xf]
  %v67 = vld [vmem:[%s1 + $0x6c] sm:$0xf]
  %v68 = vld [vmem:[%s1 + $0x70] sm:$0xf]
  %v69 = vld [vmem:[%s1 + $0x74] sm:$0xf]
  %v70 = vld [vmem:[%s1 + $0x78] sm:$0xf]
  %v71 = vld [vmem:[%s1 + $0x7c] sm:$0xf]
  %v72 = vld [vmem:[%s1 + $0x80] sm:$0xf]
  %v73 = vld [vmem:[%s1 + $0x84] sm:$0xf]
  %v74 = vld [vmem:[%s1 + $0x88] sm:$0xf]
  %v75 = vld [vmem:[%s1 + $0x8c] sm:$0xf]
  %v76 = vld [vmem:[%s1 + $0x90] sm:$0xf]
  %v77 = vld [vmem:[%s1 + $0x94] sm:$0xf]
  %v78 = vld [vmem:[%s1 + $0x98] sm:$0xf]
  %v79 = vld [vmem:[%s1 + $0x9c] sm:$0xf]
  %v80 = vld [vmem:[%s1 + $0xa0] sm:$0xf]
  %v81 = vld [vmem:[%s1 + $0xa4] sm:$0xf]
  %v82 = vld [vmem:[%s1 + $0xa8] sm:$0xf]
  %v83 = vld [vmem:[%s1 + $0xac] sm:$0xf]
  %v84 = vld [vmem:[%s1 + $0xb0] sm:$0xf]
  %v85 = vld [vmem:[%s1 + $0xb4] sm:$0xf]
  %v86 = vld [vmem:[%s1 + $0xb8] sm:$0xf]
  %v87 = vld [vmem:[%s1 + $0xbc] sm:$0xf]
  %v88 = vld [vmem:[%s1 + $0xc0] sm:$0xf]
  %v89 = vld [vmem:[%s1 + $0xc4] sm:$0xf]
  %v90 = vld [vmem:[%s1 + $0xc8] sm:$0xf]
  %v91 = vld [vmem:[%s1 + $0xcc] sm:$0xf]
  %v92 = vld [vmem:[%s1 + $0xd0] sm:$0xf]
  %v93 = vld [vmem:[%s1 + $0xd4] sm:$0xf]
  %v94 = vld [vmem:[%s1 + $0xd8] sm:$0xf]
  %v95 = vld [vmem:[%s1 + $0xdc] sm:$0xf]
  %v96 = vld [vmem:[%s1 + $0xe0] sm:$0xf]
  %v97 = vld [vmem:[%s1 + $0xe4] sm:$0xf]
  %v98 = vld [vmem:[%s1 + $0xe8] sm:$0xf]
  %v99 = vld [vmem:[%s1 + $0xec] sm:$0xf]
  %v100 = vld [vmem:[%s1 + $0xf0] sm:$0xf]
  %v101 = vld [vmem:[%s1 + $0xf4] sm:$0xf]
  %v102 = vld [vmem:[%s1 + $0xf8] sm:$0xf]
  %v103 = vld [vmem:[%s1 + $0xfc] sm:$0xf]
  %v104 = vld [vmem:[%s1 + $0x100] sm:$0xf]
  %v105 = vld [vmem:[%s1 + $0x104] sm:$0xf]
  %v106 = vld [vmem:[%s1 + $0x108] sm:$0xf]
  %v107 = vld [vmem:[%s1 + $0x10c] sm:$0xf]
  %v108 = vld [vmem:[%s1 + $0x110] sm:$0xf]
  %v109 = vld [vmem:[%s1 + $0x114] sm:$0xf]
  %v110 = vld [vmem:[%s1 + $0x118] sm:$0xf]
  %v111 = vld [vmem:[%s1 + $0x11c] sm:$0xf]
  %v112 = vld [vmem:[%s1 + $0x120] sm:$0xf]
  %v113 = vld [vmem:[%s1 + $0x124] sm:$0xf]
  %v114 = vld [vmem:[%s1 + $0x128] sm:$0xf]
  %v115 = vld [vmem:[%s1 + $0x12c] sm:$0xf]
  %v116 = vld [vmem:[%s1 + $0x130] sm:$0xf]
  %v117 = vld [vmem:[%s1 + $0x134] sm:$0xf]
  %v118 = vld [vmem:[%s1 + $0x138] sm:$0xf]
  %v119 = vld [vmem:[%s1 + $0x13c] sm:$0xf]
  %v120 = vld [vmem:[%s1 + $0x140] sm:$0xf]
  %v121 = vld [vmem:[%s1 + $0x144] sm:$0xf]
  %v122 = vld [vmem:[%s1 + $0x148] sm:$0xf]
  %v123 = vld [vmem:[%s1 + $0x14c] sm:$0xf]
  %v124 = vld [vmem:[%s1 + $0x150] sm:$0xf]
  %v125 = vld [vmem:[%s1 + $0x154] sm:$0xf]
  %v126 = vld [vmem:[%s1 + $0x158] sm:$0xf]
  %v127 = vld [vmem:[%s1 + $0x15c] sm:$0xf]
  %v128 = vld [vmem:[%s1 + $0x160] sm:$0xf]
  %v129 = vld [vmem:[%s1 + $0x164] sm:$0xf]
  %v130 = vld [vmem:[%s1 + $0x168] sm:$0xf]
  %v131 = vld [vmem:[%s1 + $0x16c] sm:$0xf]
  %v132 = vld [vmem:[%s1 + $0x170] sm:$0xf]
  %v133 = vld [vmem:[%s1 + $0x174] sm:$0xf]
  %v134 = vld [vmem:[%s1 + $0x178] sm:$0xf]
  %v135 = vld [vmem:[%s1 + $0x17c] sm:$0xf]
  %v136 = vld [vmem:[%s1 + $0x180] sm:$0xf]
  %v137 = vld [vmem:[%s1 + $0x184] sm:$0xf]
  %v138 = vld [vmem:[%s1 + $0x188] sm:$0xf]
  %v139 = vld [vmem:[%s1 + $0x18c] sm:$0xf]
  %v140 = vld [vmem:[%s1 + $0x190] sm:$0xf]
  %v141 = vld [vmem:[%s1 + $0x194] sm:$0xf]
  %v142 = vld [vmem:[%s1 + $0x198] sm:$0xf]
  %v143 = vld [vmem:[%s1 + $0x19c] sm:$0xf]
  %v144 = vld [vmem:[%s1 + $0x1a0] sm:$0xf]
  %v145 = vld [vmem:[%s1 + $0x1a4] sm:$0xf]
  %v146 = vld [vmem:[%s1 + $0x1a8] sm:$0xf]
  %v147 = vld [vmem:[%s1 + $0x1ac] sm:$0xf]
  %v148 = vld [vmem:[%s1 + $0x1b0] sm:$0xf]
  %v149 = vld [vmem:[%s1 + $0x1b4] sm:$0xf]
  %v150 = vld [vmem:[%s1 + $0x1b8] sm:$0xf]
  %v151 = vld [vmem:[%s1 + $0x1bc] sm:$0xf]
  %v152 = vld [vmem:[%s1 + $0x1c0] sm:$0xf]
  %v153 = vld [vmem:[%s1 + $0x1c4] sm:$0xf]
  %v154 = vld [vmem:[%s1 + $0x1c8] sm:$0xf]
  %v155 = vld [vmem:[%s1 + $0x1cc] sm:$0xf]
  %v156 = vld [vmem:[%s1 + $0x1d0] sm:$0xf]
  %v157 = vld [vmem:[%s1 + $0x1d4] sm:$0xf]
  %v158 = vld [vmem:[%s1 + $0x1d8] sm:$0xf]
  %v159 = vld [vmem:[%s1 + $0x1dc] sm:$0xf]
  %v160 = vld [vmem:[%s1 + $0x1e0] sm:$0xf]
  %v161 = vld [vmem:[%s1 + $0x1e4] sm:$0xf]
  %v162 = vld [vmem:[%s1 + $0x1e8] sm:$0xf]
  %v163 = vld [vmem:[%s1 + $0x1ec] sm:$0xf]
  %v164 = vld [vmem:[%s1 + $0x1f0] sm:$0xf]
  %v165 = vld [vmem:[%s1 + $0x1f4] sm:$0xf]
  %v166 = vld [vmem:[%s1 + $0x1f8] sm:$0xf]
  %v167 = vld [vmem:[%s1 + $0x1fc] sm:$0xf]
  %v168 = vld [vmem:[%s1 + $0x200] sm:$0xf]
  %v169 = vld [vmem:[%s1 + $0x204] sm:$0xf]
  %v170 = vld [vmem:[%s1 + $0x208] sm:$0xf]
  %v171 = vld [vmem:[%s1 + $0x20c] sm:$0xf]
  %v172 = vld [vmem:[%s1 + $0x210] sm:$0xf]
  %v173 = vld [vmem:[%s1 + $0x214] sm:$0xf]
  %v174 = vld [vmem:[%s1 + $0x218] sm:$0xf]
  %v175 = vld [vmem:[%s1 + $0x21c] sm:$0xf]
  %v176 = vld [vmem:[%s1 + $0x220] sm:$0xf]
  %v177 = vld [vmem:[%s1 + $0x224] sm:$0xf]
  %v178 = vld [vmem:[%s1 + $0x228] sm:$0xf]
  %v179 = vld [vmem:[%s1 + $0x22c] sm:$0xf]
  %v180 = vld [vmem:[%s1 + $0x230] sm:$0xf]
  %v181 = vld [vmem:[%s1 + $0x234] sm:$0xf]
  %v182 = vld [vmem:[%s1 + $0x238] sm:$0xf]
  %v183 = vld [vmem:[%s1 + $0x23c] sm:$0xf]
  %v204 = vunpack.c.l.b16 %v20
  %v205 = vunpack.c.h.b16 %v20
  %v206 = vunpack.c.l.b16 %v21
  %v207 = vunpack.c.h.b16 %v21
  %v208 = vunpack.c.l.b16 %v22
  %v209 = vunpack.c.h.b16 %v22
  %v210 = vunpack.c.l.b16 %v23
  %v211 = vunpack.c.h.b16 %v23
  %v212 = vunpack.c.l.b16 %v24
  %v213 = vunpack.c.l.b16 %v25
  %v214 = vunpack.c.h.b16 %v25
  %v215 = vunpack.c.l.b16 %v26
  %v216 = vunpack.c.h.b16 %v26
  %v217 = vunpack.c.l.b16 %v27
  %v218 = vunpack.c.h.b16 %v27
  %v219 = vunpack.c.l.b16 %v28
  %v220 = vunpack.c.h.b16 %v28
  %v221 = vunpack.c.l.b16 %v29
  %v222 = vunpack.c.l.b16 %v30
  %v223 = vunpack.c.h.b16 %v30
  %v224 = vunpack.c.l.b16 %v31
  %v225 = vunpack.c.h.b16 %v31
  %v226 = vunpack.c.l.b16 %v32
  %v227 = vunpack.c.h.b16 %v32
  %v228 = vunpack.c.l.b16 %v33
  %v229 = vunpack.c.h.b16 %v33
  %v230 = vunpack.c.l.b16 %v34
  %v231 = vunpack.c.l.b16 %v35
  %v232 = vunpack.c.h.b16 %v35
  %v233 = vunpack.c.l.b16 %v36
  %v234 = vunpack.c.h.b16 %v36
  %v235 = vunpack.c.l.b16 %v37
  %v236 = vunpack.c.h.b16 %v37
  %v237 = vunpack.c.l.b16 %v38
  %v238 = vunpack.c.h.b16 %v38
  %v239 = vunpack.c.l.b16 %v39
  %v240 = vpack.c.b16 %v213, %v204
  %v241 = vpack.c.b16 %v214, %v205
  %v242 = vpack.c.b16 %v215, %v206
  %v243 = vpack.c.b16 %v216, %v207
  %v244 = vpack.c.b16 %v217, %v208
  %v245 = vpack.c.b16 %v218, %v209
  %v246 = vpack.c.b16 %v219, %v210
  %v247 = vpack.c.b16 %v220, %v211
  %v248 = vpack.c.b16 %v221, %v212
  %v249 = vpack.c.b16 %v231, %v222
  %v250 = vpack.c.b16 %v232, %v223
  %v251 = vpack.c.b16 %v233, %v224
  %v252 = vpack.c.b16 %v234, %v225
  %v253 = vpack.c.b16 %v235, %v226
  %v254 = vpack.c.b16 %v236, %v227
  %v255 = vpack.c.b16 %v237, %v228
  %v256 = vpack.c.b16 %v238, %v229
  %v257 = vpack.c.b16 %v239, %v230
  %v420 = vunpack.c.l.b16 %v40
  %v421 = vunpack.c.l.b16 %v41
  %v422 = vunpack.c.l.b16 %v42
  %v423 = vunpack.c.l.b16 %v43
  %v424 = vunpack.c.l.b16 %v44
  %v425 = vunpack.c.l.b16 %v45
  %v426 = vunpack.c.l.b16 %v46
  %v427 = vunpack.c.l.b16 %v47
  %v428 = vunpack.c.l.b16 %v48
  %v429 = vunpack.c.l.b16 %v49
  %v430 = vunpack.c.l.b16 %v50
  %v431 = vunpack.c.l.b16 %v51
  %v432 = vunpack.c.l.b16 %v52
  %v433 = vunpack.c.l.b16 %v53
  %v434 = vunpack.c.l.b16 %v54
  %v435 = vunpack.c.l.b16 %v55
  %v436 = vunpack.c.l.b16 %v56
  %v437 = vunpack.c.l.b16 %v57
  %v438 = vunpack.c.l.b16 %v58
  %v439 = vunpack.c.l.b16 %v59
  %v440 = vunpack.c.l.b16 %v60
  %v441 = vunpack.c.l.b16 %v61
  %v442 = vunpack.c.l.b16 %v62
  %v443 = vunpack.c.l.b16 %v63
  %v444 = vunpack.c.l.b16 %v64
  %v445 = vunpack.c.l.b16 %v65
  %v446 = vunpack.c.l.b16 %v66
  %v447 = vunpack.c.l.b16 %v67
  %v448 = vunpack.c.l.b16 %v68
  %v449 = vunpack.c.l.b16 %v69
  %v450 = vunpack.c.l.b16 %v70
  %v451 = vunpack.c.l.b16 %v71
  %v452 = vunpack.c.l.b16 %v72
  %v453 = vunpack.c.l.b16 %v73
  %v454 = vunpack.c.l.b16 %v74
  %v455 = vunpack.c.l.b16 %v75
  %v456 = vunpack.c.l.b16 %v76
  %v457 = vunpack.c.l.b16 %v77
  %v458 = vunpack.c.l.b16 %v78
  %v459 = vunpack.c.l.b16 %v79
  %v460 = vunpack.c.l.b16 %v80
  %v461 = vunpack.c.l.b16 %v81
  %v462 = vunpack.c.l.b16 %v82
  %v463 = vunpack.c.l.b16 %v83
  %v464 = vunpack.c.l.b16 %v84
  %v465 = vunpack.c.l.b16 %v85
  %v466 = vunpack.c.l.b16 %v86
  %v467 = vunpack.c.l.b16 %v87
  %v468 = vunpack.c.l.b16 %v88
  %v469 = vunpack.c.l.b16 %v89
  %v470 = vunpack.c.l.b16 %v90
  %v471 = vunpack.c.l.b16 %v91
  %v472 = vunpack.c.l.b16 %v92
  %v473 = vunpack.c.l.b16 %v93
  %v474 = vunpack.c.l.b16 %v94
  %v475 = vunpack.c.l.b16 %v95
  %v476 = vunpack.c.l.b16 %v96
  %v477 = vunpack.c.l.b16 %v97
  %v478 = vunpack.c.l.b16 %v98
  %v479 = vunpack.c.l.b16 %v99
  %v480 = vunpack.c.l.b16 %v100
  %v481 = vunpack.c.l.b16 %v101
  %v482 = vunpack.c.l.b16 %v102
  %v483 = vunpack.c.l.b16 %v103
  %v484 = vunpack.c.l.b16 %v104
  %v485 = vunpack.c.l.b16 %v105
  %v486 = vunpack.c.l.b16 %v106
  %v487 = vunpack.c.l.b16 %v107
  %v488 = vunpack.c.l.b16 %v108
  %v489 = vunpack.c.l.b16 %v109
  %v490 = vunpack.c.l.b16 %v110
  %v491 = vunpack.c.l.b16 %v111
  %v492 = vunpack.c.l.b16 %v112
  %v493 = vunpack.c.l.b16 %v113
  %v494 = vunpack.c.l.b16 %v114
  %v495 = vunpack.c.l.b16 %v115
  %v496 = vunpack.c.l.b16 %v116
  %v497 = vunpack.c.l.b16 %v117
  %v498 = vunpack.c.l.b16 %v118
  %v499 = vunpack.c.l.b16 %v119
  %v500 = vunpack.c.l.b16 %v120
  %v501 = vunpack.c.l.b16 %v121
  %v502 = vunpack.c.l.b16 %v122
  %v503 = vunpack.c.l.b16 %v123
  %v504 = vunpack.c.l.b16 %v124
  %v505 = vunpack.c.l.b16 %v125
  %v506 = vunpack.c.l.b16 %v126
  %v507 = vunpack.c.l.b16 %v127
  %v508 = vunpack.c.l.b16 %v128
  %v509 = vunpack.c.l.b16 %v129
  %v510 = vunpack.c.l.b16 %v130
  %v511 = vunpack.c.l.b16 %v131
  %v512 = vunpack.c.l.b16 %v132
  %v513 = vunpack.c.l.b16 %v133
  %v514 = vunpack.c.l.b16 %v134
  %v515 = vunpack.c.l.b16 %v135
  %v516 = vunpack.c.l.b16 %v136
  %v517 = vunpack.c.l.b16 %v137
  %v518 = vunpack.c.l.b16 %v138
  %v519 = vunpack.c.l.b16 %v139
  %v520 = vunpack.c.l.b16 %v140
  %v521 = vunpack.c.l.b16 %v141
  %v522 = vunpack.c.l.b16 %v142
  %v523 = vunpack.c.l.b16 %v143
  %v524 = vunpack.c.l.b16 %v144
  %v525 = vunpack.c.l.b16 %v145
  %v526 = vunpack.c.l.b16 %v146
  %v527 = vunpack.c.l.b16 %v147
  %v528 = vunpack.c.l.b16 %v148
  %v529 = vunpack.c.l.b16 %v149
  %v530 = vunpack.c.l.b16 %v150
  %v531 = vunpack.c.l.b16 %v151
  %v532 = vunpack.c.l.b16 %v152
  %v533 = vunpack.c.l.b16 %v153
  %v534 = vunpack.c.l.b16 %v154
  %v535 = vunpack.c.l.b16 %v155
  %v536 = vunpack.c.l.b16 %v156
  %v537 = vunpack.c.l.b16 %v157
  %v538 = vunpack.c.l.b16 %v158
  %v539 = vunpack.c.l.b16 %v159
  %v540 = vunpack.c.l.b16 %v160
  %v541 = vunpack.c.l.b16 %v161
  %v542 = vunpack.c.l.b16 %v162
  %v543 = vunpack.c.l.b16 %v163
  %v544 = vunpack.c.l.b16 %v164
  %v545 = vunpack.c.l.b16 %v165
  %v546 = vunpack.c.l.b16 %v166
  %v547 = vunpack.c.l.b16 %v167
  %v548 = vunpack.c.l.b16 %v168
  %v549 = vunpack.c.l.b16 %v169
  %v550 = vunpack.c.l.b16 %v170
  %v551 = vunpack.c.l.b16 %v171
  %v552 = vunpack.c.l.b16 %v172
  %v553 = vunpack.c.l.b16 %v173
  %v554 = vunpack.c.l.b16 %v174
  %v555 = vunpack.c.l.b16 %v175
  %v556 = vunpack.c.l.b16 %v176
  %v557 = vunpack.c.l.b16 %v177
  %v558 = vunpack.c.l.b16 %v178
  %v559 = vunpack.c.l.b16 %v179
  %v560 = vunpack.c.l.b16 %v180
  %v561 = vunpack.c.l.b16 %v181
  %v562 = vunpack.c.l.b16 %v182
  %v563 = vunpack.c.l.b16 %v183
  %v564 = vpack.c.b16 %v421, %v420
  %v565 = vpack.c.b16 %v423, %v422
  %v566 = vpack.c.b16 %v425, %v424
  %v567 = vpack.c.b16 %v427, %v426
  %v568 = vpack.c.b16 %v429, %v428
  %v569 = vpack.c.b16 %v431, %v430
  %v570 = vpack.c.b16 %v433, %v432
  %v571 = vpack.c.b16 %v435, %v434
  %v572 = vpack.c.b16 %v437, %v436
  %v573 = vpack.c.b16 %v439, %v438
  %v574 = vpack.c.b16 %v441, %v440
  %v575 = vpack.c.b16 %v443, %v442
  %v576 = vpack.c.b16 %v445, %v444
  %v577 = vpack.c.b16 %v447, %v446
  %v578 = vpack.c.b16 %v449, %v448
  %v579 = vpack.c.b16 %v451, %v450
  %v580 = vpack.c.b16 %v453, %v452
  %v581 = vpack.c.b16 %v455, %v454
  %v582 = vpack.c.b16 %v457, %v456
  %v583 = vpack.c.b16 %v459, %v458
  %v584 = vpack.c.b16 %v461, %v460
  %v585 = vpack.c.b16 %v463, %v462
  %v586 = vpack.c.b16 %v465, %v464
  %v587 = vpack.c.b16 %v467, %v466
  %v588 = vpack.c.b16 %v469, %v468
  %v589 = vpack.c.b16 %v471, %v470
  %v590 = vpack.c.b16 %v473, %v472
  %v591 = vpack.c.b16 %v475, %v474
  %v592 = vpack.c.b16 %v477, %v476
  %v593 = vpack.c.b16 %v479, %v478
  %v594 = vpack.c.b16 %v481, %v480
  %v595 = vpack.c.b16 %v483, %v482
  %v596 = vpack.c.b16 %v485, %v484
  %v597 = vpack.c.b16 %v487, %v486
  %v598 = vpack.c.b16 %v489, %v488
  %v599 = vpack.c.b16 %v491, %v490
  %v600 = vpack.c.b16 %v493, %v492
  %v601 = vpack.c.b16 %v495, %v494
  %v602 = vpack.c.b16 %v497, %v496
  %v603 = vpack.c.b16 %v499, %v498
  %v604 = vpack.c.b16 %v501, %v500
  %v605 = vpack.c.b16 %v503, %v502
  %v606 = vpack.c.b16 %v505, %v504
  %v607 = vpack.c.b16 %v507, %v506
  %v608 = vpack.c.b16 %v509, %v508
  %v609 = vpack.c.b16 %v511, %v510
  %v610 = vpack.c.b16 %v513, %v512
  %v611 = vpack.c.b16 %v515, %v514
  %v612 = vpack.c.b16 %v517, %v516
  %v613 = vpack.c.b16 %v519, %v518
  %v614 = vpack.c.b16 %v521, %v520
  %v615 = vpack.c.b16 %v523, %v522
  %v616 = vpack.c.b16 %v525, %v524
  %v617 = vpack.c.b16 %v527, %v526
  %v618 = vpack.c.b16 %v529, %v528
  %v619 = vpack.c.b16 %v531, %v530
  %v620 = vpack.c.b16 %v533, %v532
  %v621 = vpack.c.b16 %v535, %v534
  %v622 = vpack.c.b16 %v537, %v536
  %v623 = vpack.c.b16 %v539, %v538
  %v624 = vpack.c.b16 %v541, %v540
  %v625 = vpack.c.b16 %v543, %v542
  %v626 = vpack.c.b16 %v545, %v544
  %v627 = vpack.c.b16 %v547, %v546
  %v628 = vpack.c.b16 %v549, %v548
  %v629 = vpack.c.b16 %v551, %v550
  %v630 = vpack.c.b16 %v553, %v552
  %v631 = vpack.c.b16 %v555, %v554
  %v632 = vpack.c.b16 %v557, %v556
  %v633 = vpack.c.b16 %v559, %v558
  %v634 = vpack.c.b16 %v561, %v560
  %v635 = vpack.c.b16 %v563, %v562
  %708 = vmatpush.bf16.msra.mxu0 %v571
  %709 = vmatpush.bf16.msra.mxu0 %v570
  %710 = vmatpush.bf16.msra.mxu0 %v569
  %711 = vmatpush.bf16.msra.mxu0 %v568
  %712 = vmatpush.bf16.msra.mxu0 %v567
  %713 = vmatpush.bf16.msra.mxu0 %v566
  %714 = vmatpush.bf16.msra.mxu0 %v565
  %715 = vmatpush.bf16.msra.mxu0 %v564
  %716 = vmatmul.bf16.gmra.mxu0 %v240
  %v717 = vpop.f32.mrf.mxu0
  %v718 = vadd.f32 0.0, %v717
  %v719 = vpop.f32.mrf.mxu0
  %v720 = vadd.f32 0.0, %v719
  %721 = vmatmul.bf16.gmra.mxu0 %v249
  %v722 = vpop.f32.mrf.mxu0
  %v723 = vadd.f32 0.0, %v722
  %v724 = vpop.f32.mrf.mxu0
  %v725 = vadd.f32 0.0, %v724
  %726 = vdwg.mxu0
  %727 = vmatpush.bf16.msra.mxu0 %v579
  %728 = vmatpush.bf16.msra.mxu0 %v578
  %729 = vmatpush.bf16.msra.mxu0 %v577
  %730 = vmatpush.bf16.msra.mxu0 %v576
  %731 = vmatpush.bf16.msra.mxu0 %v575
  %732 = vmatpush.bf16.msra.mxu0 %v574
  %733 = vmatpush.bf16.msra.mxu0 %v573
  %734 = vmatpush.bf16.msra.mxu0 %v572
  %735 = vmatmul.bf16.gmra.mxu0 %v241
  %v736 = vpop.f32.mrf.mxu0
  %v737 = vadd.f32 %v718, %v736
  %v738 = vpop.f32.mrf.mxu0
  %v739 = vadd.f32 %v720, %v738
  %740 = vmatmul.bf16.gmra.mxu0 %v250
  %v741 = vpop.f32.mrf.mxu0
  %v742 = vadd.f32 %v723, %v741
  %v743 = vpop.f32.mrf.mxu0
  %v744 = vadd.f32 %v725, %v743
  %745 = vdwg.mxu0
  %746 = vmatpush.bf16.msra.mxu0 %v587
  %747 = vmatpush.bf16.msra.mxu0 %v586
  %748 = vmatpush.bf16.msra.mxu0 %v585
  %749 = vmatpush.bf16.msra.mxu0 %v584
  %750 = vmatpush.bf16.msra.mxu0 %v583
  %751 = vmatpush.bf16.msra.mxu0 %v582
  %752 = vmatpush.bf16.msra.mxu0 %v581
  %753 = vmatpush.bf16.msra.mxu0 %v580
  %754 = vmatmul.bf16.gmra.mxu0 %v242
  %v755 = vpop.f32.mrf.mxu0
  %v756 = vadd.f32 %v737, %v755
  %v757 = vpop.f32.mrf.mxu0
  %v758 = vadd.f32 %v739, %v757
  %759 = vmatmul.bf16.gmra.mxu0 %v251
  %v760 = vpop.f32.mrf.mxu0
  %v761 = vadd.f32 %v742, %v760
  %v762 = vpop.f32.mrf.mxu0
  %v763 = vadd.f32 %v744, %v762
  %764 = vdwg.mxu0
  %765 = vmatpush.bf16.msra.mxu0 %v595
  %766 = vmatpush.bf16.msra.mxu0 %v594
  %767 = vmatpush.bf16.msra.mxu0 %v593
  %768 = vmatpush.bf16.msra.mxu0 %v592
  %769 = vmatpush.bf16.msra.mxu0 %v591
  %770 = vmatpush.bf16.msra.mxu0 %v590
  %771 = vmatpush.bf16.msra.mxu0 %v589
  %772 = vmatpush.bf16.msra.mxu0 %v588
  %773 = vmatmul.bf16.gmra.mxu0 %v243
  %v774 = vpop.f32.mrf.mxu0
  %v775 = vadd.f32 %v756, %v774
  %v776 = vpop.f32.mrf.mxu0
  %v777 = vadd.f32 %v758, %v776
  %778 = vmatmul.bf16.gmra.mxu0 %v252
  %v779 = vpop.f32.mrf.mxu0
  %v780 = vadd.f32 %v761, %v779
  %v781 = vpop.f32.mrf.mxu0
  %v782 = vadd.f32 %v763, %v781
  %783 = vdwg.mxu0
  %784 = vmatpush.bf16.msra.mxu0 %v603
  %785 = vmatpush.bf16.msra.mxu0 %v602
  %786 = vmatpush.bf16.msra.mxu0 %v601
  %787 = vmatpush.bf16.msra.mxu0 %v600
  %788 = vmatpush.bf16.msra.mxu0 %v599
  %789 = vmatpush.bf16.msra.mxu0 %v598
  %790 = vmatpush.bf16.msra.mxu0 %v597
  %791 = vmatpush.bf16.msra.mxu0 %v596
  %792 = vmatmul.bf16.gmra.mxu0 %v244
  %v793 = vpop.f32.mrf.mxu0
  %v794 = vadd.f32 %v775, %v793
  %v795 = vpop.f32.mrf.mxu0
  %v796 = vadd.f32 %v777, %v795
  %797 = vmatmul.bf16.gmra.mxu0 %v253
  %v798 = vpop.f32.mrf.mxu0
  %v799 = vadd.f32 %v780, %v798
  %v800 = vpop.f32.mrf.mxu0
  %v801 = vadd.f32 %v782, %v800
  %802 = vdwg.mxu0
  %803 = vmatpush.bf16.msra.mxu0 %v611
  %804 = vmatpush.bf16.msra.mxu0 %v610
  %805 = vmatpush.bf16.msra.mxu0 %v609
  %806 = vmatpush.bf16.msra.mxu0 %v608
  %807 = vmatpush.bf16.msra.mxu0 %v607
  %808 = vmatpush.bf16.msra.mxu0 %v606
  %809 = vmatpush.bf16.msra.mxu0 %v605
  %810 = vmatpush.bf16.msra.mxu0 %v604
  %811 = vmatmul.bf16.gmra.mxu0 %v245
  %v812 = vpop.f32.mrf.mxu0
  %v813 = vadd.f32 %v794, %v812
  %v814 = vpop.f32.mrf.mxu0
  %v815 = vadd.f32 %v796, %v814
  %816 = vmatmul.bf16.gmra.mxu0 %v254
  %v817 = vpop.f32.mrf.mxu0
  %v818 = vadd.f32 %v799, %v817
  %v819 = vpop.f32.mrf.mxu0
  %v820 = vadd.f32 %v801, %v819
  %821 = vdwg.mxu0
  %822 = vmatpush.bf16.msra.mxu0 %v619
  %823 = vmatpush.bf16.msra.mxu0 %v618
  %824 = vmatpush.bf16.msra.mxu0 %v617
  %825 = vmatpush.bf16.msra.mxu0 %v616
  %826 = vmatpush.bf16.msra.mxu0 %v615
  %827 = vmatpush.bf16.msra.mxu0 %v614
  %828 = vmatpush.bf16.msra.mxu0 %v613
  %829 = vmatpush.bf16.msra.mxu0 %v612
  %830 = vmatmul.bf16.gmra.mxu0 %v246
  %v831 = vpop.f32.mrf.mxu0
  %v832 = vadd.f32 %v813, %v831
  %v833 = vpop.f32.mrf.mxu0
  %v834 = vadd.f32 %v815, %v833
  %835 = vmatmul.bf16.gmra.mxu0 %v255
  %v836 = vpop.f32.mrf.mxu0
  %v837 = vadd.f32 %v818, %v836
  %v838 = vpop.f32.mrf.mxu0
  %v839 = vadd.f32 %v820, %v838
  %840 = vdwg.mxu0
  %841 = vmatpush.bf16.msra.mxu0 %v627
  %842 = vmatpush.bf16.msra.mxu0 %v626
  %843 = vmatpush.bf16.msra.mxu0 %v625
  %844 = vmatpush.bf16.msra.mxu0 %v624
  %845 = vmatpush.bf16.msra.mxu0 %v623
  %846 = vmatpush.bf16.msra.mxu0 %v622
  %847 = vmatpush.bf16.msra.mxu0 %v621
  %848 = vmatpush.bf16.msra.mxu0 %v620
  %849 = vmatmul.bf16.gmra.mxu0 %v247
  %v850 = vpop.f32.mrf.mxu0
  %v851 = vadd.f32 %v832, %v850
  %v852 = vpop.f32.mrf.mxu0
  %v853 = vadd.f32 %v834, %v852
  %854 = vmatmul.bf16.gmra.mxu0 %v256
  %v855 = vpop.f32.mrf.mxu0
  %v856 = vadd.f32 %v837, %v855
  %v857 = vpop.f32.mrf.mxu0
  %v858 = vadd.f32 %v839, %v857
  %859 = vdwg.mxu0
  %860 = vmatpush.bf16.msra.mxu0 %v635
  %861 = vmatpush.bf16.msra.mxu0 %v634
  %862 = vmatpush.bf16.msra.mxu0 %v633
  %863 = vmatpush.bf16.msra.mxu0 %v632
  %864 = vmatpush.bf16.msra.mxu0 %v631
  %865 = vmatpush.bf16.msra.mxu0 %v630
  %866 = vmatpush.bf16.msra.mxu0 %v629
  %867 = vmatpush.bf16.msra.mxu0 %v628
  %868 = vmatmul.bf16.gmra.mxu0 %v248
  %v869 = vpop.f32.mrf.mxu0
  %v870 = vadd.f32 %v851, %v869
  %v871 = vpop.f32.mrf.mxu0
  %v872 = vadd.f32 %v853, %v871
  %873 = vmatmul.bf16.gmra.mxu0 %v257
  %v874 = vpop.f32.mrf.mxu0
  %v875 = vadd.f32 %v856, %v874
  %v876 = vpop.f32.mrf.mxu0
  %v877 = vadd.f32 %v858, %v876
  %878 = vdwg.mxu0
  %v879 = vadd.f32 %v870, %v872
  %v880 = vadd.f32 %v879, %v875
  %v881 = vadd.f32 %v880, %v877
  %v882 = vrot.slane %v881, 4
  %v883 = vadd.f32 %v881, %v882
  %v884 = vrot.slane %v883, 2
  %v885 = vadd.f32 %v883, %v884
  %v886 = vrot.slane %v885, 1
  %v887 = vadd.f32 %v885, %v886
  %v888 = vmul.f32 %v887, 0.03125
  %v889 = vmul.f32 %v870, %v870
  %v890 = vmul.f32 %v872, %v872
  %v891 = vmul.f32 %v875, %v875
  %v892 = vmul.f32 %v877, %v877
  %v893 = vadd.f32 %v889, %v890
  %v894 = vadd.f32 %v893, %v891
  %v895 = vadd.f32 %v894, %v892
  %v896 = vrot.slane %v895, 4
  %v897 = vadd.f32 %v895, %v896
  %v898 = vrot.slane %v897, 2
  %v899 = vadd.f32 %v897, %v898
  %v900 = vrot.slane %v899, 1
  %v901 = vadd.f32 %v899, %v900
  %v902 = vmul.f32 %v901, 0.03125
  %v903 = vmul.f32 %v888, %v888
  %v904 = vsub.f32 %v902, %v903
  %v905 = vmax.f32 %v904, 0.0
  %v906 = vld [vmem:[%s2] sm:$0x1]
  %v907 = vadd.f32 %v905, 1e-05
  %v908 = vrsqrt.pop %v907
  %v909 = vmul.f32 %v908, %v907
  %v910 = vmul.f32 %v909, %v908
  %v911 = vmul.f32 0.5, %v910
  %v912 = vsub.f32 1.5, %v911
  %v913 = vmul.f32 %v908, %v912
  %vm914 = vweird.f32 %v907
  %vm915 = vweird.f32 %v908
  %vm916 = vmor %vm914, %vm915
  %v917 = vsel %vm916, %v908, %v913
  %v918 = vmul.f32 %v906, %v917
  %v919 = vld [vmem:[%s3] sm:$0x1]
  %v920 = vmul.f32 %v888, %v918
  %v921 = vsub.f32 %v919, %v920
  %v923 = vperm.slane %v918, 0
  %v925 = vmul.f32 %v870, %v923
  %v926 = vmul.f32 %v872, %v923
  %v927 = vmul.f32 %v875, %v923
  %v928 = vmul.f32 %v877, %v923
  %v930 = vperm.slane %v921, 0
  %v932 = vadd.f32 %v925, %v930
  %v933 = vadd.f32 %v926, %v930
  %v934 = vadd.f32 %v927, %v930
  %v935 = vadd.f32 %v928, %v930
  %v936 = vld [vmem:[%s4] sm:$0xf]
  %v937 = vld [vmem:[%s4 + $0x4] sm:$0xf]
  %v938 = vld [vmem:[%s4 + $0x8] sm:$0xf]
  %v939 = vld [vmem:[%s4 + $0xc] sm:$0xf]
  %v940 = vunpack.c.l.bf16 %v936
  %v941 = vunpack.c.l.bf16 %v937
  %v942 = vunpack.c.l.bf16 %v938
  %v943 = vunpack.c.l.bf16 %v939
  %v944 = vadd.f32 %v932, %v940
  %v945 = vadd.f32 %v933, %v941
  %v946 = vadd.f32 %v934, %v942
  %v947 = vadd.f32 %v935, %v943
  %v948 = vmax.f32 %v944, 0.0
  %v949 = vmax.f32 %v945, 0.0
  %v950 = vmax.f32 %v946, 0.0
  %v951 = vmax.f32 %v947, 0.0
  %v952 = vpack.c.bf16 %v948, %v948
  %v953 = vpack.c.bf16 %v949, %v949
  %v954 = vpack.c.bf16 %v950, %v950
  %v955 = vpack.c.bf16 %v951, %v951
  %956 = vst [vmem:[%s5] sm:$0xf] %v952
  %957 = vst [vmem:[%s5 + $0x4] sm:$0xf] %v953
  %958 = vst [vmem:[%s5 + $0x8] sm:$0xf] %v954
  %959 = vst [vmem:[%s5 + $0xc] sm:$0xf] %v955
  // Predicated region
  $region22: #{resnet_forward.10} parent=0 // pred_check
    _
  $region23: #{resnet_forward.10} parent=0 // pred_check_branch
    %961 = sbr.rel (0) target = $region25
  $region24: #{resnet_forward.10} parent=0 // pred_region
    _
  $region25: #{resnet_forward.10} parent=0 // pred_fallthru
    _
  // Predicated region
  $region26: #{resnet_forward.10} parent=0 // pred_check
    _
  $region27: #{resnet_forward.10} parent=0 // pred_check_branch
    %963 = sbr.rel (0) target = $region29
  $region28: #{resnet_forward.10} parent=0 // pred_region
    _
  $region29: #{resnet_forward.10} parent=0 // pred_fallthru
    _

// kernel: resnet_forward.12
$region0: #{resnet_forward.12}
  #allocation0 [shape = 'u32[]', space=smem, size = 0x4, offset = 0x4, fixed_abs, tag = 'smem constant byte address 0x4 - core index']
  #allocation1 [shape = 'u32[72,128]{1,0:T(1,128)}', space=vmem, size = 0x9000, scoped, tag = 'internal scratch']
  %s0 = inlined_call_operand.vmem [shape: bf16[16,128], index: 0, kind: input, shape index: {}]
  %s1 = inlined_call_operand.vmem [shape: bf16[128,128], index: 1, kind: input, shape index: {}]
  %s2 = inlined_call_operand.vmem [shape: f32[1,128], index: 2, kind: input, shape index: {}]
  %s3 = inlined_call_operand.vmem [shape: f32[1,128], index: 3, kind: input, shape index: {}]
  %s4 = inlined_call_operand.vmem [shape: bf16[16,128], index: 4, kind: output, shape index: {}]
  %s5 = sld [smem:[#allocation0]]
  $region26: #{resnet_forward.12} parent=0
    _
  %s7 = ssub.s32 1, %s5
  %s8 = scalar_select 0, %s7, %s5
  // Predicated region
  $region2: #{resnet_forward.12} parent=0 // pred_check
    _
  $region3: #{resnet_forward.12} parent=0 // pred_check_branch
    %10 = sbr.rel (0) target = $region5
  $region4: #{resnet_forward.12} parent=0 // pred_region
    _
  $region5: #{resnet_forward.12} parent=0 // pred_fallthru
    _
  // Predicated region
  $region6: #{resnet_forward.12} parent=0 // pred_check
    _
  $region7: #{resnet_forward.12} parent=0 // pred_check_branch
    %12 = sbr.rel (0) target = $region9
  $region8: #{resnet_forward.12} parent=0 // pred_region
    _
  $region9: #{resnet_forward.12} parent=0 // pred_fallthru
    _
  // Predicated region
  $region10: #{resnet_forward.12} parent=0 // pred_check
    _
  $region11: #{resnet_forward.12} parent=0 // pred_check_branch
    %14 = sbr.rel (0) target = $region13
  $region12: #{resnet_forward.12} parent=0 // pred_region
    _
  $region13: #{resnet_forward.12} parent=0 // pred_fallthru
    _
  // Predicated region
  $region14: #{resnet_forward.12} parent=0 // pred_check
    _
  $region15: #{resnet_forward.12} parent=0 // pred_check_branch
    %16 = sbr.rel (0) target = $region17
  $region16: #{resnet_forward.12} parent=0 // pred_region
    _
  $region17: #{resnet_forward.12} parent=0 // pred_fallthru
    _
  %v17 = vld [vmem:[%s0] sm:$0xf]
  %v18 = vld [vmem:[%s0 + $0x4] sm:$0xf]
  %v19 = vld [vmem:[%s1] sm:$0xf]
  %v20 = vld [vmem:[%s1 + $0x4] sm:$0xf]
  %v21 = vld [vmem:[%s1 + $0x8] sm:$0xf]
  %v22 = vld [vmem:[%s1 + $0xc] sm:$0xf]
  %v23 = vld [vmem:[%s1 + $0x10] sm:$0xf]
  %v24 = vld [vmem:[%s1 + $0x14] sm:$0xf]
  %v25 = vld [vmem:[%s1 + $0x18] sm:$0xf]
  %v26 = vld [vmem:[%s1 + $0x1c] sm:$0xf]
  %v27 = vld [vmem:[%s1 + $0x20] sm:$0xf]
  %v28 = vld [vmem:[%s1 + $0x24] sm:$0xf]
  %v29 = vld [vmem:[%s1 + $0x28] sm:$0xf]
  %v30 = vld [vmem:[%s1 + $0x2c] sm:$0xf]
  %v31 = vld [vmem:[%s1 + $0x30] sm:$0xf]
  %v32 = vld [vmem:[%s1 + $0x34] sm:$0xf]
  %v33 = vld [vmem:[%s1 + $0x38] sm:$0xf]
  %v34 = vld [vmem:[%s1 + $0x3c] sm:$0xf]
  %v37 = vunpack.c.l.b16 %v17
  %v38 = vunpack.c.l.b16 %v18
  %v39 = vpack.c.b16 %v38, %v37
  %v57 = vunpack.c.l.b16 %v19
  %v58 = vunpack.c.l.b16 %v20
  %v59 = vunpack.c.l.b16 %v21
  %v60 = vunpack.c.l.b16 %v22
  %v61 = vunpack.c.l.b16 %v23
  %v62 = vunpack.c.l.b16 %v24
  %v63 = vunpack.c.l.b16 %v25
  %v64 = vunpack.c.l.b16 %v26
  %v65 = vunpack.c.l.b16 %v27
  %v66 = vunpack.c.l.b16 %v28
  %v67 = vunpack.c.l.b16 %v29
  %v68 = vunpack.c.l.b16 %v30
  %v69 = vunpack.c.l.b16 %v31
  %v70 = vunpack.c.l.b16 %v32
  %v71 = vunpack.c.l.b16 %v33
  %v72 = vunpack.c.l.b16 %v34
  %v73 = vpack.c.b16 %v58, %v57
  %v74 = vpack.c.b16 %v60, %v59
  %v75 = vpack.c.b16 %v62, %v61
  %v76 = vpack.c.b16 %v64, %v63
  %v77 = vpack.c.b16 %v66, %v65
  %v78 = vpack.c.b16 %v68, %v67
  %v79 = vpack.c.b16 %v70, %v69
  %v80 = vpack.c.b16 %v72, %v71
  %89 = vmatpush.bf16.msra.mxu0 %v80
  %90 = vmatpush.bf16.msra.mxu0 %v79
  %91 = vmatpush.bf16.msra.mxu0 %v78
  %92 = vmatpush.bf16.msra.mxu0 %v77
  %93 = vmatpush.bf16.msra.mxu0 %v76
  %94 = vmatpush.bf16.msra.mxu0 %v75
  %95 = vmatpush.bf16.msra.mxu0 %v74
  %96 = vmatpush.bf16.msra.mxu0 %v73
  %97 = vmatmul.bf16.gmra.mxu0 %v39
  %v98 = vpop.f32.mrf.mxu0
  %v99 = vadd.f32 0.0, %v98
  %v100 = vpop.f32.mrf.mxu0
  %v101 = vadd.f32 0.0, %v100
  %102 = vdwg.mxu0
  %v103 = vadd.f32 %v99, %v101
  %v104 = vrot.slane %v103, 4
  %v105 = vadd.f32 %v103, %v104
  %v106 = vrot.slane %v105, 2
  %v107 = vadd.f32 %v105, %v106
  %v108 = vrot.slane %v107, 1
  %v109 = vadd.f32 %v107, %v108
  %v110 = vmul.f32 %v109, 0.125
  %v111 = vmul.f32 %v99, %v99
  %v112 = vmul.f32 %v101, %v101
  %v113 = vadd.f32 %v111, %v112
  %v114 = vrot.slane %v113, 4
  %v115 = vadd.f32 %v113, %v114
  %v116 = vrot.slane %v115, 2
  %v117 = vadd.f32 %v115, %v116
  %v118 = vrot.slane %v117, 1
  %v119 = vadd.f32 %v117, %v118
  %v120 = vmul.f32 %v119, 0.125
  %v121 = vmul.f32 %v110, %v110
  %v122 = vsub.f32 %v120, %v121
  %v123 = vmax.f32 %v122, 0.0
  %v124 = vld [vmem:[%s2] sm:$0x1]
  %v125 = vadd.f32 %v123, 1e-05
  %v126 = vrsqrt.pop %v125
  %v127 = vmul.f32 %v126, %v125
  %v128 = vmul.f32 %v127, %v126
  %v129 = vmul.f32 0.5, %v128
  %v130 = vsub.f32 1.5, %v129
  %v131 = vmul.f32 %v126, %v130
  %vm132 = vweird.f32 %v125
  %vm133 = vweird.f32 %v126
  %vm134 = vmor %vm132, %vm133
  %v135 = vsel %vm134, %v126, %v131
  %v136 = vmul.f32 %v124, %v135
  %v137 = vld [vmem:[%s3] sm:$0x1]
  %v138 = vmul.f32 %v110, %v136
  %v139 = vsub.f32 %v137, %v138
  %v141 = vperm.slane %v136, 0
  %v143 = vmul.f32 %v99, %v141
  %v144 = vmul.f32 %v101, %v141
  %v146 = vperm.slane %v139, 0
  %v148 = vadd.f32 %v143, %v146
  %v149 = vadd.f32 %v144, %v146
  %v150 = vpack.c.bf16 %v148, %v148
  %v151 = vpack.c.bf16 %v149, %v149
  %152 = vst [vmem:[%s4] sm:$0xf] %v150
  %153 = vst [vmem:[%s4 + $0x4] sm:$0xf] %v151
  // Predicated region
  $region18: #{resnet_forward.12} parent=0 // pred_check
    _
  $region19: #{resnet_forward.12} parent=0 // pred_check_branch
    %155 = sbr.rel (0) target = $region21
  $region20: #{resnet_forward.12} parent=0 // pred_region
    _
  $region21: #{resnet_forward.12} parent=0 // pred_fallthru
    _
  // Predicated region
  $region22: #{resnet_forward.12} parent=0 // pred_check
    _
  $region23: #{resnet_forward.12} parent=0 // pred_check_branch
    %157 = sbr.rel (0) target = $region25
  $region24: #{resnet_forward.12} parent=0 // pred_region
    _
  $region25: #{resnet_forward.12} parent=0 // pred_fallthru
    _

// kernel: resnet_forward.11
$region0: #{resnet_forward.11}
  #allocation0 [shape = 'u32[]', space=smem, size = 0x4, offset = 0x4, fixed_abs, tag = 'smem constant byte address 0x4 - core index']
  #allocation1 [shape = 'u32[72,128]{1,0:T(1,128)}', space=vmem, size = 0x9000, scoped, tag = 'internal scratch']
  %s0 = inlined_call_operand.vmem [shape: bf16[16,1152], index: 0, kind: input, shape index: {}]
  %s1 = inlined_call_operand.vmem [shape: bf16[1152,128], index: 1, kind: input, shape index: {}]
  %s2 = inlined_call_operand.vmem [shape: f32[1,128], index: 2, kind: input, shape index: {}]
  %s3 = inlined_call_operand.vmem [shape: f32[1,128], index: 3, kind: input, shape index: {}]
  %s4 = inlined_call_operand.vmem [shape: bf16[16,128], index: 4, kind: output, shape index: {}]
  %s5 = sld [smem:[#allocation0]]
  $region26: #{resnet_forward.11} parent=0
    _
  %s7 = ssub.s32 1, %s5
  %s8 = scalar_select 0, %s7, %s5
  // Predicated region
  $region2: #{resnet_forward.11} parent=0 // pred_check
    _
  $region3: #{resnet_forward.11} parent=0 // pred_check_branch
    %10 = sbr.rel (0) target = $region5
  $region4: #{resnet_forward.11} parent=0 // pred_region
    _
  $region5: #{resnet_forward.11} parent=0 // pred_fallthru
    _
  // Predicated region
  $region6: #{resnet_forward.11} parent=0 // pred_check
    _
  $region7: #{resnet_forward.11} parent=0 // pred_check_branch
    %12 = sbr.rel (0) target = $region9
  $region8: #{resnet_forward.11} parent=0 // pred_region
    _
  $region9: #{resnet_forward.11} parent=0 // pred_fallthru
    _
  // Predicated region
  $region10: #{resnet_forward.11} parent=0 // pred_check
    _
  $region11: #{resnet_forward.11} parent=0 // pred_check_branch
    %14 = sbr.rel (0) target = $region13
  $region12: #{resnet_forward.11} parent=0 // pred_region
    _
  $region13: #{resnet_forward.11} parent=0 // pred_fallthru
    _
  // Predicated region
  $region14: #{resnet_forward.11} parent=0 // pred_check
    _
  $region15: #{resnet_forward.11} parent=0 // pred_check_branch
    %16 = sbr.rel (0) target = $region17
  $region16: #{resnet_forward.11} parent=0 // pred_region
    _
  $region17: #{resnet_forward.11} parent=0 // pred_fallthru
    _
  %v17 = vld [vmem:[%s0] sm:$0xff]
  %v18 = vld [vmem:[%s0 + $0x8] sm:$0xff]
  %v19 = vld [vmem:[%s0 + $0x10] sm:$0xff]
  %v20 = vld [vmem:[%s0 + $0x18] sm:$0xff]
  %v21 = vld [vmem:[%s0 + $0x20] sm:$0xf]
  %v22 = vld [vmem:[%s0 + $0x24] sm:$0xff]
  %v23 = vld [vmem:[%s0 + $0x2c] sm:$0xff]
  %v24 = vld [vmem:[%s0 + $0x34] sm:$0xff]
  %v25 = vld [vmem:[%s0 + $0x3c] sm:$0xff]
  %v26 = vld [vmem:[%s0 + $0x44] sm:$0xf]
  %v27 = vld [vmem:[%s1] sm:$0xf]
  %v28 = vld [vmem:[%s1 + $0x4] sm:$0xf]
  %v29 = vld [vmem:[%s1 + $0x8] sm:$0xf]
  %v30 = vld [vmem:[%s1 + $0xc] sm:$0xf]
  %v31 = vld [vmem:[%s1 + $0x10] sm:$0xf]
  %v32 = vld [vmem:[%s1 + $0x14] sm:$0xf]
  %v33 = vld [vmem:[%s1 + $0x18] sm:$0xf]
  %v34 = vld [vmem:[%s1 + $0x1c] sm:$0xf]
  %v35 = vld [vmem:[%s1 + $0x20] sm:$0xf]
  %v36 = vld [vmem:[%s1 + $0x24] sm:$0xf]
  %v37 = vld [vmem:[%s1 + $0x28] sm:$0xf]
  %v38 = vld [vmem:[%s1 + $0x2c] sm:$0xf]
  %v39 = vld [vmem:[%s1 + $0x30] sm:$0xf]
  %v40 = vld [vmem:[%s1 + $0x34] sm:$0xf]
  %v41 = vld [vmem:[%s1 + $0x38] sm:$0xf]
  %v42 = vld [vmem:[%s1 + $0x3c] sm:$0xf]
  %v43 = vld [vmem:[%s1 + $0x40] sm:$0xf]
  %v44 = vld [vmem:[%s1 + $0x44] sm:$0xf]
  %v45 = vld [vmem:[%s1 + $0x48] sm:$0xf]
  %v46 = vld [vmem:[%s1 + $0x4c] sm:$0xf]
  %v47 = vld [vmem:[%s1 + $0x50] sm:$0xf]
  %v48 = vld [vmem:[%s1 + $0x54] sm:$0xf]
  %v49 = vld [vmem:[%s1 + $0x58] sm:$0xf]
  %v50 = vld [vmem:[%s1 + $0x5c] sm:$0xf]
  %v51 = vld [vmem:[%s1 + $0x60] sm:$0xf]
  %v52 = vld [vmem:[%s1 + $0x64] sm:$0xf]
  %v53 = vld [vmem:[%s1 + $0x68] sm:$0xf]
  %v54 = vld [vmem:[%s1 + $0x6c] sm:$0xf]
  %v55 = vld [vmem:[%s1 + $0x70] sm:$0xf]
  %v56 = vld [vmem:[%s1 + $0x74] sm:$0xf]
  %v57 = vld [vmem:[%s1 + $0x78] sm:$0xf]
  %v58 = vld [vmem:[%s1 + $0x7c] sm:$0xf]
  %v59 = vld [vmem:[%s1 + $0x80] sm:$0xf]
  %v60 = vld [vmem:[%s1 + $0x84] sm:$0xf]
  %v61 = vld [vmem:[%s1 + $0x88] sm:$0xf]
  %v62 = vld [vmem:[%s1 + $0x8c] sm:$0xf]
  %v63 = vld [vmem:[%s1 + $0x90] sm:$0xf]
  %v64 = vld [vmem:[%s1 + $0x94] sm:$0xf]
  %v65 = vld [vmem:[%s1 + $0x98] sm:$0xf]
  %v66 = vld [vmem:[%s1 + $0x9c] sm:$0xf]
  %v67 = vld [vmem:[%s1 + $0xa0] sm:$0xf]
  %v68 = vld [vmem:[%s1 + $0xa4] sm:$0xf]
  %v69 = vld [vmem:[%s1 + $0xa8] sm:$0xf]
  %v70 = vld [vmem:[%s1 + $0xac] sm:$0xf]
  %v71 = vld [vmem:[%s1 + $0xb0] sm:$0xf]
  %v72 = vld [vmem:[%s1 + $0xb4] sm:$0xf]
  %v73 = vld [vmem:[%s1 + $0xb8] sm:$0xf]
  %v74 = vld [vmem:[%s1 + $0xbc] sm:$0xf]
  %v75 = vld [vmem:[%s1 + $0xc0] sm:$0xf]
  %v76 = vld [vmem:[%s1 + $0xc4] sm:$0xf]
  %v77 = vld [vmem:[%s1 + $0xc8] sm:$0xf]
  %v78 = vld [vmem:[%s1 + $0xcc] sm:$0xf]
  %v79 = vld [vmem:[%s1 + $0xd0] sm:$0xf]
  %v80 = vld [vmem:[%s1 + $0xd4] sm:$0xf]
  %v81 = vld [vmem:[%s1 + $0xd8] sm:$0xf]
  %v82 = vld [vmem:[%s1 + $0xdc] sm:$0xf]
  %v83 = vld [vmem:[%s1 + $0xe0] sm:$0xf]
  %v84 = vld [vmem:[%s1 + $0xe4] sm:$0xf]
  %v85 = vld [vmem:[%s1 + $0xe8] sm:$0xf]
  %v86 = vld [vmem:[%s1 + $0xec] sm:$0xf]
  %v87 = vld [vmem:[%s1 + $0xf0] sm:$0xf]
  %v88 = vld [vmem:[%s1 + $0xf4] sm:$0xf]
  %v89 = vld [vmem:[%s1 + $0xf8] sm:$0xf]
  %v90 = vld [vmem:[%s1 + $0xfc] sm:$0xf]
  %v91 = vld [vmem:[%s1 + $0x100] sm:$0xf]
  %v92 = vld [vmem:[%s1 + $0x104] sm:$0xf]
  %v93 = vld [vmem:[%s1 + $0x108] sm:$0xf]
  %v94 = vld [vmem:[%s1 + $0x10c] sm:$0xf]
  %v95 = vld [vmem:[%s1 + $0x110] sm:$0xf]
  %v96 = vld [vmem:[%s1 + $0x114] sm:$0xf]
  %v97 = vld [vmem:[%s1 + $0x118] sm:$0xf]
  %v98 = vld [vmem:[%s1 + $0x11c] sm:$0xf]
  %v99 = vld [vmem:[%s1 + $0x120] sm:$0xf]
  %v100 = vld [vmem:[%s1 + $0x124] sm:$0xf]
  %v101 = vld [vmem:[%s1 + $0x128] sm:$0xf]
  %v102 = vld [vmem:[%s1 + $0x12c] sm:$0xf]
  %v103 = vld [vmem:[%s1 + $0x130] sm:$0xf]
  %v104 = vld [vmem:[%s1 + $0x134] sm:$0xf]
  %v105 = vld [vmem:[%s1 + $0x138] sm:$0xf]
  %v106 = vld [vmem:[%s1 + $0x13c] sm:$0xf]
  %v107 = vld [vmem:[%s1 + $0x140] sm:$0xf]
  %v108 = vld [vmem:[%s1 + $0x144] sm:$0xf]
  %v109 = vld [vmem:[%s1 + $0x148] sm:$0xf]
  %v110 = vld [vmem:[%s1 + $0x14c] sm:$0xf]
  %v111 = vld [vmem:[%s1 + $0x150] sm:$0xf]
  %v112 = vld [vmem:[%s1 + $0x154] sm:$0xf]
  %v113 = vld [vmem:[%s1 + $0x158] sm:$0xf]
  %v114 = vld [vmem:[%s1 + $0x15c] sm:$0xf]
  %v115 = vld [vmem:[%s1 + $0x160] sm:$0xf]
  %v116 = vld [vmem:[%s1 + $0x164] sm:$0xf]
  %v117 = vld [vmem:[%s1 + $0x168] sm:$0xf]
  %v118 = vld [vmem:[%s1 + $0x16c] sm:$0xf]
  %v119 = vld [vmem:[%s1 + $0x170] sm:$0xf]
  %v120 = vld [vmem:[%s1 + $0x174] sm:$0xf]
  %v121 = vld [vmem:[%s1 + $0x178] sm:$0xf]
  %v122 = vld [vmem:[%s1 + $0x17c] sm:$0xf]
  %v123 = vld [vmem:[%s1 + $0x180] sm:$0xf]
  %v124 = vld [vmem:[%s1 + $0x184] sm:$0xf]
  %v125 = vld [vmem:[%s1 + $0x188] sm:$0xf]
  %v126 = vld [vmem:[%s1 + $0x18c] sm:$0xf]
  %v127 = vld [vmem:[%s1 + $0x190] sm:$0xf]
  %v128 = vld [vmem:[%s1 + $0x194] sm:$0xf]
  %v129 = vld [vmem:[%s1 + $0x198] sm:$0xf]
  %v130 = vld [vmem:[%s1 + $0x19c] sm:$0xf]
  %v131 = vld [vmem:[%s1 + $0x1a0] sm:$0xf]
  %v132 = vld [vmem:[%s1 + $0x1a4] sm:$0xf]
  %v133 = vld [vmem:[%s1 + $0x1a8] sm:$0xf]
  %v134 = vld [vmem:[%s1 + $0x1ac] sm:$0xf]
  %v135 = vld [vmem:[%s1 + $0x1b0] sm:$0xf]
  %v136 = vld [vmem:[%s1 + $0x1b4] sm:$0xf]
  %v137 = vld [vmem:[%s1 + $0x1b8] sm:$0xf]
  %v138 = vld [vmem:[%s1 + $0x1bc] sm:$0xf]
  %v139 = vld [vmem:[%s1 + $0x1c0] sm:$0xf]
  %v140 = vld [vmem:[%s1 + $0x1c4] sm:$0xf]
  %v141 = vld [vmem:[%s1 + $0x1c8] sm:$0xf]
  %v142 = vld [vmem:[%s1 + $0x1cc] sm:$0xf]
  %v143 = vld [vmem:[%s1 + $0x1d0] sm:$0xf]
  %v144 = vld [vmem:[%s1 + $0x1d4] sm:$0xf]
  %v145 = vld [vmem:[%s1 + $0x1d8] sm:$0xf]
  %v146 = vld [vmem:[%s1 + $0x1dc] sm:$0xf]
  %v147 = vld [vmem:[%s1 + $0x1e0] sm:$0xf]
  %v148 = vld [vmem:[%s1 + $0x1e4] sm:$0xf]
  %v149 = vld [vmem:[%s1 + $0x1e8] sm:$0xf]
  %v150 = vld [vmem:[%s1 + $0x1ec] sm:$0xf]
  %v151 = vld [vmem:[%s1 + $0x1f0] sm:$0xf]
  %v152 = vld [vmem:[%s1 + $0x1f4] sm:$0xf]
  %v153 = vld [vmem:[%s1 + $0x1f8] sm:$0xf]
  %v154 = vld [vmem:[%s1 + $0x1fc] sm:$0xf]
  %v155 = vld [vmem:[%s1 + $0x200] sm:$0xf]
  %v156 = vld [vmem:[%s1 + $0x204] sm:$0xf]
  %v157 = vld [vmem:[%s1 + $0x208] sm:$0xf]
  %v158 = vld [vmem:[%s1 + $0x20c] sm:$0xf]
  %v159 = vld [vmem:[%s1 + $0x210] sm:$0xf]
  %v160 = vld [vmem:[%s1 + $0x214] sm:$0xf]
  %v161 = vld [vmem:[%s1 + $0x218] sm:$0xf]
  %v162 = vld [vmem:[%s1 + $0x21c] sm:$0xf]
  %v163 = vld [vmem:[%s1 + $0x220] sm:$0xf]
  %v164 = vld [vmem:[%s1 + $0x224] sm:$0xf]
  %v165 = vld [vmem:[%s1 + $0x228] sm:$0xf]
  %v166 = vld [vmem:[%s1 + $0x22c] sm:$0xf]
  %v167 = vld [vmem:[%s1 + $0x230] sm:$0xf]
  %v168 = vld [vmem:[%s1 + $0x234] sm:$0xf]
  %v169 = vld [vmem:[%s1 + $0x238] sm:$0xf]
  %v170 = vld [vmem:[%s1 + $0x23c] sm:$0xf]
  %v181 = vunpack.c.l.b16 %v17
  %v182 = vunpack.c.h.b16 %v17
  %v183 = vunpack.c.l.b16 %v18
  %v184 = vunpack.c.h.b16 %v18
  %v185 = vunpack.c.l.b16 %v19
  %v186 = vunpack.c.h.b16 %v19
  %v187 = vunpack.c.l.b16 %v20
  %v188 = vunpack.c.h.b16 %v20
  %v189 = vunpack.c.l.b16 %v21
  %v190 = vunpack.c.l.b16 %v22
  %v191 = vunpack.c.h.b16 %v22
  %v192 = vunpack.c.l.b16 %v23
  %v193 = vunpack.c.h.b16 %v23
  %v194 = vunpack.c.l.b16 %v24
  %v195 = vunpack.c.h.b16 %v24
  %v196 = vunpack.c.l.b16 %v25
  %v197 = vunpack.c.h.b16 %v25
  %v198 = vunpack.c.l.b16 %v26
  %v199 = vpack.c.b16 %v190, %v181
  %v200 = vpack.c.b16 %v191, %v182
  %v201 = vpack.c.b16 %v192, %v183
  %v202 = vpack.c.b16 %v193, %v184
  %v203 = vpack.c.b16 %v194, %v185
  %v204 = vpack.c.b16 %v195, %v186
  %v205 = vpack.c.b16 %v196, %v187
  %v206 = vpack.c.b16 %v197, %v188
  %v207 = vpack.c.b16 %v198, %v189
  %v361 = vunpack.c.l.b16 %v27
  %v362 = vunpack.c.l.b16 %v28
  %v363 = vunpack.c.l.b16 %v29
  %v364 = vunpack.c.l.b16 %v30
  %v365 = vunpack.c.l.b16 %v31
  %v366 = vunpack.c.l.b16 %v32
  %v367 = vunpack.c.l.b16 %v33
  %v368 = vunpack.c.l.b16 %v34
  %v369 = vunpack.c.l.b16 %v35
  %v370 = vunpack.c.l.b16 %v36
  %v371 = vunpack.c.l.b16 %v37
  %v372 = vunpack.c.l.b16 %v38
  %v373 = vunpack.c.l.b16 %v39
  %v374 = vunpack.c.l.b16 %v40
  %v375 = vunpack.c.l.b16 %v41
  %v376 = vunpack.c.l.b16 %v42
  %v377 = vunpack.c.l.b16 %v43
  %v378 = vunpack.c.l.b16 %v44
  %v379 = vunpack.c.l.b16 %v45
  %v380 = vunpack.c.l.b16 %v46
  %v381 = vunpack.c.l.b16 %v47
  %v382 = vunpack.c.l.b16 %v48
  %v383 = vunpack.c.l.b16 %v49
  %v384 = vunpack.c.l.b16 %v50
  %v385 = vunpack.c.l.b16 %v51
  %v386 = vunpack.c.l.b16 %v52
  %v387 = vunpack.c.l.b16 %v53
  %v388 = vunpack.c.l.b16 %v54
  %v389 = vunpack.c.l.b16 %v55
  %v390 = vunpack.c.l.b16 %v56
  %v391 = vunpack.c.l.b16 %v57
  %v392 = vunpack.c.l.b16 %v58
  %v393 = vunpack.c.l.b16 %v59
  %v394 = vunpack.c.l.b16 %v60
  %v395 = vunpack.c.l.b16 %v61
  %v396 = vunpack.c.l.b16 %v62
  %v397 = vunpack.c.l.b16 %v63
  %v398 = vunpack.c.l.b16 %v64
  %v399 = vunpack.c.l.b16 %v65
  %v400 = vunpack.c.l.b16 %v66
  %v401 = vunpack.c.l.b16 %v67
  %v402 = vunpack.c.l.b16 %v68
  %v403 = vunpack.c.l.b16 %v69
  %v404 = vunpack.c.l.b16 %v70
  %v405 = vunpack.c.l.b16 %v71
  %v406 = vunpack.c.l.b16 %v72
  %v407 = vunpack.c.l.b16 %v73
  %v408 = vunpack.c.l.b16 %v74
  %v409 = vunpack.c.l.b16 %v75
  %v410 = vunpack.c.l.b16 %v76
  %v411 = vunpack.c.l.b16 %v77
  %v412 = vunpack.c.l.b16 %v78
  %v413 = vunpack.c.l.b16 %v79
  %v414 = vunpack.c.l.b16 %v80
  %v415 = vunpack.c.l.b16 %v81
  %v416 = vunpack.c.l.b16 %v82
  %v417 = vunpack.c.l.b16 %v83
  %v418 = vunpack.c.l.b16 %v84
  %v419 = vunpack.c.l.b16 %v85
  %v420 = vunpack.c.l.b16 %v86
  %v421 = vunpack.c.l.b16 %v87
  %v422 = vunpack.c.l.b16 %v88
  %v423 = vunpack.c.l.b16 %v89
  %v424 = vunpack.c.l.b16 %v90
  %v425 = vunpack.c.l.b16 %v91
  %v426 = vunpack.c.l.b16 %v92
  %v427 = vunpack.c.l.b16 %v93
  %v428 = vunpack.c.l.b16 %v94
  %v429 = vunpack.c.l.b16 %v95
  %v430 = vunpack.c.l.b16 %v96
  %v431 = vunpack.c.l.b16 %v97
  %v432 = vunpack.c.l.b16 %v98
  %v433 = vunpack.c.l.b16 %v99
  %v434 = vunpack.c.l.b16 %v100
  %v435 = vunpack.c.l.b16 %v101
  %v436 = vunpack.c.l.b16 %v102
  %v437 = vunpack.c.l.b16 %v103
  %v438 = vunpack.c.l.b16 %v104
  %v439 = vunpack.c.l.b16 %v105
  %v440 = vunpack.c.l.b16 %v106
  %v441 = vunpack.c.l.b16 %v107
  %v442 = vunpack.c.l.b16 %v108
  %v443 = vunpack.c.l.b16 %v109
  %v444 = vunpack.c.l.b16 %v110
  %v445 = vunpack.c.l.b16 %v111
  %v446 = vunpack.c.l.b16 %v112
  %v447 = vunpack.c.l.b16 %v113
  %v448 = vunpack.c.l.b16 %v114
  %v449 = vunpack.c.l.b16 %v115
  %v450 = vunpack.c.l.b16 %v116
  %v451 = vunpack.c.l.b16 %v117
  %v452 = vunpack.c.l.b16 %v118
  %v453 = vunpack.c.l.b16 %v119
  %v454 = vunpack.c.l.b16 %v120
  %v455 = vunpack.c.l.b16 %v121
  %v456 = vunpack.c.l.b16 %v122
  %v457 = vunpack.c.l.b16 %v123
  %v458 = vunpack.c.l.b16 %v124
  %v459 = vunpack.c.l.b16 %v125
  %v460 = vunpack.c.l.b16 %v126
  %v461 = vunpack.c.l.b16 %v127
  %v462 = vunpack.c.l.b16 %v128
  %v463 = vunpack.c.l.b16 %v129
  %v464 = vunpack.c.l.b16 %v130
  %v465 = vunpack.c.l.b16 %v131
  %v466 = vunpack.c.l.b16 %v132
  %v467 = vunpack.c.l.b16 %v133
  %v468 = vunpack.c.l.b16 %v134
  %v469 = vunpack.c.l.b16 %v135
  %v470 = vunpack.c.l.b16 %v136
  %v471 = vunpack.c.l.b16 %v137
  %v472 = vunpack.c.l.b16 %v138
  %v473 = vunpack.c.l.b16 %v139
  %v474 = vunpack.c.l.b16 %v140
  %v475 = vunpack.c.l.b16 %v141
  %v476 = vunpack.c.l.b16 %v142
  %v477 = vunpack.c.l.b16 %v143
  %v478 = vunpack.c.l.b16 %v144
  %v479 = vunpack.c.l.b16 %v145
  %v480 = vunpack.c.l.b16 %v146
  %v481 = vunpack.c.l.b16 %v147
  %v482 = vunpack.c.l.b16 %v148
  %v483 = vunpack.c.l.b16 %v149
  %v484 = vunpack.c.l.b16 %v150
  %v485 = vunpack.c.l.b16 %v151
  %v486 = vunpack.c.l.b16 %v152
  %v487 = vunpack.c.l.b16 %v153
  %v488 = vunpack.c.l.b16 %v154
  %v489 = vunpack.c.l.b16 %v155
  %v490 = vunpack.c.l.b16 %v156
  %v491 = vunpack.c.l.b16 %v157
  %v492 = vunpack.c.l.b16 %v158
  %v493 = vunpack.c.l.b16 %v159
  %v494 = vunpack.c.l.b16 %v160
  %v495 = vunpack.c.l.b16 %v161
  %v496 = vunpack.c.l.b16 %v162
  %v497 = vunpack.c.l.b16 %v163
  %v498 = vunpack.c.l.b16 %v164
  %v499 = vunpack.c.l.b16 %v165
  %v500 = vunpack.c.l.b16 %v166
  %v501 = vunpack.c.l.b16 %v167
  %v502 = vunpack.c.l.b16 %v168
  %v503 = vunpack.c.l.b16 %v169
  %v504 = vunpack.c.l.b16 %v170
  %v505 = vpack.c.b16 %v362, %v361
  %v506 = vpack.c.b16 %v364, %v363
  %v507 = vpack.c.b16 %v366, %v365
  %v508 = vpack.c.b16 %v368, %v367
  %v509 = vpack.c.b16 %v370, %v369
  %v510 = vpack.c.b16 %v372, %v371
  %v511 = vpack.c.b16 %v374, %v373
  %v512 = vpack.c.b16 %v376, %v375
  %v513 = vpack.c.b16 %v378, %v377
  %v514 = vpack.c.b16 %v380, %v379
  %v515 = vpack.c.b16 %v382, %v381
  %v516 = vpack.c.b16 %v384, %v383
  %v517 = vpack.c.b16 %v386, %v385
  %v518 = vpack.c.b16 %v388, %v387
  %v519 = vpack.c.b16 %v390, %v389
  %v520 = vpack.c.b16 %v392, %v391
  %v521 = vpack.c.b16 %v394, %v393
  %v522 = vpack.c.b16 %v396, %v395
  %v523 = vpack.c.b16 %v398, %v397
  %v524 = vpack.c.b16 %v400, %v399
  %v525 = vpack.c.b16 %v402, %v401
  %v526 = vpack.c.b16 %v404, %v403
  %v527 = vpack.c.b16 %v406, %v405
  %v528 = vpack.c.b16 %v408, %v407
  %v529 = vpack.c.b16 %v410, %v409
  %v530 = vpack.c.b16 %v412, %v411
  %v531 = vpack.c.b16 %v414, %v413
  %v532 = vpack.c.b16 %v416, %v415
  %v533 = vpack.c.b16 %v418, %v417
  %v534 = vpack.c.b16 %v420, %v419
  %v535 = vpack.c.b16 %v422, %v421
  %v536 = vpack.c.b16 %v424, %v423
  %v537 = vpack.c.b16 %v426, %v425
  %v538 = vpack.c.b16 %v428, %v427
  %v539 = vpack.c.b16 %v430, %v429
  %v540 = vpack.c.b16 %v432, %v431
  %v541 = vpack.c.b16 %v434, %v433
  %v542 = vpack.c.b16 %v436, %v435
  %v543 = vpack.c.b16 %v438, %v437
  %v544 = vpack.c.b16 %v440, %v439
  %v545 = vpack.c.b16 %v442, %v441
  %v546 = vpack.c.b16 %v444, %v443
  %v547 = vpack.c.b16 %v446, %v445
  %v548 = vpack.c.b16 %v448, %v447
  %v549 = vpack.c.b16 %v450, %v449
  %v550 = vpack.c.b16 %v452, %v451
  %v551 = vpack.c.b16 %v454, %v453
  %v552 = vpack.c.b16 %v456, %v455
  %v553 = vpack.c.b16 %v458, %v457
  %v554 = vpack.c.b16 %v460, %v459
  %v555 = vpack.c.b16 %v462, %v461
  %v556 = vpack.c.b16 %v464, %v463
  %v557 = vpack.c.b16 %v466, %v465
  %v558 = vpack.c.b16 %v468, %v467
  %v559 = vpack.c.b16 %v470, %v469
  %v560 = vpack.c.b16 %v472, %v471
  %v561 = vpack.c.b16 %v474, %v473
  %v562 = vpack.c.b16 %v476, %v475
  %v563 = vpack.c.b16 %v478, %v477
  %v564 = vpack.c.b16 %v480, %v479
  %v565 = vpack.c.b16 %v482, %v481
  %v566 = vpack.c.b16 %v484, %v483
  %v567 = vpack.c.b16 %v486, %v485
  %v568 = vpack.c.b16 %v488, %v487
  %v569 = vpack.c.b16 %v490, %v489
  %v570 = vpack.c.b16 %v492, %v491
  %v571 = vpack.c.b16 %v494, %v493
  %v572 = vpack.c.b16 %v496, %v495
  %v573 = vpack.c.b16 %v498, %v497
  %v574 = vpack.c.b16 %v500, %v499
  %v575 = vpack.c.b16 %v502, %v501
  %v576 = vpack.c.b16 %v504, %v503
  %649 = vmatpush.bf16.msra.mxu0 %v512
  %650 = vmatpush.bf16.msra.mxu0 %v511
  %651 = vmatpush.bf16.msra.mxu0 %v510
  %652 = vmatpush.bf16.msra.mxu0 %v509
  %653 = vmatpush.bf16.msra.mxu0 %v508
  %654 = vmatpush.bf16.msra.mxu0 %v507
  %655 = vmatpush.bf16.msra.mxu0 %v506
  %656 = vmatpush.bf16.msra.mxu0 %v505
  %657 = vmatmul.bf16.gmra.mxu0 %v199
  %v658 = vpop.f32.mrf.mxu0
  %v659 = vadd.f32 0.0, %v658
  %v660 = vpop.f32.mrf.mxu0
  %v661 = vadd.f32 0.0, %v660
  %662 = vdwg.mxu0
  %663 = vmatpush.bf16.msra.mxu0 %v520
  %664 = vmatpush.bf16.msra.mxu0 %v519
  %665 = vmatpush.bf16.msra.mxu0 %v518
  %666 = vmatpush.bf16.msra.mxu0 %v517
  %667 = vmatpush.bf16.msra.mxu0 %v516
  %668 = vmatpush.bf16.msra.mxu0 %v515
  %669 = vmatpush.bf16.msra.mxu0 %v514
  %670 = vmatpush.bf16.msra.mxu0 %v513
  %671 = vmatmul.bf16.gmra.mxu0 %v200
  %v672 = vpop.f32.mrf.mxu0
  %v673 = vadd.f32 %v659, %v672
  %v674 = vpop.f32.mrf.mxu0
  %v675 = vadd.f32 %v661, %v674
  %676 = vdwg.mxu0
  %677 = vmatpush.bf16.msra.mxu0 %v528
  %678 = vmatpush.bf16.msra.mxu0 %v527
  %679 = vmatpush.bf16.msra.mxu0 %v526
  %680 = vmatpush.bf16.msra.mxu0 %v525
  %681 = vmatpush.bf16.msra.mxu0 %v524
  %682 = vmatpush.bf16.msra.mxu0 %v523
  %683 = vmatpush.bf16.msra.mxu0 %v522
  %684 = vmatpush.bf16.msra.mxu0 %v521
  %685 = vmatmul.bf16.gmra.mxu0 %v201
  %v686 = vpop.f32.mrf.mxu0
  %v687 = vadd.f32 %v673, %v686
  %v688 = vpop.f32.mrf.mxu0
  %v689 = vadd.f32 %v675, %v688
  %690 = vdwg.mxu0
  %691 = vmatpush.bf16.msra.mxu0 %v536
  %692 = vmatpush.bf16.msra.mxu0 %v535
  %693 = vmatpush.bf16.msra.mxu0 %v534
  %694 = vmatpush.bf16.msra.mxu0 %v533
  %695 = vmatpush.bf16.msra.mxu0 %v532
  %696 = vmatpush.bf16.msra.mxu0 %v531
  %697 = vmatpush.bf16.msra.mxu0 %v530
  %698 = vmatpush.bf16.msra.mxu0 %v529
  %699 = vmatmul.bf16.gmra.mxu0 %v202
  %v700 = vpop.f32.mrf.mxu0
  %v701 = vadd.f32 %v687, %v700
  %v702 = vpop.f32.mrf.mxu0
  %v703 = vadd.f32 %v689, %v702
  %704 = vdwg.mxu0
  %705 = vmatpush.bf16.msra.mxu0 %v544
  %706 = vmatpush.bf16.msra.mxu0 %v543
  %707 = vmatpush.bf16.msra.mxu0 %v542
  %708 = vmatpush.bf16.msra.mxu0 %v541
  %709 = vmatpush.bf16.msra.mxu0 %v540
  %710 = vmatpush.bf16.msra.mxu0 %v539
  %711 = vmatpush.bf16.msra.mxu0 %v538
  %712 = vmatpush.bf16.msra.mxu0 %v537
  %713 = vmatmul.bf16.gmra.mxu0 %v203
  %v714 = vpop.f32.mrf.mxu0
  %v715 = vadd.f32 %v701, %v714
  %v716 = vpop.f32.mrf.mxu0
  %v717 = vadd.f32 %v703, %v716
  %718 = vdwg.mxu0
  %719 = vmatpush.bf16.msra.mxu0 %v552
  %720 = vmatpush.bf16.msra.mxu0 %v551
  %721 = vmatpush.bf16.msra.mxu0 %v550
  %722 = vmatpush.bf16.msra.mxu0 %v549
  %723 = vmatpush.bf16.msra.mxu0 %v548
  %724 = vmatpush.bf16.msra.mxu0 %v547
  %725 = vmatpush.bf16.msra.mxu0 %v546
  %726 = vmatpush.bf16.msra.mxu0 %v545
  %727 = vmatmul.bf16.gmra.mxu0 %v204
  %v728 = vpop.f32.mrf.mxu0
  %v729 = vadd.f32 %v715, %v728
  %v730 = vpop.f32.mrf.mxu0
  %v731 = vadd.f32 %v717, %v730
  %732 = vdwg.mxu0
  %733 = vmatpush.bf16.msra.mxu0 %v560
  %734 = vmatpush.bf16.msra.mxu0 %v559
  %735 = vmatpush.bf16.msra.mxu0 %v558
  %736 = vmatpush.bf16.msra.mxu0 %v557
  %737 = vmatpush.bf16.msra.mxu0 %v556
  %738 = vmatpush.bf16.msra.mxu0 %v555
  %739 = vmatpush.bf16.msra.mxu0 %v554
  %740 = vmatpush.bf16.msra.mxu0 %v553
  %741 = vmatmul.bf16.gmra.mxu0 %v205
  %v742 = vpop.f32.mrf.mxu0
  %v743 = vadd.f32 %v729, %v742
  %v744 = vpop.f32.mrf.mxu0
  %v745 = vadd.f32 %v731, %v744
  %746 = vdwg.mxu0
  %747 = vmatpush.bf16.msra.mxu0 %v568
  %748 = vmatpush.bf16.msra.mxu0 %v567
  %749 = vmatpush.bf16.msra.mxu0 %v566
  %750 = vmatpush.bf16.msra.mxu0 %v565
  %751 = vmatpush.bf16.msra.mxu0 %v564
  %752 = vmatpush.bf16.msra.mxu0 %v563
  %753 = vmatpush.bf16.msra.mxu0 %v562
  %754 = vmatpush.bf16.msra.mxu0 %v561
  %755 = vmatmul.bf16.gmra.mxu0 %v206
  %v756 = vpop.f32.mrf.mxu0
  %v757 = vadd.f32 %v743, %v756
  %v758 = vpop.f32.mrf.mxu0
  %v759 = vadd.f32 %v745, %v758
  %760 = vdwg.mxu0
  %761 = vmatpush.bf16.msra.mxu0 %v576
  %762 = vmatpush.bf16.msra.mxu0 %v575
  %763 = vmatpush.bf16.msra.mxu0 %v574
  %764 = vmatpush.bf16.msra.mxu0 %v573
  %765 = vmatpush.bf16.msra.mxu0 %v572
  %766 = vmatpush.bf16.msra.mxu0 %v571
  %767 = vmatpush.bf16.msra.mxu0 %v570
  %768 = vmatpush.bf16.msra.mxu0 %v569
  %769 = vmatmul.bf16.gmra.mxu0 %v207
  %v770 = vpop.f32.mrf.mxu0
  %v771 = vadd.f32 %v757, %v770
  %v772 = vpop.f32.mrf.mxu0
  %v773 = vadd.f32 %v759, %v772
  %774 = vdwg.mxu0
  %v775 = vadd.f32 %v771, %v773
  %v776 = vrot.slane %v775, 4
  %v777 = vadd.f32 %v775, %v776
  %v778 = vrot.slane %v777, 2
  %v779 = vadd.f32 %v777, %v778
  %v780 = vrot.slane %v779, 1
  %v781 = vadd.f32 %v779, %v780
  %v782 = vmul.f32 %v781, 0.125
  %v783 = vmul.f32 %v771, %v771
  %v784 = vmul.f32 %v773, %v773
  %v785 = vadd.f32 %v783, %v784
  %v786 = vrot.slane %v785, 4
  %v787 = vadd.f32 %v785, %v786
  %v788 = vrot.slane %v787, 2
  %v789 = vadd.f32 %v787, %v788
  %v790 = vrot.slane %v789, 1
  %v791 = vadd.f32 %v789, %v790
  %v792 = vmul.f32 %v791, 0.125
  %v793 = vmul.f32 %v782, %v782
  %v794 = vsub.f32 %v792, %v793
  %v795 = vmax.f32 %v794, 0.0
  %v796 = vld [vmem:[%s2] sm:$0x1]
  %v797 = vadd.f32 %v795, 1e-05
  %v798 = vrsqrt.pop %v797
  %v799 = vmul.f32 %v798, %v797
  %v800 = vmul.f32 %v799, %v798
  %v801 = vmul.f32 0.5, %v800
  %v802 = vsub.f32 1.5, %v801
  %v803 = vmul.f32 %v798, %v802
  %vm804 = vweird.f32 %v797
  %vm805 = vweird.f32 %v798
  %vm806 = vmor %vm804, %vm805
  %v807 = vsel %vm806, %v798, %v803
  %v808 = vmul.f32 %v796, %v807
  %v809 = vld [vmem:[%s3] sm:$0x1]
  %v810 = vmul.f32 %v782, %v808
  %v811 = vsub.f32 %v809, %v810
  %v813 = vperm.slane %v808, 0
  %v815 = vmul.f32 %v771, %v813
  %v816 = vmul.f32 %v773, %v813
  %v818 = vperm.slane %v811, 0
  %v820 = vadd.f32 %v815, %v818
  %v821 = vadd.f32 %v816, %v818
  %v822 = vmax.f32 %v820, 0.0
  %v823 = vmax.f32 %v821, 0.0
  %v824 = vpack.c.bf16 %v822, %v822
  %v825 = vpack.c.bf16 %v823, %v823
  %826 = vst [vmem:[%s4] sm:$0xf] %v824
  %827 = vst [vmem:[%s4 + $0x4] sm:$0xf] %v825
  // Predicated region
  $region18: #{resnet_forward.11} parent=0 // pred_check
    _
  $region19: #{resnet_forward.11} parent=0 // pred_check_branch
    %829 = sbr.rel (0) target = $region21
  $region20: #{resnet_forward.11} parent=0 // pred_region
    _
  $region21: #{resnet_forward.11} parent=0 // pred_fallthru
    _
  // Predicated region
  $region22: #{resnet_forward.11} parent=0 // pred_check
    _
  $region23: #{resnet_forward.11} parent=0 // pred_check_branch
    %831 = sbr.rel (0) target = $region25
  $region24: #{resnet_forward.11} parent=0 // pred_region
    _
  $region25: #{resnet_forward.11} parent=0 // pred_fallthru
    _

// kernel: resnet_forward.13
$region0: #{resnet_forward.13}
  #allocation0 [shape = 'u32[]', space=smem, size = 0x4, offset = 0x4, fixed_abs, tag = 'smem constant byte address 0x4 - core index']
  #allocation1 [shape = 'u32[72,128]{1,0:T(1,128)}', space=vmem, size = 0x9000, scoped, tag = 'internal scratch']
  %s0 = inlined_call_operand.vmem [shape: bf16[16,1152], index: 0, kind: input, shape index: {}]
  %s1 = inlined_call_operand.vmem [shape: bf16[1152,128], index: 1, kind: input, shape index: {}]
  %s2 = inlined_call_operand.vmem [shape: f32[1,128], index: 2, kind: input, shape index: {}]
  %s3 = inlined_call_operand.vmem [shape: f32[1,128], index: 3, kind: input, shape index: {}]
  %s4 = inlined_call_operand.vmem [shape: bf16[16,128], index: 4, kind: input, shape index: {}]
  %s5 = inlined_call_operand.vmem [shape: bf16[16,128], index: 5, kind: output, shape index: {}]
  %s6 = sld [smem:[#allocation0]]
  $region30: #{resnet_forward.13} parent=0
    _
  %s8 = ssub.s32 1, %s6
  %s9 = scalar_select 0, %s8, %s6
  // Predicated region
  $region2: #{resnet_forward.13} parent=0 // pred_check
    _
  $region3: #{resnet_forward.13} parent=0 // pred_check_branch
    %11 = sbr.rel (0) target = $region5
  $region4: #{resnet_forward.13} parent=0 // pred_region
    _
  $region5: #{resnet_forward.13} parent=0 // pred_fallthru
    _
  // Predicated region
  $region6: #{resnet_forward.13} parent=0 // pred_check
    _
  $region7: #{resnet_forward.13} parent=0 // pred_check_branch
    %13 = sbr.rel (0) target = $region9
  $region8: #{resnet_forward.13} parent=0 // pred_region
    _
  $region9: #{resnet_forward.13} parent=0 // pred_fallthru
    _
  // Predicated region
  $region10: #{resnet_forward.13} parent=0 // pred_check
    _
  $region11: #{resnet_forward.13} parent=0 // pred_check_branch
    %15 = sbr.rel (0) target = $region13
  $region12: #{resnet_forward.13} parent=0 // pred_region
    _
  $region13: #{resnet_forward.13} parent=0 // pred_fallthru
    _
  // Predicated region
  $region14: #{resnet_forward.13} parent=0 // pred_check
    _
  $region15: #{resnet_forward.13} parent=0 // pred_check_branch
    %17 = sbr.rel (0) target = $region17
  $region16: #{resnet_forward.13} parent=0 // pred_region
    _
  $region17: #{resnet_forward.13} parent=0 // pred_fallthru
    _
  // Predicated region
  $region18: #{resnet_forward.13} parent=0 // pred_check
    _
  $region19: #{resnet_forward.13} parent=0 // pred_check_branch
    %19 = sbr.rel (0) target = $region21
  $region20: #{resnet_forward.13} parent=0 // pred_region
    _
  $region21: #{resnet_forward.13} parent=0 // pred_fallthru
    _
  %v20 = vld [vmem:[%s0] sm:$0xff]
  %v21 = vld [vmem:[%s0 + $0x8] sm:$0xff]
  %v22 = vld [vmem:[%s0 + $0x10] sm:$0xff]
  %v23 = vld [vmem:[%s0 + $0x18] sm:$0xff]
  %v24 = vld [vmem:[%s0 + $0x20] sm:$0xf]
  %v25 = vld [vmem:[%s0 + $0x24] sm:$0xff]
  %v26 = vld [vmem:[%s0 + $0x2c] sm:$0xff]
  %v27 = vld [vmem:[%s0 + $0x34] sm:$0xff]
  %v28 = vld [vmem:[%s0 + $0x3c] sm:$0xff]
  %v29 = vld [vmem:[%s0 + $0x44] sm:$0xf]
  %v30 = vld [vmem:[%s1] sm:$0xf]
  %v31 = vld [vmem:[%s1 + $0x4] sm:$0xf]
  %v32 = vld [vmem:[%s1 + $0x8] sm:$0xf]
  %v33 = vld [vmem:[%s1 + $0xc] sm:$0xf]
  %v34 = vld [vmem:[%s1 + $0x10] sm:$0xf]
  %v35 = vld [vmem:[%s1 + $0x14] sm:$0xf]
  %v36 = vld [vmem:[%s1 + $0x18] sm:$0xf]
  %v37 = vld [vmem:[%s1 + $0x1c] sm:$0xf]
  %v38 = vld [vmem:[%s1 + $0x20] sm:$0xf]
  %v39 = vld [vmem:[%s1 + $0x24] sm:$0xf]
  %v40 = vld [vmem:[%s1 + $0x28] sm:$0xf]
  %v41 = vld [vmem:[%s1 + $0x2c] sm:$0xf]
  %v42 = vld [vmem:[%s1 + $0x30] sm:$0xf]
  %v43 = vld [vmem:[%s1 + $0x34] sm:$0xf]
  %v44 = vld [vmem:[%s1 + $0x38] sm:$0xf]
  %v45 = vld [vmem:[%s1 + $0x3c] sm:$0xf]
  %v46 = vld [vmem:[%s1 + $0x40] sm:$0xf]
  %v47 = vld [vmem:[%s1 + $0x44] sm:$0xf]
  %v48 = vld [vmem:[%s1 + $0x48] sm:$0xf]
  %v49 = vld [vmem:[%s1 + $0x4c] sm:$0xf]
  %v50 = vld [vmem:[%s1 + $0x50] sm:$0xf]
  %v51 = vld [vmem:[%s1 + $0x54] sm:$0xf]
  %v52 = vld [vmem:[%s1 + $0x58] sm:$0xf]
  %v53 = vld [vmem:[%s1 + $0x5c] sm:$0xf]
  %v54 = vld [vmem:[%s1 + $0x60] sm:$0xf]
  %v55 = vld [vmem:[%s1 + $0x64] sm:$0xf]
  %v56 = vld [vmem:[%s1 + $0x68] sm:$0xf]
  %v57 = vld [vmem:[%s1 + $0x6c] sm:$0xf]
  %v58 = vld [vmem:[%s1 + $0x70] sm:$0xf]
  %v59 = vld [vmem:[%s1 + $0x74] sm:$0xf]
  %v60 = vld [vmem:[%s1 + $0x78] sm:$0xf]
  %v61 = vld [vmem:[%s1 + $0x7c] sm:$0xf]
  %v62 = vld [vmem:[%s1 + $0x80] sm:$0xf]
  %v63 = vld [vmem:[%s1 + $0x84] sm:$0xf]
  %v64 = vld [vmem:[%s1 + $0x88] sm:$0xf]
  %v65 = vld [vmem:[%s1 + $0x8c] sm:$0xf]
  %v66 = vld [vmem:[%s1 + $0x90] sm:$0xf]
  %v67 = vld [vmem:[%s1 + $0x94] sm:$0xf]
  %v68 = vld [vmem:[%s1 + $0x98] sm:$0xf]
  %v69 = vld [vmem:[%s1 + $0x9c] sm:$0xf]
  %v70 = vld [vmem:[%s1 + $0xa0] sm:$0xf]
  %v71 = vld [vmem:[%s1 + $0xa4] sm:$0xf]
  %v72 = vld [vmem:[%s1 + $0xa8] sm:$0xf]
  %v73 = vld [vmem:[%s1 + $0xac] sm:$0xf]
  %v74 = vld [vmem:[%s1 + $0xb0] sm:$0xf]
  %v75 = vld [vmem:[%s1 + $0xb4] sm:$0xf]
  %v76 = vld [vmem:[%s1 + $0xb8] sm:$0xf]
  %v77 = vld [vmem:[%s1 + $0xbc] sm:$0xf]
  %v78 = vld [vmem:[%s1 + $0xc0] sm:$0xf]
  %v79 = vld [vmem:[%s1 + $0xc4] sm:$0xf]
  %v80 = vld [vmem:[%s1 + $0xc8] sm:$0xf]
  %v81 = vld [vmem:[%s1 + $0xcc] sm:$0xf]
  %v82 = vld [vmem:[%s1 + $0xd0] sm:$0xf]
  %v83 = vld [vmem:[%s1 + $0xd4] sm:$0xf]
  %v84 = vld [vmem:[%s1 + $0xd8] sm:$0xf]
  %v85 = vld [vmem:[%s1 + $0xdc] sm:$0xf]
  %v86 = vld [vmem:[%s1 + $0xe0] sm:$0xf]
  %v87 = vld [vmem:[%s1 + $0xe4] sm:$0xf]
  %v88 = vld [vmem:[%s1 + $0xe8] sm:$0xf]
  %v89 = vld [vmem:[%s1 + $0xec] sm:$0xf]
  %v90 = vld [vmem:[%s1 + $0xf0] sm:$0xf]
  %v91 = vld [vmem:[%s1 + $0xf4] sm:$0xf]
  %v92 = vld [vmem:[%s1 + $0xf8] sm:$0xf]
  %v93 = vld [vmem:[%s1 + $0xfc] sm:$0xf]
  %v94 = vld [vmem:[%s1 + $0x100] sm:$0xf]
  %v95 = vld [vmem:[%s1 + $0x104] sm:$0xf]
  %v96 = vld [vmem:[%s1 + $0x108] sm:$0xf]
  %v97 = vld [vmem:[%s1 + $0x10c] sm:$0xf]
  %v98 = vld [vmem:[%s1 + $0x110] sm:$0xf]
  %v99 = vld [vmem:[%s1 + $0x114] sm:$0xf]
  %v100 = vld [vmem:[%s1 + $0x118] sm:$0xf]
  %v101 = vld [vmem:[%s1 + $0x11c] sm:$0xf]
  %v102 = vld [vmem:[%s1 + $0x120] sm:$0xf]
  %v103 = vld [vmem:[%s1 + $0x124] sm:$0xf]
  %v104 = vld [vmem:[%s1 + $0x128] sm:$0xf]
  %v105 = vld [vmem:[%s1 + $0x12c] sm:$0xf]
  %v106 = vld [vmem:[%s1 + $0x130] sm:$0xf]
  %v107 = vld [vmem:[%s1 + $0x134] sm:$0xf]
  %v108 = vld [vmem:[%s1 + $0x138] sm:$0xf]
  %v109 = vld [vmem:[%s1 + $0x13c] sm:$0xf]
  %v110 = vld [vmem:[%s1 + $0x140] sm:$0xf]
  %v111 = vld [vmem:[%s1 + $0x144] sm:$0xf]
  %v112 = vld [vmem:[%s1 + $0x148] sm:$0xf]
  %v113 = vld [vmem:[%s1 + $0x14c] sm:$0xf]
  %v114 = vld [vmem:[%s1 + $0x150] sm:$0xf]
  %v115 = vld [vmem:[%s1 + $0x154] sm:$0xf]
  %v116 = vld [vmem:[%s1 + $0x158] sm:$0xf]
  %v117 = vld [vmem:[%s1 + $0x15c] sm:$0xf]
  %v118 = vld [vmem:[%s1 + $0x160] sm:$0xf]
  %v119 = vld [vmem:[%s1 + $0x164] sm:$0xf]
  %v120 = vld [vmem:[%s1 + $0x168] sm:$0xf]
  %v121 = vld [vmem:[%s1 + $0x16c] sm:$0xf]
  %v122 = vld [vmem:[%s1 + $0x170] sm:$0xf]
  %v123 = vld [vmem:[%s1 + $0x174] sm:$0xf]
  %v124 = vld [vmem:[%s1 + $0x178] sm:$0xf]
  %v125 = vld [vmem:[%s1 + $0x17c] sm:$0xf]
  %v126 = vld [vmem:[%s1 + $0x180] sm:$0xf]
  %v127 = vld [vmem:[%s1 + $0x184] sm:$0xf]
  %v128 = vld [vmem:[%s1 + $0x188] sm:$0xf]
  %v129 = vld [vmem:[%s1 + $0x18c] sm:$0xf]
  %v130 = vld [vmem:[%s1 + $0x190] sm:$0xf]
  %v131 = vld [vmem:[%s1 + $0x194] sm:$0xf]
  %v132 = vld [vmem:[%s1 + $0x198] sm:$0xf]
  %v133 = vld [vmem:[%s1 + $0x19c] sm:$0xf]
  %v134 = vld [vmem:[%s1 + $0x1a0] sm:$0xf]
  %v135 = vld [vmem:[%s1 + $0x1a4] sm:$0xf]
  %v136 = vld [vmem:[%s1 + $0x1a8] sm:$0xf]
  %v137 = vld [vmem:[%s1 + $0x1ac] sm:$0xf]
  %v138 = vld [vmem:[%s1 + $0x1b0] sm:$0xf]
  %v139 = vld [vmem:[%s1 + $0x1b4] sm:$0xf]
  %v140 = vld [vmem:[%s1 + $0x1b8] sm:$0xf]
  %v141 = vld [vmem:[%s1 + $0x1bc] sm:$0xf]
  %v142 = vld [vmem:[%s1 + $0x1c0] sm:$0xf]
  %v143 = vld [vmem:[%s1 + $0x1c4] sm:$0xf]
  %v144 = vld [vmem:[%s1 + $0x1c8] sm:$0xf]
  %v145 = vld [vmem:[%s1 + $0x1cc] sm:$0xf]
  %v146 = vld [vmem:[%s1 + $0x1d0] sm:$0xf]
  %v147 = vld [vmem:[%s1 + $0x1d4] sm:$0xf]
  %v148 = vld [vmem:[%s1 + $0x1d8] sm:$0xf]
  %v149 = vld [vmem:[%s1 + $0x1dc] sm:$0xf]
  %v150 = vld [vmem:[%s1 + $0x1e0] sm:$0xf]
  %v151 = vld [vmem:[%s1 + $0x1e4] sm:$0xf]
  %v152 = vld [vmem:[%s1 + $0x1e8] sm:$0xf]
  %v153 = vld [vmem:[%s1 + $0x1ec] sm:$0xf]
  %v154 = vld [vmem:[%s1 + $0x1f0] sm:$0xf]
  %v155 = vld [vmem:[%s1 + $0x1f4] sm:$0xf]
  %v156 = vld [vmem:[%s1 + $0x1f8] sm:$0xf]
  %v157 = vld [vmem:[%s1 + $0x1fc] sm:$0xf]
  %v158 = vld [vmem:[%s1 + $0x200] sm:$0xf]
  %v159 = vld [vmem:[%s1 + $0x204] sm:$0xf]
  %v160 = vld [vmem:[%s1 + $0x208] sm:$0xf]
  %v161 = vld [vmem:[%s1 + $0x20c] sm:$0xf]
  %v162 = vld [vmem:[%s1 + $0x210] sm:$0xf]
  %v163 = vld [vmem:[%s1 + $0x214] sm:$0xf]
  %v164 = vld [vmem:[%s1 + $0x218] sm:$0xf]
  %v165 = vld [vmem:[%s1 + $0x21c] sm:$0xf]
  %v166 = vld [vmem:[%s1 + $0x220] sm:$0xf]
  %v167 = vld [vmem:[%s1 + $0x224] sm:$0xf]
  %v168 = vld [vmem:[%s1 + $0x228] sm:$0xf]
  %v169 = vld [vmem:[%s1 + $0x22c] sm:$0xf]
  %v170 = vld [vmem:[%s1 + $0x230] sm:$0xf]
  %v171 = vld [vmem:[%s1 + $0x234] sm:$0xf]
  %v172 = vld [vmem:[%s1 + $0x238] sm:$0xf]
  %v173 = vld [vmem:[%s1 + $0x23c] sm:$0xf]
  %v184 = vunpack.c.l.b16 %v20
  %v185 = vunpack.c.h.b16 %v20
  %v186 = vunpack.c.l.b16 %v21
  %v187 = vunpack.c.h.b16 %v21
  %v188 = vunpack.c.l.b16 %v22
  %v189 = vunpack.c.h.b16 %v22
  %v190 = vunpack.c.l.b16 %v23
  %v191 = vunpack.c.h.b16 %v23
  %v192 = vunpack.c.l.b16 %v24
  %v193 = vunpack.c.l.b16 %v25
  %v194 = vunpack.c.h.b16 %v25
  %v195 = vunpack.c.l.b16 %v26
  %v196 = vunpack.c.h.b16 %v26
  %v197 = vunpack.c.l.b16 %v27
  %v198 = vunpack.c.h.b16 %v27
  %v199 = vunpack.c.l.b16 %v28
  %v200 = vunpack.c.h.b16 %v28
  %v201 = vunpack.c.l.b16 %v29
  %v202 = vpack.c.b16 %v193, %v184
  %v203 = vpack.c.b16 %v194, %v185
  %v204 = vpack.c.b16 %v195, %v186
  %v205 = vpack.c.b16 %v196, %v187
  %v206 = vpack.c.b16 %v197, %v188
  %v207 = vpack.c.b16 %v198, %v189
  %v208 = vpack.c.b16 %v199, %v190
  %v209 = vpack.c.b16 %v200, %v191
  %v210 = vpack.c.b16 %v201, %v192
  %v364 = vunpack.c.l.b16 %v30
  %v365 = vunpack.c.l.b16 %v31
  %v366 = vunpack.c.l.b16 %v32
  %v367 = vunpack.c.l.b16 %v33
  %v368 = vunpack.c.l.b16 %v34
  %v369 = vunpack.c.l.b16 %v35
  %v370 = vunpack.c.l.b16 %v36
  %v371 = vunpack.c.l.b16 %v37
  %v372 = vunpack.c.l.b16 %v38
  %v373 = vunpack.c.l.b16 %v39
  %v374 = vunpack.c.l.b16 %v40
  %v375 = vunpack.c.l.b16 %v41
  %v376 = vunpack.c.l.b16 %v42
  %v377 = vunpack.c.l.b16 %v43
  %v378 = vunpack.c.l.b16 %v44
  %v379 = vunpack.c.l.b16 %v45
  %v380 = vunpack.c.l.b16 %v46
  %v381 = vunpack.c.l.b16 %v47
  %v382 = vunpack.c.l.b16 %v48
  %v383 = vunpack.c.l.b16 %v49
  %v384 = vunpack.c.l.b16 %v50
  %v385 = vunpack.c.l.b16 %v51
  %v386 = vunpack.c.l.b16 %v52
  %v387 = vunpack.c.l.b16 %v53
  %v388 = vunpack.c.l.b16 %v54
  %v389 = vunpack.c.l.b16 %v55
  %v390 = vunpack.c.l.b16 %v56
  %v391 = vunpack.c.l.b16 %v57
  %v392 = vunpack.c.l.b16 %v58
  %v393 = vunpack.c.l.b16 %v59
  %v394 = vunpack.c.l.b16 %v60
  %v395 = vunpack.c.l.b16 %v61
  %v396 = vunpack.c.l.b16 %v62
  %v397 = vunpack.c.l.b16 %v63
  %v398 = vunpack.c.l.b16 %v64
  %v399 = vunpack.c.l.b16 %v65
  %v400 = vunpack.c.l.b16 %v66
  %v401 = vunpack.c.l.b16 %v67
  %v402 = vunpack.c.l.b16 %v68
  %v403 = vunpack.c.l.b16 %v69
  %v404 = vunpack.c.l.b16 %v70
  %v405 = vunpack.c.l.b16 %v71
  %v406 = vunpack.c.l.b16 %v72
  %v407 = vunpack.c.l.b16 %v73
  %v408 = vunpack.c.l.b16 %v74
  %v409 = vunpack.c.l.b16 %v75
  %v410 = vunpack.c.l.b16 %v76
  %v411 = vunpack.c.l.b16 %v77
  %v412 = vunpack.c.l.b16 %v78
  %v413 = vunpack.c.l.b16 %v79
  %v414 = vunpack.c.l.b16 %v80
  %v415 = vunpack.c.l.b16 %v81
  %v416 = vunpack.c.l.b16 %v82
  %v417 = vunpack.c.l.b16 %v83
  %v418 = vunpack.c.l.b16 %v84
  %v419 = vunpack.c.l.b16 %v85
  %v420 = vunpack.c.l.b16 %v86
  %v421 = vunpack.c.l.b16 %v87
  %v422 = vunpack.c.l.b16 %v88
  %v423 = vunpack.c.l.b16 %v89
  %v424 = vunpack.c.l.b16 %v90
  %v425 = vunpack.c.l.b16 %v91
  %v426 = vunpack.c.l.b16 %v92
  %v427 = vunpack.c.l.b16 %v93
  %v428 = vunpack.c.l.b16 %v94
  %v429 = vunpack.c.l.b16 %v95
  %v430 = vunpack.c.l.b16 %v96
  %v431 = vunpack.c.l.b16 %v97
  %v432 = vunpack.c.l.b16 %v98
  %v433 = vunpack.c.l.b16 %v99
  %v434 = vunpack.c.l.b16 %v100
  %v435 = vunpack.c.l.b16 %v101
  %v436 = vunpack.c.l.b16 %v102
  %v437 = vunpack.c.l.b16 %v103
  %v438 = vunpack.c.l.b16 %v104
  %v439 = vunpack.c.l.b16 %v105
  %v440 = vunpack.c.l.b16 %v106
  %v441 = vunpack.c.l.b16 %v107
  %v442 = vunpack.c.l.b16 %v108
  %v443 = vunpack.c.l.b16 %v109
  %v444 = vunpack.c.l.b16 %v110
  %v445 = vunpack.c.l.b16 %v111
  %v446 = vunpack.c.l.b16 %v112
  %v447 = vunpack.c.l.b16 %v113
  %v448 = vunpack.c.l.b16 %v114
  %v449 = vunpack.c.l.b16 %v115
  %v450 = vunpack.c.l.b16 %v116
  %v451 = vunpack.c.l.b16 %v117
  %v452 = vunpack.c.l.b16 %v118
  %v453 = vunpack.c.l.b16 %v119
  %v454 = vunpack.c.l.b16 %v120
  %v455 = vunpack.c.l.b16 %v121
  %v456 = vunpack.c.l.b16 %v122
  %v457 = vunpack.c.l.b16 %v123
  %v458 = vunpack.c.l.b16 %v124
  %v459 = vunpack.c.l.b16 %v125
  %v460 = vunpack.c.l.b16 %v126
  %v461 = vunpack.c.l.b16 %v127
  %v462 = vunpack.c.l.b16 %v128
  %v463 = vunpack.c.l.b16 %v129
  %v464 = vunpack.c.l.b16 %v130
  %v465 = vunpack.c.l.b16 %v131
  %v466 = vunpack.c.l.b16 %v132
  %v467 = vunpack.c.l.b16 %v133
  %v468 = vunpack.c.l.b16 %v134
  %v469 = vunpack.c.l.b16 %v135
  %v470 = vunpack.c.l.b16 %v136
  %v471 = vunpack.c.l.b16 %v137
  %v472 = vunpack.c.l.b16 %v138
  %v473 = vunpack.c.l.b16 %v139
  %v474 = vunpack.c.l.b16 %v140
  %v475 = vunpack.c.l.b16 %v141
  %v476 = vunpack.c.l.b16 %v142
  %v477 = vunpack.c.l.b16 %v143
  %v478 = vunpack.c.l.b16 %v144
  %v479 = vunpack.c.l.b16 %v145
  %v480 = vunpack.c.l.b16 %v146
  %v481 = vunpack.c.l.b16 %v147
  %v482 = vunpack.c.l.b16 %v148
  %v483 = vunpack.c.l.b16 %v149
  %v484 = vunpack.c.l.b16 %v150
  %v485 = vunpack.c.l.b16 %v151
  %v486 = vunpack.c.l.b16 %v152
  %v487 = vunpack.c.l.b16 %v153
  %v488 = vunpack.c.l.b16 %v154
  %v489 = vunpack.c.l.b16 %v155
  %v490 = vunpack.c.l.b16 %v156
  %v491 = vunpack.c.l.b16 %v157
  %v492 = vunpack.c.l.b16 %v158
  %v493 = vunpack.c.l.b16 %v159
  %v494 = vunpack.c.l.b16 %v160
  %v495 = vunpack.c.l.b16 %v161
  %v496 = vunpack.c.l.b16 %v162
  %v497 = vunpack.c.l.b16 %v163
  %v498 = vunpack.c.l.b16 %v164
  %v499 = vunpack.c.l.b16 %v165
  %v500 = vunpack.c.l.b16 %v166
  %v501 = vunpack.c.l.b16 %v167
  %v502 = vunpack.c.l.b16 %v168
  %v503 = vunpack.c.l.b16 %v169
  %v504 = vunpack.c.l.b16 %v170
  %v505 = vunpack.c.l.b16 %v171
  %v506 = vunpack.c.l.b16 %v172
  %v507 = vunpack.c.l.b16 %v173
  %v508 = vpack.c.b16 %v365, %v364
  %v509 = vpack.c.b16 %v367, %v366
  %v510 = vpack.c.b16 %v369, %v368
  %v511 = vpack.c.b16 %v371, %v370
  %v512 = vpack.c.b16 %v373, %v372
  %v513 = vpack.c.b16 %v375, %v374
  %v514 = vpack.c.b16 %v377, %v376
  %v515 = vpack.c.b16 %v379, %v378
  %v516 = vpack.c.b16 %v381, %v380
  %v517 = vpack.c.b16 %v383, %v382
  %v518 = vpack.c.b16 %v385, %v384
  %v519 = vpack.c.b16 %v387, %v386
  %v520 = vpack.c.b16 %v389, %v388
  %v521 = vpack.c.b16 %v391, %v390
  %v522 = vpack.c.b16 %v393, %v392
  %v523 = vpack.c.b16 %v395, %v394
  %v524 = vpack.c.b16 %v397, %v396
  %v525 = vpack.c.b16 %v399, %v398
  %v526 = vpack.c.b16 %v401, %v400
  %v527 = vpack.c.b16 %v403, %v402
  %v528 = vpack.c.b16 %v405, %v404
  %v529 = vpack.c.b16 %v407, %v406
  %v530 = vpack.c.b16 %v409, %v408
  %v531 = vpack.c.b16 %v411, %v410
  %v532 = vpack.c.b16 %v413, %v412
  %v533 = vpack.c.b16 %v415, %v414
  %v534 = vpack.c.b16 %v417, %v416
  %v535 = vpack.c.b16 %v419, %v418
  %v536 = vpack.c.b16 %v421, %v420
  %v537 = vpack.c.b16 %v423, %v422
  %v538 = vpack.c.b16 %v425, %v424
  %v539 = vpack.c.b16 %v427, %v426
  %v540 = vpack.c.b16 %v429, %v428
  %v541 = vpack.c.b16 %v431, %v430
  %v542 = vpack.c.b16 %v433, %v432
  %v543 = vpack.c.b16 %v435, %v434
  %v544 = vpack.c.b16 %v437, %v436
  %v545 = vpack.c.b16 %v439, %v438
  %v546 = vpack.c.b16 %v441, %v440
  %v547 = vpack.c.b16 %v443, %v442
  %v548 = vpack.c.b16 %v445, %v444
  %v549 = vpack.c.b16 %v447, %v446
  %v550 = vpack.c.b16 %v449, %v448
  %v551 = vpack.c.b16 %v451, %v450
  %v552 = vpack.c.b16 %v453, %v452
  %v553 = vpack.c.b16 %v455, %v454
  %v554 = vpack.c.b16 %v457, %v456
  %v555 = vpack.c.b16 %v459, %v458
  %v556 = vpack.c.b16 %v461, %v460
  %v557 = vpack.c.b16 %v463, %v462
  %v558 = vpack.c.b16 %v465, %v464
  %v559 = vpack.c.b16 %v467, %v466
  %v560 = vpack.c.b16 %v469, %v468
  %v561 = vpack.c.b16 %v471, %v470
  %v562 = vpack.c.b16 %v473, %v472
  %v563 = vpack.c.b16 %v475, %v474
  %v564 = vpack.c.b16 %v477, %v476
  %v565 = vpack.c.b16 %v479, %v478
  %v566 = vpack.c.b16 %v481, %v480
  %v567 = vpack.c.b16 %v483, %v482
  %v568 = vpack.c.b16 %v485, %v484
  %v569 = vpack.c.b16 %v487, %v486
  %v570 = vpack.c.b16 %v489, %v488
  %v571 = vpack.c.b16 %v491, %v490
  %v572 = vpack.c.b16 %v493, %v492
  %v573 = vpack.c.b16 %v495, %v494
  %v574 = vpack.c.b16 %v497, %v496
  %v575 = vpack.c.b16 %v499, %v498
  %v576 = vpack.c.b16 %v501, %v500
  %v577 = vpack.c.b16 %v503, %v502
  %v578 = vpack.c.b16 %v505, %v504
  %v579 = vpack.c.b16 %v507, %v506
  %652 = vmatpush.bf16.msra.mxu0 %v515
  %653 = vmatpush.bf16.msra.mxu0 %v514
  %654 = vmatpush.bf16.msra.mxu0 %v513
  %655 = vmatpush.bf16.msra.mxu0 %v512
  %656 = vmatpush.bf16.msra.mxu0 %v511
  %657 = vmatpush.bf16.msra.mxu0 %v510
  %658 = vmatpush.bf16.msra.mxu0 %v509
  %659 = vmatpush.bf16.msra.mxu0 %v508
  %660 = vmatmul.bf16.gmra.mxu0 %v202
  %v661 = vpop.f32.mrf.mxu0
  %v662 = vadd.f32 0.0, %v661
  %v663 = vpop.f32.mrf.mxu0
  %v664 = vadd.f32 0.0, %v663
  %665 = vdwg.mxu0
  %666 = vmatpush.bf16.msra.mxu0 %v523
  %667 = vmatpush.bf16.msra.mxu0 %v522
  %668 = vmatpush.bf16.msra.mxu0 %v521
  %669 = vmatpush.bf16.msra.mxu0 %v520
  %670 = vmatpush.bf16.msra.mxu0 %v519
  %671 = vmatpush.bf16.msra.mxu0 %v518
  %672 = vmatpush.bf16.msra.mxu0 %v517
  %673 = vmatpush.bf16.msra.mxu0 %v516
  %674 = vmatmul.bf16.gmra.mxu0 %v203
  %v675 = vpop.f32.mrf.mxu0
  %v676 = vadd.f32 %v662, %v675
  %v677 = vpop.f32.mrf.mxu0
  %v678 = vadd.f32 %v664, %v677
  %679 = vdwg.mxu0
  %680 = vmatpush.bf16.msra.mxu0 %v531
  %681 = vmatpush.bf16.msra.mxu0 %v530
  %682 = vmatpush.bf16.msra.mxu0 %v529
  %683 = vmatpush.bf16.msra.mxu0 %v528
  %684 = vmatpush.bf16.msra.mxu0 %v527
  %685 = vmatpush.bf16.msra.mxu0 %v526
  %686 = vmatpush.bf16.msra.mxu0 %v525
  %687 = vmatpush.bf16.msra.mxu0 %v524
  %688 = vmatmul.bf16.gmra.mxu0 %v204
  %v689 = vpop.f32.mrf.mxu0
  %v690 = vadd.f32 %v676, %v689
  %v691 = vpop.f32.mrf.mxu0
  %v692 = vadd.f32 %v678, %v691
  %693 = vdwg.mxu0
  %694 = vmatpush.bf16.msra.mxu0 %v539
  %695 = vmatpush.bf16.msra.mxu0 %v538
  %696 = vmatpush.bf16.msra.mxu0 %v537
  %697 = vmatpush.bf16.msra.mxu0 %v536
  %698 = vmatpush.bf16.msra.mxu0 %v535
  %699 = vmatpush.bf16.msra.mxu0 %v534
  %700 = vmatpush.bf16.msra.mxu0 %v533
  %701 = vmatpush.bf16.msra.mxu0 %v532
  %702 = vmatmul.bf16.gmra.mxu0 %v205
  %v703 = vpop.f32.mrf.mxu0
  %v704 = vadd.f32 %v690, %v703
  %v705 = vpop.f32.mrf.mxu0
  %v706 = vadd.f32 %v692, %v705
  %707 = vdwg.mxu0
  %708 = vmatpush.bf16.msra.mxu0 %v547
  %709 = vmatpush.bf16.msra.mxu0 %v546
  %710 = vmatpush.bf16.msra.mxu0 %v545
  %711 = vmatpush.bf16.msra.mxu0 %v544
  %712 = vmatpush.bf16.msra.mxu0 %v543
  %713 = vmatpush.bf16.msra.mxu0 %v542
  %714 = vmatpush.bf16.msra.mxu0 %v541
  %715 = vmatpush.bf16.msra.mxu0 %v540
  %716 = vmatmul.bf16.gmra.mxu0 %v206
  %v717 = vpop.f32.mrf.mxu0
  %v718 = vadd.f32 %v704, %v717
  %v719 = vpop.f32.mrf.mxu0
  %v720 = vadd.f32 %v706, %v719
  %721 = vdwg.mxu0
  %722 = vmatpush.bf16.msra.mxu0 %v555
  %723 = vmatpush.bf16.msra.mxu0 %v554
  %724 = vmatpush.bf16.msra.mxu0 %v553
  %725 = vmatpush.bf16.msra.mxu0 %v552
  %726 = vmatpush.bf16.msra.mxu0 %v551
  %727 = vmatpush.bf16.msra.mxu0 %v550
  %728 = vmatpush.bf16.msra.mxu0 %v549
  %729 = vmatpush.bf16.msra.mxu0 %v548
  %730 = vmatmul.bf16.gmra.mxu0 %v207
  %v731 = vpop.f32.mrf.mxu0
  %v732 = vadd.f32 %v718, %v731
  %v733 = vpop.f32.mrf.mxu0
  %v734 = vadd.f32 %v720, %v733
  %735 = vdwg.mxu0
  %736 = vmatpush.bf16.msra.mxu0 %v563
  %737 = vmatpush.bf16.msra.mxu0 %v562
  %738 = vmatpush.bf16.msra.mxu0 %v561
  %739 = vmatpush.bf16.msra.mxu0 %v560
  %740 = vmatpush.bf16.msra.mxu0 %v559
  %741 = vmatpush.bf16.msra.mxu0 %v558
  %742 = vmatpush.bf16.msra.mxu0 %v557
  %743 = vmatpush.bf16.msra.mxu0 %v556
  %744 = vmatmul.bf16.gmra.mxu0 %v208
  %v745 = vpop.f32.mrf.mxu0
  %v746 = vadd.f32 %v732, %v745
  %v747 = vpop.f32.mrf.mxu0
  %v748 = vadd.f32 %v734, %v747
  %749 = vdwg.mxu0
  %750 = vmatpush.bf16.msra.mxu0 %v571
  %751 = vmatpush.bf16.msra.mxu0 %v570
  %752 = vmatpush.bf16.msra.mxu0 %v569
  %753 = vmatpush.bf16.msra.mxu0 %v568
  %754 = vmatpush.bf16.msra.mxu0 %v567
  %755 = vmatpush.bf16.msra.mxu0 %v566
  %756 = vmatpush.bf16.msra.mxu0 %v565
  %757 = vmatpush.bf16.msra.mxu0 %v564
  %758 = vmatmul.bf16.gmra.mxu0 %v209
  %v759 = vpop.f32.mrf.mxu0
  %v760 = vadd.f32 %v746, %v759
  %v761 = vpop.f32.mrf.mxu0
  %v762 = vadd.f32 %v748, %v761
  %763 = vdwg.mxu0
  %764 = vmatpush.bf16.msra.mxu0 %v579
  %765 = vmatpush.bf16.msra.mxu0 %v578
  %766 = vmatpush.bf16.msra.mxu0 %v577
  %767 = vmatpush.bf16.msra.mxu0 %v576
  %768 = vmatpush.bf16.msra.mxu0 %v575
  %769 = vmatpush.bf16.msra.mxu0 %v574
  %770 = vmatpush.bf16.msra.mxu0 %v573
  %771 = vmatpush.bf16.msra.mxu0 %v572
  %772 = vmatmul.bf16.gmra.mxu0 %v210
  %v773 = vpop.f32.mrf.mxu0
  %v774 = vadd.f32 %v760, %v773
  %v775 = vpop.f32.mrf.mxu0
  %v776 = vadd.f32 %v762, %v775
  %777 = vdwg.mxu0
  %v778 = vadd.f32 %v774, %v776
  %v779 = vrot.slane %v778, 4
  %v780 = vadd.f32 %v778, %v779
  %v781 = vrot.slane %v780, 2
  %v782 = vadd.f32 %v780, %v781
  %v783 = vrot.slane %v782, 1
  %v784 = vadd.f32 %v782, %v783
  %v785 = vmul.f32 %v784, 0.125
  %v786 = vmul.f32 %v774, %v774
  %v787 = vmul.f32 %v776, %v776
  %v788 = vadd.f32 %v786, %v787
  %v789 = vrot.slane %v788, 4
  %v790 = vadd.f32 %v788, %v789
  %v791 = vrot.slane %v790, 2
  %v792 = vadd.f32 %v790, %v791
  %v793 = vrot.slane %v792, 1
  %v794 = vadd.f32 %v792, %v793
  %v795 = vmul.f32 %v794, 0.125
  %v796 = vmul.f32 %v785, %v785
  %v797 = vsub.f32 %v795, %v796
  %v798 = vmax.f32 %v797, 0.0
  %v799 = vld [vmem:[%s2] sm:$0x1]
  %v800 = vadd.f32 %v798, 1e-05
  %v801 = vrsqrt.pop %v800
  %v802 = vmul.f32 %v801, %v800
  %v803 = vmul.f32 %v802, %v801
  %v804 = vmul.f32 0.5, %v803
  %v805 = vsub.f32 1.5, %v804
  %v806 = vmul.f32 %v801, %v805
  %vm807 = vweird.f32 %v800
  %vm808 = vweird.f32 %v801
  %vm809 = vmor %vm807, %vm808
  %v810 = vsel %vm809, %v801, %v806
  %v811 = vmul.f32 %v799, %v810
  %v812 = vld [vmem:[%s3] sm:$0x1]
  %v813 = vmul.f32 %v785, %v811
  %v814 = vsub.f32 %v812, %v813
  %v816 = vperm.slane %v811, 0
  %v818 = vmul.f32 %v774, %v816
  %v819 = vmul.f32 %v776, %v816
  %v821 = vperm.slane %v814, 0
  %v823 = vadd.f32 %v818, %v821
  %v824 = vadd.f32 %v819, %v821
  %v825 = vld [vmem:[%s4] sm:$0xf]
  %v826 = vld [vmem:[%s4 + $0x4] sm:$0xf]
  %v827 = vunpack.c.l.bf16 %v825
  %v828 = vunpack.c.l.bf16 %v826
  %v829 = vadd.f32 %v823, %v827
  %v830 = vadd.f32 %v824, %v828
  %v831 = vmax.f32 %v829, 0.0
  %v832 = vmax.f32 %v830, 0.0
  %v833 = vpack.c.bf16 %v831, %v831
  %v834 = vpack.c.bf16 %v832, %v832
  %835 = vst [vmem:[%s5] sm:$0xf] %v833
  %836 = vst [vmem:[%s5 + $0x4] sm:$0xf] %v834
  // Predicated region
  $region22: #{resnet_forward.13} parent=0 // pred_check
    _
  $region23: #{resnet_forward.13} parent=0 // pred_check_branch
    %838 = sbr.rel (0) target = $region25
  $region24: #{resnet_forward.13} parent=0 // pred_region
    _
  $region25: #{resnet_forward.13} parent=0 // pred_fallthru
    _
  // Predicated region
  $region26: #{resnet_forward.13} parent=0 // pred_check
    _
  $region27: #{resnet_forward.13} parent=0 // pred_check_branch
    %840 = sbr.rel (0) target = $region29
  $region28: #{resnet_forward.13} parent=0 // pred_region
    _
  $region29: #{resnet_forward.13} parent=0 // pred_fallthru
    _

</llo_original>
